<compile_context>
chip_gen: v7x
topology: tpu7x:2x2x1
jax: 0.10.0
libtpu: 0.0.40
codegen_flags: <defaults>
</compile_context>

<pallas_src>
import math

import jax
import jax.numpy as jnp
from jax import lax
from jax.experimental import pallas as pl
from jax.experimental.pallas import tpu as pltpu


# ---------------------------------------------------------------------------
# Pallas kernels
# ---------------------------------------------------------------------------
def _make_bilstm_layer_kernel(T, B, H, input_bidir, unroll):
    """Fused bidirectional single-layer LSTM.

    Grid axis 0 = direction (0: forward in time, 1: reverse).
    Activations are flat time-major rows: row index = t * B + b.
    """

    def kernel(x_ref, valid_ref, w_ih_ref, w_hh_ref, b_ref, y_ref, gproj_ref):
        d = pl.program_id(0)                       # 0 -> forward, 1 -> backward

        # ---- hoisted input projection: one big MXU matmul over all T*B rows ----
        # bf16 MXU inputs, f32 accumulation; bias (b_ih + b_hh) folded in here so the
        # per-step loop only adds the recurrent term.
        if input_bidir:
            # input is (2, T*B, H): fwd half and bwd half of the previous layer.
            gproj = (
                jnp.dot(x_ref[0].astype(jnp.bfloat16),
                        w_ih_ref[0].astype(jnp.bfloat16),
                        preferred_element_type=jnp.float32)
                + jnp.dot(x_ref[1].astype(jnp.bfloat16),
                          w_ih_ref[1].astype(jnp.bfloat16),
                          preferred_element_type=jnp.float32))
        else:
            gproj = jnp.dot(x_ref[...].astype(jnp.bfloat16),
                            w_ih_ref[...].astype(jnp.bfloat16),
                            preferred_element_type=jnp.float32)
        gproj_ref[...] = gproj + b_ref[...]        # (T*B, 4H)

        w_hh = w_hh_ref[...]                       # (H, 4H)

        def step(i, carry):
            h, c = carry
            t = jnp.where(d == 0, i, T - 1 - i)
            row = pl.multiple_of(t * B, B)
            # recurrent contribution only; input part + bias precomputed above
            g = gproj_ref[pl.ds(row, B), :] + jnp.dot(
                h, w_hh, preferred_element_type=jnp.float32)        # (B, 4H)
            # PyTorch gate order i, f, g, o.  (At production sizes H % 128 == 0, so these
            # slices are lane-aligned gate slabs.)
            i_g = jax.nn.sigmoid(g[:, 0 * H:1 * H])
            f_g = jax.nn.sigmoid(g[:, 1 * H:2 * H])
            g_g = jnp.tanh(g[:, 2 * H:3 * H])
            o_g = jax.nn.sigmoid(g[:, 3 * H:4 * H])
            c_new = f_g * c + i_g * g_g
            h_new = o_g * jnp.tanh(c_new)

            # packed-sequence semantics: steps with t >= length[b] neither update the state
            # nor emit output (they emit exactly 0, like pad_packed_sequence).
            valid = valid_ref[pl.ds(row, B), :] != 0.0              # (B, 1) bool
            h_u = jnp.where(valid, h_new, h)
            c_u = jnp.where(valid, c_new, c)
            y_ref[pl.ds(row, B), :] = jnp.where(valid, h_u, 0.0)
            return (h_u, c_u)

        z = jnp.zeros((B, H), jnp.float32)
        lax.fori_loop(0, T, step, (z, z), unroll=unroll)

    return kernel


def _linear_mask_kernel(act_ref, w_ref, b_ref, mask_ref, o_ref):
    # act_ref:  (2, B, T, H)  last-layer activations, batch-major
    # w_ref:    (2, 1, 1, H)  final Linear weight split into fwd/bwd halves
    # b_ref:    (1, 1)        final Linear bias
    # mask_ref, o_ref: (B, T) with T on the lane axis -> dense unmasked stores
    prod = act_ref[0] * w_ref[0] + act_ref[1] * w_ref[1]     # (B, T, H)
    s = jnp.sum(prod, axis=-1)                               # (B, T) lane reduce (XLU)
    o_ref[...] = (s + b_ref[...]) * mask_ref[...]


# ---------------------------------------------------------------------------
# Wrappers (pallas_call plumbing, layout transposes, parameter setup)
# ---------------------------------------------------------------------------
def _bilstm_layer(x, valid, layer_params, *, T, B, H, input_bidir):
    TB = T * B
    G = 4 * H
    if input_bidir:
        x_spec = pl.BlockSpec((2, TB, H), lambda d: (0, 0, 0))
        wih_spec = pl.BlockSpec((None, 2, H, G), lambda d: (d, 0, 0, 0))
    else:
        C = x.shape[-1]
        x_spec = pl.BlockSpec((TB, C), lambda d: (0, 0))
        wih_spec = pl.BlockSpec((None, C, G), lambda d: (d, 0, 0))

    kernel = _make_bilstm_layer_kernel(T, B, H, input_bidir, unroll=(T <= 32))
    # TODO(synk): at production B, additionally tile the batch axis (rows are independent)
    # instead of keeping the whole (T*B, .) working set resident.
    return pl.pallas_call(
        kernel,
        grid=(2,),                                           # one grid point per direction
        out_shape=jax.ShapeDtypeStruct((2, TB, H), jnp.float32),
        in_specs=[
            x_spec,
            pl.BlockSpec((TB, 1), lambda d: (0, 0)),          # validity mask (recurrence)
            wih_spec,
            pl.BlockSpec((None, H, G), lambda d: (d, 0, 0)),  # W_hh (per direction)
            pl.BlockSpec((None, 1, G), lambda d: (d, 0, 0)),  # b_ih + b_hh (per direction)
        ],
        out_specs=pl.BlockSpec((None, TB, H), lambda d: (d, 0, 0)),
        scratch_shapes=[pltpu.VMEM((TB, G), jnp.float32)],    # hoisted gate projections
        compiler_params=pltpu.CompilerParams(
            dimension_semantics=("parallel",),   # directions independent -> both TCs on v7x
            vmem_limit_bytes=48 * 1024 * 1024,
        ),
    )(x, valid, layer_params["w_ih"], layer_params["w_hh"], layer_params["b"])


def init_params(key, channels, n_layers):
    H = channels // 3
    k = 1.0 / math.sqrt(H)
    layers = []
    for layer_idx in range(n_layers):
        first = layer_idx == 0
        d_in = channels if first else 2 * H
        key, k1, k2, k3, k4 = jax.random.split(key, 5)
        if first:
            # (direction, D_in, 4H)  -- transposed vs. PyTorch (4H, D_in)
            w_ih = jax.random.uniform(k1, (2, d_in, 4 * H), jnp.float32, -k, k)
        else:
            # (direction, input_half[fwd/bwd], H, 4H)
            w_ih = jax.random.uniform(k1, (2, 2, H, 4 * H), jnp.float32, -k, k)
        w_hh = jax.random.uniform(k2, (2, H, 4 * H), jnp.float32, -k, k)
        b = (jax.random.uniform(k3, (2, 1, 4 * H), jnp.float32, -k, k)
             + jax.random.uniform(k4, (2, 1, 4 * H), jnp.float32, -k, k))   # b_ih + b_hh
        layers.append({"w_ih": w_ih, "w_hh": w_hh, "b": b})
    key, k1, k2 = jax.random.split(key, 3)
    klin = 1.0 / math.sqrt(2 * H)
    linear_w = jax.random.uniform(k1, (2, 1, 1, H), jnp.float32, -klin, klin)
    linear_b = jax.random.uniform(k2, (1, 1), jnp.float32, -klin, klin)
    return {"layers": layers, "linear_w": linear_w, "linear_b": linear_b}


def duration_predictor(params, x_bct, x_mask_b1t, length_b, channels, n_layers):
    H = channels // 3
    B, C, T = x_bct.shape
    TB = T * B

    # (B, C, T) -> time-major flat rows (T*B, C), row = t*B + b  (wrapper-side layout plumbing)
    x_flat = jnp.transpose(x_bct, (2, 0, 1)).reshape(TB, C).astype(jnp.float32)
    # validity mask for the packed-sequence recurrence, one row per (t, b)
    valid = (jnp.arange(T, dtype=jnp.int32)[:, None]
             < length_b.astype(jnp.int32)[None, :]).astype(jnp.float32).reshape(TB, 1)
    mask_bt = x_mask_b1t[:, 0, :].astype(jnp.float32)                     # (B, T)

    act = x_flat
    for layer_idx in range(n_layers):
        act = _bilstm_layer(act, valid, params["layers"][layer_idx],
                            T=T, B=B, H=H, input_bidir=(layer_idx > 0))
        # TODO(synk): inter-layer LSTM dropout omitted (eval-mode / inference semantics)

    # Present last-layer activations batch-major so the final kernel stores a lane-dense
    # (B, T) slab (T on the lane axis).
    act_bth = jnp.transpose(act.reshape(2, T, B, H), (0, 2, 1, 3))        # (2, B, T, H)

    out_bt = pl.pallas_call(
        _linear_mask_kernel,
        out_shape=jax.ShapeDtypeStruct((B, T), jnp.float32),
        in_specs=[pl.BlockSpec(memory_space=pltpu.MemorySpace.VMEM)] * 4,
        out_specs=pl.BlockSpec(memory_space=pltpu.MemorySpace.VMEM),
    )(act_bth, params["linear_w"], params["linear_b"], mask_bt)

    return out_bt[:, None, :]                                             # (B, 1, T)


# ---------------------------------------------------------------------------
# Demo
# ---------------------------------------------------------------------------
if __name__ == "__main__":
    channels, n_layers = 24, 2          # hidden = channels // 3 = 8, bidirectional -> 16
    B, T = 8, 16

    key = jax.random.PRNGKey(0)
    kx, kp = jax.random.split(key)

    x = jax.random.normal(kx, (B, channels, T), dtype=jnp.float32)        # (B, C, T)
    length = jnp.array([T, 13, T, 9, 5, T, 7, 11], dtype=jnp.int32)       # max == T
    t_idx = jnp.arange(T)[None, None, :]
    x_mask = (t_idx < length[:, None, None]).astype(jnp.float32)          # (B, 1, T)

    params = init_params(kp, channels, n_layers)

    out = duration_predictor(params, x, x_mask, length, channels, n_layers)
    out = jax.block_until_ready(out)

    assert out.shape == (B, 1, T), out.shape
    # masked (padded) positions must be exactly zero, like pack/pad + mask in PyTorch
    assert float(jnp.abs(out * (1.0 - x_mask)).sum()) == 0.0

    print("KERNEL_OK")
</pallas_src>

<mosaic_0001>
module attributes {stable_mosaic.version = 11 : i64} {
  func.func @kernel(%arg0: i32, %arg1: memref<128x24xf32, #tpu.memory_space<vmem>>, %arg2: memref<128x1xf32, #tpu.memory_space<vmem>>, %arg3: memref<1x24x32xf32, #tpu.memory_space<vmem>>, %arg4: memref<1x8x32xf32, #tpu.memory_space<vmem>>, %arg5: memref<1x1x32xf32, #tpu.memory_space<vmem>>, %arg6: memref<1x128x8xf32, #tpu.memory_space<vmem>>, %arg7: memref<128x32xf32, #tpu.memory_space<vmem>>) attributes {dimension_semantics = [#tpu.dimension_semantics<parallel>], iteration_bounds = array<i64: 2>, scalar_prefetch = 0 : i64, scratch_operands = 1 : i64, tpu.core_type = #tpu.core_type<tc>, window_params = [{pipeline_mode = #tpu.pipeline_mode<synchronous>, transform_indices = @transform_0, window_bounds = array<i64: 128, 24>}, {pipeline_mode = #tpu.pipeline_mode<synchronous>, transform_indices = @transform_1, window_bounds = array<i64: 128, 1>}, {transform_indices = @transform_2, window_bounds = array<i64: 1, 24, 32>}, {transform_indices = @transform_3, window_bounds = array<i64: 1, 8, 32>}, {transform_indices = @transform_4, window_bounds = array<i64: 1, 1, 32>}, {transform_indices = @transform_5, window_bounds = array<i64: 1, 128, 8>}]} {
    %c0 = arith.constant 0 : index
    %c0_0 = arith.constant 0 : index
    %0 = vector.load %arg1[%c0, %c0_0] : memref<128x24xf32, #tpu.memory_space<vmem>>, vector<128x24xf32>
    %1 = arith.truncf %0 : vector<128x24xf32> to vector<128x24xbf16>
    %c0_1 = arith.constant 0 : index
    %c0_2 = arith.constant 0 : index
    %c0_3 = arith.constant 0 : index
    %2 = vector.load %arg3[%c0_1, %c0_2, %c0_3] : memref<1x24x32xf32, #tpu.memory_space<vmem>>, vector<1x24x32xf32>
    %3 = vector.shape_cast %2 : vector<1x24x32xf32> to vector<24x32xf32>
    %4 = arith.truncf %3 : vector<24x32xf32> to vector<24x32xbf16>
    %cst = arith.constant dense<0.000000e+00> : vector<128x32xf32>
    %5 = tpu.matmul %1, %4, %cst {dimension_numbers = #tpu.dot_dimension_numbers<[1], [0], [0], [1], [0, 0, 1, 1], [], []>} : vector<128x24xbf16>, vector<24x32xbf16>, vector<128x32xf32> -> vector<128x32xf32>
    %c0_4 = arith.constant 0 : index
    %c0_5 = arith.constant 0 : index
    %c0_6 = arith.constant 0 : index
    %6 = vector.load %arg5[%c0_4, %c0_5, %c0_6] : memref<1x1x32xf32, #tpu.memory_space<vmem>>, vector<1x1x32xf32>
    %7 = vector.shape_cast %6 : vector<1x1x32xf32> to vector<1x32xf32>
    %8 = vector.broadcast %7 : vector<1x32xf32> to vector<128x32xf32>
    %9 = arith.addf %5, %8 : vector<128x32xf32>
    %c0_7 = arith.constant 0 : index
    %c0_8 = arith.constant 0 : index
    %10 = vector.load %arg7[%c0_7, %c0_8] : memref<128x32xf32, #tpu.memory_space<vmem>>, vector<128x32xf32>
    tpu.vector_store %arg7[%c0_7, %c0_8], %9 {strides = array<i32>} : memref<128x32xf32, #tpu.memory_space<vmem>>, vector<128x32xf32>,
    %c0_9 = arith.constant 0 : index
    %c0_10 = arith.constant 0 : index
    %c0_11 = arith.constant 0 : index
    %11 = vector.load %arg4[%c0_9, %c0_10, %c0_11] : memref<1x8x32xf32, #tpu.memory_space<vmem>>, vector<1x8x32xf32>
    %12 = vector.shape_cast %11 : vector<1x8x32xf32> to vector<8x32xf32>
    %cst_12 = arith.constant 0.000000e+00 : f32
    %13 = vector.broadcast %cst_12 : f32 to vector<8x8xf32>
    %c0_i32 = arith.constant 0 : i32
    %c0_i32_13 = arith.constant 0 : i32
    %14 = arith.cmpi eq, %arg0, %c0_i32_13 : i32
    %c15_i32 = arith.constant 15 : i32
    %15 = arith.subi %c15_i32, %c0_i32 : i32
    %16 = arith.select %14, %c0_i32, %15 : i32
    %c8_i32 = arith.constant 8 : i32
    %17 = arith.muli %16, %c8_i32 : i32
    %18 = tpu.assume_multiple %17, 8 : i32
    %19 = arith.index_cast %18 : i32 to index
    %c0_14 = arith.constant 0 : index
    %20 = vector.load %arg7[%19, %c0_14] : memref<128x32xf32, #tpu.memory_space<vmem>>, vector<8x32xf32>
    %cst_15 = arith.constant dense<0.000000e+00> : vector<8x32xf32>
    %21 = tpu.matmul %13, %12, %cst_15 {dimension_numbers = #tpu.dot_dimension_numbers<[1], [0], [0], [1], [0, 0, 1, 1], [], []>} : vector<8x8xf32>, vector<8x32xf32>, vector<8x32xf32> -> vector<8x32xf32>
    %22 = arith.addf %20, %21 : vector<8x32xf32>
    %23 = vector.extract_strided_slice %22 {offsets = [0, 0], sizes = [8, 8], strides = [1, 1]} : vector<8x32xf32> to vector<8x8xf32>
    %24 = arith.negf %23 : vector<8x8xf32>
    %25 = math.exp %24 : vector<8x8xf32>
    %cst_16 = arith.constant 1.000000e+00 : f32
    %26 = vector.broadcast %cst_16 : f32 to vector<8x8xf32>
    %27 = arith.addf %26, %25 : vector<8x8xf32>
    %28 = arith.divf %26, %27 : vector<8x8xf32>
    %29 = vector.extract_strided_slice %22 {offsets = [0, 8], sizes = [8, 8], strides = [1, 1]} : vector<8x32xf32> to vector<8x8xf32>
    %30 = arith.negf %29 : vector<8x8xf32>
    %31 = math.exp %30 : vector<8x8xf32>
    %cst_17 = arith.constant 1.000000e+00 : f32
    %32 = vector.broadcast %cst_17 : f32 to vector<8x8xf32>
    %33 = arith.addf %32, %31 : vector<8x8xf32>
    %34 = arith.divf %32, %33 : vector<8x8xf32>
    %35 = vector.extract_strided_slice %22 {offsets = [0, 16], sizes = [8, 8], strides = [1, 1]} : vector<8x32xf32> to vector<8x8xf32>
    %36 = math.tanh %35 : vector<8x8xf32>
    %37 = vector.extract_strided_slice %22 {offsets = [0, 24], sizes = [8, 8], strides = [1, 1]} : vector<8x32xf32> to vector<8x8xf32>
    %38 = arith.negf %37 : vector<8x8xf32>
    %39 = math.exp %38 : vector<8x8xf32>
    %cst_18 = arith.constant 1.000000e+00 : f32
    %40 = vector.broadcast %cst_18 : f32 to vector<8x8xf32>
    %41 = arith.addf %40, %39 : vector<8x8xf32>
    %42 = arith.divf %40, %41 : vector<8x8xf32>
    %43 = arith.mulf %34, %13 : vector<8x8xf32>
    %44 = arith.mulf %28, %36 : vector<8x8xf32>
    %45 = arith.addf %43, %44 : vector<8x8xf32>
    %46 = math.tanh %45 : vector<8x8xf32>
    %47 = arith.mulf %42, %46 : vector<8x8xf32>
    %48 = arith.index_cast %18 : i32 to index
    %c0_19 = arith.constant 0 : index
    %49 = vector.load %arg2[%48, %c0_19] : memref<128x1xf32, #tpu.memory_space<vmem>>, vector<8x1xf32>
    %cst_20 = arith.constant 0.000000e+00 : f32
    %50 = vector.broadcast %cst_20 : f32 to vector<8x1xf32>
    %51 = arith.cmpf one, %49, %50 : vector<8x1xf32>
    %52 = vector.shape_cast %51 : vector<8x1xi1> to vector<8x1xi1>
    %53 = vector.broadcast %52 : vector<8x1xi1> to vector<8x8xi1>
    %54 = arith.select %53, %47, %13 : vector<8x8xi1>, vector<8x8xf32>
    %55 = vector.shape_cast %51 : vector<8x1xi1> to vector<8x1xi1>
    %56 = vector.broadcast %55 : vector<8x1xi1> to vector<8x8xi1>
    %57 = arith.select %56, %45, %13 : vector<8x8xi1>, vector<8x8xf32>
    %cst_21 = arith.constant 0.000000e+00 : f32
    %58 = vector.shape_cast %51 : vector<8x1xi1> to vector<8x1xi1>
    %59 = vector.broadcast %58 : vector<8x1xi1> to vector<8x8xi1>
    %60 = vector.broadcast %cst_21 : f32 to vector<8x8xf32>
    %61 = arith.select %59, %54, %60 : vector<8x8xi1>, vector<8x8xf32>
    %c0_22 = arith.constant 0 : index
    %62 = arith.index_cast %18 : i32 to index
    %c0_23 = arith.constant 0 : index
    %63 = vector.load %arg6[%c0_22, %62, %c0_23] : memref<1x128x8xf32, #tpu.memory_space<vmem>>, vector<1x8x8xf32>
    %64 = vector.shape_cast %63 : vector<1x8x8xf32> to vector<8x8xf32>
    %65 = vector.shape_cast %61 : vector<8x8xf32> to vector<1x8x8xf32>
    tpu.vector_store %arg6[%c0_22, %62, %c0_23], %65 {strides = array<i32>} : memref<1x128x8xf32, #tpu.memory_space<vmem>>, vector<1x8x8xf32>,
    %c1_i32 = arith.constant 1 : i32
    %c0_i32_24 = arith.constant 0 : i32
    %66 = arith.cmpi eq, %arg0, %c0_i32_24 : i32
    %c15_i32_25 = arith.constant 15 : i32
    %67 = arith.subi %c15_i32_25, %c1_i32 : i32
    %68 = arith.select %66, %c1_i32, %67 : i32
    %c8_i32_26 = arith.constant 8 : i32
    %69 = arith.muli %68, %c8_i32_26 : i32
    %70 = tpu.assume_multiple %69, 8 : i32
    %71 = arith.index_cast %70 : i32 to index
    %c0_27 = arith.constant 0 : index
    %72 = vector.load %arg7[%71, %c0_27] : memref<128x32xf32, #tpu.memory_space<vmem>>, vector<8x32xf32>
    %cst_28 = arith.constant dense<0.000000e+00> : vector<8x32xf32>
    %73 = tpu.matmul %54, %12, %cst_28 {dimension_numbers = #tpu.dot_dimension_numbers<[1], [0], [0], [1], [0, 0, 1, 1], [], []>} : vector<8x8xf32>, vector<8x32xf32>, vector<8x32xf32> -> vector<8x32xf32>
    %74 = arith.addf %72, %73 : vector<8x32xf32>
    %75 = vector.extract_strided_slice %74 {offsets = [0, 0], sizes = [8, 8], strides = [1, 1]} : vector<8x32xf32> to vector<8x8xf32>
    %76 = arith.negf %75 : vector<8x8xf32>
    %77 = math.exp %76 : vector<8x8xf32>
    %cst_29 = arith.constant 1.000000e+00 : f32
    %78 = vector.broadcast %cst_29 : f32 to vector<8x8xf32>
    %79 = arith.addf %78, %77 : vector<8x8xf32>
    %80 = arith.divf %78, %79 : vector<8x8xf32>
    %81 = vector.extract_strided_slice %74 {offsets = [0, 8], sizes = [8, 8], strides = [1, 1]} : vector<8x32xf32> to vector<8x8xf32>
    %82 = arith.negf %81 : vector<8x8xf32>
    %83 = math.exp %82 : vector<8x8xf32>
    %cst_30 = arith.constant 1.000000e+00 : f32
    %84 = vector.broadcast %cst_30 : f32 to vector<8x8xf32>
    %85 = arith.addf %84, %83 : vector<8x8xf32>
    %86 = arith.divf %84, %85 : vector<8x8xf32>
    %87 = vector.extract_strided_slice %74 {offsets = [0, 16], sizes = [8, 8], strides = [1, 1]} : vector<8x32xf32> to vector<8x8xf32>
    %88 = math.tanh %87 : vector<8x8xf32>
    %89 = vector.extract_strided_slice %74 {offsets = [0, 24], sizes = [8, 8], strides = [1, 1]} : vector<8x32xf32> to vector<8x8xf32>
    %90 = arith.negf %89 : vector<8x8xf32>
    %91 = math.exp %90 : vector<8x8xf32>
    %cst_31 = arith.constant 1.000000e+00 : f32
    %92 = vector.broadcast %cst_31 : f32 to vector<8x8xf32>
    %93 = arith.addf %92, %91 : vector<8x8xf32>
    %94 = arith.divf %92, %93 : vector<8x8xf32>
    %95 = arith.mulf %86, %57 : vector<8x8xf32>
    %96 = arith.mulf %80, %88 : vector<8x8xf32>
    %97 = arith.addf %95, %96 : vector<8x8xf32>
    %98 = math.tanh %97 : vector<8x8xf32>
    %99 = arith.mulf %94, %98 : vector<8x8xf32>
    %100 = arith.index_cast %70 : i32 to index
    %c0_32 = arith.constant 0 : index
    %101 = vector.load %arg2[%100, %c0_32] : memref<128x1xf32, #tpu.memory_space<vmem>>, vector<8x1xf32>
    %cst_33 = arith.constant 0.000000e+00 : f32
    %102 = vector.broadcast %cst_33 : f32 to vector<8x1xf32>
    %103 = arith.cmpf one, %101, %102 : vector<8x1xf32>
    %104 = vector.shape_cast %103 : vector<8x1xi1> to vector<8x1xi1>
    %105 = vector.broadcast %104 : vector<8x1xi1> to vector<8x8xi1>
    %106 = arith.select %105, %99, %54 : vector<8x8xi1>, vector<8x8xf32>
    %107 = vector.shape_cast %103 : vector<8x1xi1> to vector<8x1xi1>
    %108 = vector.broadcast %107 : vector<8x1xi1> to vector<8x8xi1>
    %109 = arith.select %108, %97, %57 : vector<8x8xi1>, vector<8x8xf32>
    %cst_34 = arith.constant 0.000000e+00 : f32
    %110 = vector.shape_cast %103 : vector<8x1xi1> to vector<8x1xi1>
    %111 = vector.broadcast %110 : vector<8x1xi1> to vector<8x8xi1>
    %112 = vector.broadcast %cst_34 : f32 to vector<8x8xf32>
    %113 = arith.select %111, %106, %112 : vector<8x8xi1>, vector<8x8xf32>
    %c0_35 = arith.constant 0 : index
    %114 = arith.index_cast %70 : i32 to index
    %c0_36 = arith.constant 0 : index
    %115 = vector.load %arg6[%c0_35, %114, %c0_36] : memref<1x128x8xf32, #tpu.memory_space<vmem>>, vector<1x8x8xf32>
    %116 = vector.shape_cast %115 : vector<1x8x8xf32> to vector<8x8xf32>
    %117 = vector.shape_cast %113 : vector<8x8xf32> to vector<1x8x8xf32>
    tpu.vector_store %arg6[%c0_35, %114, %c0_36], %117 {strides = array<i32>} : memref<1x128x8xf32, #tpu.memory_space<vmem>>, vector<1x8x8xf32>,
    %c2_i32 = arith.constant 2 : i32
    %c0_i32_37 = arith.constant 0 : i32
    %118 = arith.cmpi eq, %arg0, %c0_i32_37 : i32
    %c15_i32_38 = arith.constant 15 : i32
    %119 = arith.subi %c15_i32_38, %c2_i32 : i32
    %120 = arith.select %118, %c2_i32, %119 : i32
    %c8_i32_39 = arith.constant 8 : i32
    %121 = arith.muli %120, %c8_i32_39 : i32
    %122 = tpu.assume_multiple %121, 8 : i32
    %123 = arith.index_cast %122 : i32 to index
    %c0_40 = arith.constant 0 : index
    %124 = vector.load %arg7[%123, %c0_40] : memref<128x32xf32, #tpu.memory_space<vmem>>, vector<8x32xf32>
    %cst_41 = arith.constant dense<0.000000e+00> : vector<8x32xf32>
    %125 = tpu.matmul %106, %12, %cst_41 {dimension_numbers = #tpu.dot_dimension_numbers<[1], [0], [0], [1], [0, 0, 1, 1], [], []>} : vector<8x8xf32>, vector<8x32xf32>, vector<8x32xf32> -> vector<8x32xf32>
    %126 = arith.addf %124, %125 : vector<8x32xf32>
    %127 = vector.extract_strided_slice %126 {offsets = [0, 0], sizes = [8, 8], strides = [1, 1]} : vector<8x32xf32> to vector<8x8xf32>
    %128 = arith.negf %127 : vector<8x8xf32>
    %129 = math.exp %128 : vector<8x8xf32>
    %cst_42 = arith.constant 1.000000e+00 : f32
    %130 = vector.broadcast %cst_42 : f32 to vector<8x8xf32>
    %131 = arith.addf %130, %129 : vector<8x8xf32>
    %132 = arith.divf %130, %131 : vector<8x8xf32>
    %133 = vector.extract_strided_slice %126 {offsets = [0, 8], sizes = [8, 8], strides = [1, 1]} : vector<8x32xf32> to vector<8x8xf32>
    %134 = arith.negf %133 : vector<8x8xf32>
    %135 = math.exp %134 : vector<8x8xf32>
    %cst_43 = arith.constant 1.000000e+00 : f32
    %136 = vector.broadcast %cst_43 : f32 to vector<8x8xf32>
    %137 = arith.addf %136, %135 : vector<8x8xf32>
    %138 = arith.divf %136, %137 : vector<8x8xf32>
    %139 = vector.extract_strided_slice %126 {offsets = [0, 16], sizes = [8, 8], strides = [1, 1]} : vector<8x32xf32> to vector<8x8xf32>
    %140 = math.tanh %139 : vector<8x8xf32>
    %141 = vector.extract_strided_slice %126 {offsets = [0, 24], sizes = [8, 8], strides = [1, 1]} : vector<8x32xf32> to vector<8x8xf32>
    %142 = arith.negf %141 : vector<8x8xf32>
    %143 = math.exp %142 : vector<8x8xf32>
    %cst_44 = arith.constant 1.000000e+00 : f32
    %144 = vector.broadcast %cst_44 : f32 to vector<8x8xf32>
    %145 = arith.addf %144, %143 : vector<8x8xf32>
    %146 = arith.divf %144, %145 : vector<8x8xf32>
    %147 = arith.mulf %138, %109 : vector<8x8xf32>
    %148 = arith.mulf %132, %140 : vector<8x8xf32>
    %149 = arith.addf %147, %148 : vector<8x8xf32>
    %150 = math.tanh %149 : vector<8x8xf32>
    %151 = arith.mulf %146, %150 : vector<8x8xf32>
    %152 = arith.index_cast %122 : i32 to index
    %c0_45 = arith.constant 0 : index
    %153 = vector.load %arg2[%152, %c0_45] : memref<128x1xf32, #tpu.memory_space<vmem>>, vector<8x1xf32>
    %cst_46 = arith.constant 0.000000e+00 : f32
    %154 = vector.broadcast %cst_46 : f32 to vector<8x1xf32>
    %155 = arith.cmpf one, %153, %154 : vector<8x1xf32>
    %156 = vector.shape_cast %155 : vector<8x1xi1> to vector<8x1xi1>
    %157 = vector.broadcast %156 : vector<8x1xi1> to vector<8x8xi1>
    %158 = arith.select %157, %151, %106 : vector<8x8xi1>, vector<8x8xf32>
    %159 = vector.shape_cast %155 : vector<8x1xi1> to vector<8x1xi1>
    %160 = vector.broadcast %159 : vector<8x1xi1> to vector<8x8xi1>
    %161 = arith.select %160, %149, %109 : vector<8x8xi1>, vector<8x8xf32>
    %cst_47 = arith.constant 0.000000e+00 : f32
    %162 = vector.shape_cast %155 : vector<8x1xi1> to vector<8x1xi1>
    %163 = vector.broadcast %162 : vector<8x1xi1> to vector<8x8xi1>
    %164 = vector.broadcast %cst_47 : f32 to vector<8x8xf32>
    %165 = arith.select %163, %158, %164 : vector<8x8xi1>, vector<8x8xf32>
    %c0_48 = arith.constant 0 : index
    %166 = arith.index_cast %122 : i32 to index
    %c0_49 = arith.constant 0 : index
    %167 = vector.load %arg6[%c0_48, %166, %c0_49] : memref<1x128x8xf32, #tpu.memory_space<vmem>>, vector<1x8x8xf32>
    %168 = vector.shape_cast %167 : vector<1x8x8xf32> to vector<8x8xf32>
    %169 = vector.shape_cast %165 : vector<8x8xf32> to vector<1x8x8xf32>
    tpu.vector_store %arg6[%c0_48, %166, %c0_49], %169 {strides = array<i32>} : memref<1x128x8xf32, #tpu.memory_space<vmem>>, vector<1x8x8xf32>,
    %c3_i32 = arith.constant 3 : i32
    %c0_i32_50 = arith.constant 0 : i32
    %170 = arith.cmpi eq, %arg0, %c0_i32_50 : i32
    %c15_i32_51 = arith.constant 15 : i32
    %171 = arith.subi %c15_i32_51, %c3_i32 : i32
    %172 = arith.select %170, %c3_i32, %171 : i32
    %c8_i32_52 = arith.constant 8 : i32
    %173 = arith.muli %172, %c8_i32_52 : i32
    %174 = tpu.assume_multiple %173, 8 : i32
    %175 = arith.index_cast %174 : i32 to index
    %c0_53 = arith.constant 0 : index
    %176 = vector.load %arg7[%175, %c0_53] : memref<128x32xf32, #tpu.memory_space<vmem>>, vector<8x32xf32>
    %cst_54 = arith.constant dense<0.000000e+00> : vector<8x32xf32>
    %177 = tpu.matmul %158, %12, %cst_54 {dimension_numbers = #tpu.dot_dimension_numbers<[1], [0], [0], [1], [0, 0, 1, 1], [], []>} : vector<8x8xf32>, vector<8x32xf32>, vector<8x32xf32> -> vector<8x32xf32>
    %178 = arith.addf %176, %177 : vector<8x32xf32>
    %179 = vector.extract_strided_slice %178 {offsets = [0, 0], sizes = [8, 8], strides = [1, 1]} : vector<8x32xf32> to vector<8x8xf32>
    %180 = arith.negf %179 : vector<8x8xf32>
    %181 = math.exp %180 : vector<8x8xf32>
    %cst_55 = arith.constant 1.000000e+00 : f32
    %182 = vector.broadcast %cst_55 : f32 to vector<8x8xf32>
    %183 = arith.addf %182, %181 : vector<8x8xf32>
    %184 = arith.divf %182, %183 : vector<8x8xf32>
    %185 = vector.extract_strided_slice %178 {offsets = [0, 8], sizes = [8, 8], strides = [1, 1]} : vector<8x32xf32> to vector<8x8xf32>
    %186 = arith.negf %185 : vector<8x8xf32>
    %187 = math.exp %186 : vector<8x8xf32>
    %cst_56 = arith.constant 1.000000e+00 : f32
    %188 = vector.broadcast %cst_56 : f32 to vector<8x8xf32>
    %189 = arith.addf %188, %187 : vector<8x8xf32>
    %190 = arith.divf %188, %189 : vector<8x8xf32>
    %191 = vector.extract_strided_slice %178 {offsets = [0, 16], sizes = [8, 8], strides = [1, 1]} : vector<8x32xf32> to vector<8x8xf32>
    %192 = math.tanh %191 : vector<8x8xf32>
    %193 = vector.extract_strided_slice %178 {offsets = [0, 24], sizes = [8, 8], strides = [1, 1]} : vector<8x32xf32> to vector<8x8xf32>
    %194 = arith.negf %193 : vector<8x8xf32>
    %195 = math.exp %194 : vector<8x8xf32>
    %cst_57 = arith.constant 1.000000e+00 : f32
    %196 = vector.broadcast %cst_57 : f32 to vector<8x8xf32>
    %197 = arith.addf %196, %195 : vector<8x8xf32>
    %198 = arith.divf %196, %197 : vector<8x8xf32>
    %199 = arith.mulf %190, %161 : vector<8x8xf32>
    %200 = arith.mulf %184, %192 : vector<8x8xf32>
    %201 = arith.addf %199, %200 : vector<8x8xf32>
    %202 = math.tanh %201 : vector<8x8xf32>
    %203 = arith.mulf %198, %202 : vector<8x8xf32>
    %204 = arith.index_cast %174 : i32 to index
    %c0_58 = arith.constant 0 : index
    %205 = vector.load %arg2[%204, %c0_58] : memref<128x1xf32, #tpu.memory_space<vmem>>, vector<8x1xf32>
    %cst_59 = arith.constant 0.000000e+00 : f32
    %206 = vector.broadcast %cst_59 : f32 to vector<8x1xf32>
    %207 = arith.cmpf one, %205, %206 : vector<8x1xf32>
    %208 = vector.shape_cast %207 : vector<8x1xi1> to vector<8x1xi1>
    %209 = vector.broadcast %208 : vector<8x1xi1> to vector<8x8xi1>
    %210 = arith.select %209, %203, %158 : vector<8x8xi1>, vector<8x8xf32>
    %211 = vector.shape_cast %207 : vector<8x1xi1> to vector<8x1xi1>
    %212 = vector.broadcast %211 : vector<8x1xi1> to vector<8x8xi1>
    %213 = arith.select %212, %201, %161 : vector<8x8xi1>, vector<8x8xf32>
    %cst_60 = arith.constant 0.000000e+00 : f32
    %214 = vector.shape_cast %207 : vector<8x1xi1> to vector<8x1xi1>
    %215 = vector.broadcast %214 : vector<8x1xi1> to vector<8x8xi1>
    %216 = vector.broadcast %cst_60 : f32 to vector<8x8xf32>
    %217 = arith.select %215, %210, %216 : vector<8x8xi1>, vector<8x8xf32>
    %c0_61 = arith.constant 0 : index
    %218 = arith.index_cast %174 : i32 to index
    %c0_62 = arith.constant 0 : index
    %219 = vector.load %arg6[%c0_61, %218, %c0_62] : memref<1x128x8xf32, #tpu.memory_space<vmem>>, vector<1x8x8xf32>
    %220 = vector.shape_cast %219 : vector<1x8x8xf32> to vector<8x8xf32>
    %221 = vector.shape_cast %217 : vector<8x8xf32> to vector<1x8x8xf32>
    tpu.vector_store %arg6[%c0_61, %218, %c0_62], %221 {strides = array<i32>} : memref<1x128x8xf32, #tpu.memory_space<vmem>>, vector<1x8x8xf32>,
    %c4_i32 = arith.constant 4 : i32
    %c0_i32_63 = arith.constant 0 : i32
    %222 = arith.cmpi eq, %arg0, %c0_i32_63 : i32
    %c15_i32_64 = arith.constant 15 : i32
    %223 = arith.subi %c15_i32_64, %c4_i32 : i32
    %224 = arith.select %222, %c4_i32, %223 : i32
    %c8_i32_65 = arith.constant 8 : i32
    %225 = arith.muli %224, %c8_i32_65 : i32
    %226 = tpu.assume_multiple %225, 8 : i32
    %227 = arith.index_cast %226 : i32 to index
    %c0_66 = arith.constant 0 : index
    %228 = vector.load %arg7[%227, %c0_66] : memref<128x32xf32, #tpu.memory_space<vmem>>, vector<8x32xf32>
    %cst_67 = arith.constant dense<0.000000e+00> : vector<8x32xf32>
    %229 = tpu.matmul %210, %12, %cst_67 {dimension_numbers = #tpu.dot_dimension_numbers<[1], [0], [0], [1], [0, 0, 1, 1], [], []>} : vector<8x8xf32>, vector<8x32xf32>, vector<8x32xf32> -> vector<8x32xf32>
    %230 = arith.addf %228, %229 : vector<8x32xf32>
    %231 = vector.extract_strided_slice %230 {offsets = [0, 0], sizes = [8, 8], strides = [1, 1]} : vector<8x32xf32> to vector<8x8xf32>
    %232 = arith.negf %231 : vector<8x8xf32>
    %233 = math.exp %232 : vector<8x8xf32>
    %cst_68 = arith.constant 1.000000e+00 : f32
    %234 = vector.broadcast %cst_68 : f32 to vector<8x8xf32>
    %235 = arith.addf %234, %233 : vector<8x8xf32>
    %236 = arith.divf %234, %235 : vector<8x8xf32>
    %237 = vector.extract_strided_slice %230 {offsets = [0, 8], sizes = [8, 8], strides = [1, 1]} : vector<8x32xf32> to vector<8x8xf32>
    %238 = arith.negf %237 : vector<8x8xf32>
    %239 = math.exp %238 : vector<8x8xf32>
    %cst_69 = arith.constant 1.000000e+00 : f32
    %240 = vector.broadcast %cst_69 : f32 to vector<8x8xf32>
    %241 = arith.addf %240, %239 : vector<8x8xf32>
    %242 = arith.divf %240, %241 : vector<8x8xf32>
    %243 = vector.extract_strided_slice %230 {offsets = [0, 16], sizes = [8, 8], strides = [1, 1]} : vector<8x32xf32> to vector<8x8xf32>
    %244 = math.tanh %243 : vector<8x8xf32>
    %245 = vector.extract_strided_slice %230 {offsets = [0, 24], sizes = [8, 8], strides = [1, 1]} : vector<8x32xf32> to vector<8x8xf32>
    %246 = arith.negf %245 : vector<8x8xf32>
    %247 = math.exp %246 : vector<8x8xf32>
    %cst_70 = arith.constant 1.000000e+00 : f32
    %248 = vector.broadcast %cst_70 : f32 to vector<8x8xf32>
    %249 = arith.addf %248, %247 : vector<8x8xf32>
    %250 = arith.divf %248, %249 : vector<8x8xf32>
    %251 = arith.mulf %242, %213 : vector<8x8xf32>
    %252 = arith.mulf %236, %244 : vector<8x8xf32>
    %253 = arith.addf %251, %252 : vector<8x8xf32>
    %254 = math.tanh %253 : vector<8x8xf32>
    %255 = arith.mulf %250, %254 : vector<8x8xf32>
    %256 = arith.index_cast %226 : i32 to index
    %c0_71 = arith.constant 0 : index
    %257 = vector.load %arg2[%256, %c0_71] : memref<128x1xf32, #tpu.memory_space<vmem>>, vector<8x1xf32>
    %cst_72 = arith.constant 0.000000e+00 : f32
    %258 = vector.broadcast %cst_72 : f32 to vector<8x1xf32>
    %259 = arith.cmpf one, %257, %258 : vector<8x1xf32>
    %260 = vector.shape_cast %259 : vector<8x1xi1> to vector<8x1xi1>
    %261 = vector.broadcast %260 : vector<8x1xi1> to vector<8x8xi1>
    %262 = arith.select %261, %255, %210 : vector<8x8xi1>, vector<8x8xf32>
    %263 = vector.shape_cast %259 : vector<8x1xi1> to vector<8x1xi1>
    %264 = vector.broadcast %263 : vector<8x1xi1> to vector<8x8xi1>
    %265 = arith.select %264, %253, %213 : vector<8x8xi1>, vector<8x8xf32>
    %cst_73 = arith.constant 0.000000e+00 : f32
    %266 = vector.shape_cast %259 : vector<8x1xi1> to vector<8x1xi1>
    %267 = vector.broadcast %266 : vector<8x1xi1> to vector<8x8xi1>
    %268 = vector.broadcast %cst_73 : f32 to vector<8x8xf32>
    %269 = arith.select %267, %262, %268 : vector<8x8xi1>, vector<8x8xf32>
    %c0_74 = arith.constant 0 : index
    %270 = arith.index_cast %226 : i32 to index
    %c0_75 = arith.constant 0 : index
    %271 = vector.load %arg6[%c0_74, %270, %c0_75] : memref<1x128x8xf32, #tpu.memory_space<vmem>>, vector<1x8x8xf32>
    %272 = vector.shape_cast %271 : vector<1x8x8xf32> to vector<8x8xf32>
    %273 = vector.shape_cast %269 : vector<8x8xf32> to vector<1x8x8xf32>
    tpu.vector_store %arg6[%c0_74, %270, %c0_75], %273 {strides = array<i32>} : memref<1x128x8xf32, #tpu.memory_space<vmem>>, vector<1x8x8xf32>,
    %c5_i32 = arith.constant 5 : i32
    %c0_i32_76 = arith.constant 0 : i32
    %274 = arith.cmpi eq, %arg0, %c0_i32_76 : i32
    %c15_i32_77 = arith.constant 15 : i32
    %275 = arith.subi %c15_i32_77, %c5_i32 : i32
    %276 = arith.select %274, %c5_i32, %275 : i32
    %c8_i32_78 = arith.constant 8 : i32
    %277 = arith.muli %276, %c8_i32_78 : i32
    %278 = tpu.assume_multiple %277, 8 : i32
    %279 = arith.index_cast %278 : i32 to index
    %c0_79 = arith.constant 0 : index
    %280 = vector.load %arg7[%279, %c0_79] : memref<128x32xf32, #tpu.memory_space<vmem>>, vector<8x32xf32>
    %cst_80 = arith.constant dense<0.000000e+00> : vector<8x32xf32>
    %281 = tpu.matmul %262, %12, %cst_80 {dimension_numbers = #tpu.dot_dimension_numbers<[1], [0], [0], [1], [0, 0, 1, 1], [], []>} : vector<8x8xf32>, vector<8x32xf32>, vector<8x32xf32> -> vector<8x32xf32>
    %282 = arith.addf %280, %281 : vector<8x32xf32>
    %283 = vector.extract_strided_slice %282 {offsets = [0, 0], sizes = [8, 8], strides = [1, 1]} : vector<8x32xf32> to vector<8x8xf32>
    %284 = arith.negf %283 : vector<8x8xf32>
    %285 = math.exp %284 : vector<8x8xf32>
    %cst_81 = arith.constant 1.000000e+00 : f32
    %286 = vector.broadcast %cst_81 : f32 to vector<8x8xf32>
    %287 = arith.addf %286, %285 : vector<8x8xf32>
    %288 = arith.divf %286, %287 : vector<8x8xf32>
    %289 = vector.extract_strided_slice %282 {offsets = [0, 8], sizes = [8, 8], strides = [1, 1]} : vector<8x32xf32> to vector<8x8xf32>
    %290 = arith.negf %289 : vector<8x8xf32>
    %291 = math.exp %290 : vector<8x8xf32>
    %cst_82 = arith.constant 1.000000e+00 : f32
    %292 = vector.broadcast %cst_82 : f32 to vector<8x8xf32>
    %293 = arith.addf %292, %291 : vector<8x8xf32>
    %294 = arith.divf %292, %293 : vector<8x8xf32>
    %295 = vector.extract_strided_slice %282 {offsets = [0, 16], sizes = [8, 8], strides = [1, 1]} : vector<8x32xf32> to vector<8x8xf32>
    %296 = math.tanh %295 : vector<8x8xf32>
    %297 = vector.extract_strided_slice %282 {offsets = [0, 24], sizes = [8, 8], strides = [1, 1]} : vector<8x32xf32> to vector<8x8xf32>
    %298 = arith.negf %297 : vector<8x8xf32>
    %299 = math.exp %298 : vector<8x8xf32>
    %cst_83 = arith.constant 1.000000e+00 : f32
    %300 = vector.broadcast %cst_83 : f32 to vector<8x8xf32>
    %301 = arith.addf %300, %299 : vector<8x8xf32>
    %302 = arith.divf %300, %301 : vector<8x8xf32>
    %303 = arith.mulf %294, %265 : vector<8x8xf32>
    %304 = arith.mulf %288, %296 : vector<8x8xf32>
    %305 = arith.addf %303, %304 : vector<8x8xf32>
    %306 = math.tanh %305 : vector<8x8xf32>
    %307 = arith.mulf %302, %306 : vector<8x8xf32>
    %308 = arith.index_cast %278 : i32 to index
    %c0_84 = arith.constant 0 : index
    %309 = vector.load %arg2[%308, %c0_84] : memref<128x1xf32, #tpu.memory_space<vmem>>, vector<8x1xf32>
    %cst_85 = arith.constant 0.000000e+00 : f32
    %310 = vector.broadcast %cst_85 : f32 to vector<8x1xf32>
    %311 = arith.cmpf one, %309, %310 : vector<8x1xf32>
    %312 = vector.shape_cast %311 : vector<8x1xi1> to vector<8x1xi1>
    %313 = vector.broadcast %312 : vector<8x1xi1> to vector<8x8xi1>
    %314 = arith.select %313, %307, %262 : vector<8x8xi1>, vector<8x8xf32>
    %315 = vector.shape_cast %311 : vector<8x1xi1> to vector<8x1xi1>
    %316 = vector.broadcast %315 : vector<8x1xi1> to vector<8x8xi1>
    %317 = arith.select %316, %305, %265 : vector<8x8xi1>, vector<8x8xf32>
    %cst_86 = arith.constant 0.000000e+00 : f32
    %318 = vector.shape_cast %311 : vector<8x1xi1> to vector<8x1xi1>
    %319 = vector.broadcast %318 : vector<8x1xi1> to vector<8x8xi1>
    %320 = vector.broadcast %cst_86 : f32 to vector<8x8xf32>
    %321 = arith.select %319, %314, %320 : vector<8x8xi1>, vector<8x8xf32>
    %c0_87 = arith.constant 0 : index
    %322 = arith.index_cast %278 : i32 to index
    %c0_88 = arith.constant 0 : index
    %323 = vector.load %arg6[%c0_87, %322, %c0_88] : memref<1x128x8xf32, #tpu.memory_space<vmem>>, vector<1x8x8xf32>
    %324 = vector.shape_cast %323 : vector<1x8x8xf32> to vector<8x8xf32>
    %325 = vector.shape_cast %321 : vector<8x8xf32> to vector<1x8x8xf32>
    tpu.vector_store %arg6[%c0_87, %322, %c0_88], %325 {strides = array<i32>} : memref<1x128x8xf32, #tpu.memory_space<vmem>>, vector<1x8x8xf32>,
    %c6_i32 = arith.constant 6 : i32
    %c0_i32_89 = arith.constant 0 : i32
    %326 = arith.cmpi eq, %arg0, %c0_i32_89 : i32
    %c15_i32_90 = arith.constant 15 : i32
    %327 = arith.subi %c15_i32_90, %c6_i32 : i32
    %328 = arith.select %326, %c6_i32, %327 : i32
    %c8_i32_91 = arith.constant 8 : i32
    %329 = arith.muli %328, %c8_i32_91 : i32
    %330 = tpu.assume_multiple %329, 8 : i32
    %331 = arith.index_cast %330 : i32 to index
    %c0_92 = arith.constant 0 : index
    %332 = vector.load %arg7[%331, %c0_92] : memref<128x32xf32, #tpu.memory_space<vmem>>, vector<8x32xf32>
    %cst_93 = arith.constant dense<0.000000e+00> : vector<8x32xf32>
    %333 = tpu.matmul %314, %12, %cst_93 {dimension_numbers = #tpu.dot_dimension_numbers<[1], [0], [0], [1], [0, 0, 1, 1], [], []>} : vector<8x8xf32>, vector<8x32xf32>, vector<8x32xf32> -> vector<8x32xf32>
    %334 = arith.addf %332, %333 : vector<8x32xf32>
    %335 = vector.extract_strided_slice %334 {offsets = [0, 0], sizes = [8, 8], strides = [1, 1]} : vector<8x32xf32> to vector<8x8xf32>
    %336 = arith.negf %335 : vector<8x8xf32>
    %337 = math.exp %336 : vector<8x8xf32>
    %cst_94 = arith.constant 1.000000e+00 : f32
    %338 = vector.broadcast %cst_94 : f32 to vector<8x8xf32>
    %339 = arith.addf %338, %337 : vector<8x8xf32>
    %340 = arith.divf %338, %339 : vector<8x8xf32>
    %341 = vector.extract_strided_slice %334 {offsets = [0, 8], sizes = [8, 8], strides = [1, 1]} : vector<8x32xf32> to vector<8x8xf32>
    %342 = arith.negf %341 : vector<8x8xf32>
    %343 = math.exp %342 : vector<8x8xf32>
    %cst_95 = arith.constant 1.000000e+00 : f32
    %344 = vector.broadcast %cst_95 : f32 to vector<8x8xf32>
    %345 = arith.addf %344, %343 : vector<8x8xf32>
    %346 = arith.divf %344, %345 : vector<8x8xf32>
    %347 = vector.extract_strided_slice %334 {offsets = [0, 16], sizes = [8, 8], strides = [1, 1]} : vector<8x32xf32> to vector<8x8xf32>
    %348 = math.tanh %347 : vector<8x8xf32>
    %349 = vector.extract_strided_slice %334 {offsets = [0, 24], sizes = [8, 8], strides = [1, 1]} : vector<8x32xf32> to vector<8x8xf32>
    %350 = arith.negf %349 : vector<8x8xf32>
    %351 = math.exp %350 : vector<8x8xf32>
    %cst_96 = arith.constant 1.000000e+00 : f32
    %352 = vector.broadcast %cst_96 : f32 to vector<8x8xf32>
    %353 = arith.addf %352, %351 : vector<8x8xf32>
    %354 = arith.divf %352, %353 : vector<8x8xf32>
    %355 = arith.mulf %346, %317 : vector<8x8xf32>
    %356 = arith.mulf %340, %348 : vector<8x8xf32>
    %357 = arith.addf %355, %356 : vector<8x8xf32>
    %358 = math.tanh %357 : vector<8x8xf32>
    %359 = arith.mulf %354, %358 : vector<8x8xf32>
    %360 = arith.index_cast %330 : i32 to index
    %c0_97 = arith.constant 0 : index
    %361 = vector.load %arg2[%360, %c0_97] : memref<128x1xf32, #tpu.memory_space<vmem>>, vector<8x1xf32>
    %cst_98 = arith.constant 0.000000e+00 : f32
    %362 = vector.broadcast %cst_98 : f32 to vector<8x1xf32>
    %363 = arith.cmpf one, %361, %362 : vector<8x1xf32>
    %364 = vector.shape_cast %363 : vector<8x1xi1> to vector<8x1xi1>
    %365 = vector.broadcast %364 : vector<8x1xi1> to vector<8x8xi1>
    %366 = arith.select %365, %359, %314 : vector<8x8xi1>, vector<8x8xf32>
    %367 = vector.shape_cast %363 : vector<8x1xi1> to vector<8x1xi1>
    %368 = vector.broadcast %367 : vector<8x1xi1> to vector<8x8xi1>
    %369 = arith.select %368, %357, %317 : vector<8x8xi1>, vector<8x8xf32>
    %cst_99 = arith.constant 0.000000e+00 : f32
    %370 = vector.shape_cast %363 : vector<8x1xi1> to vector<8x1xi1>
    %371 = vector.broadcast %370 : vector<8x1xi1> to vector<8x8xi1>
    %372 = vector.broadcast %cst_99 : f32 to vector<8x8xf32>
    %373 = arith.select %371, %366, %372 : vector<8x8xi1>, vector<8x8xf32>
    %c0_100 = arith.constant 0 : index
    %374 = arith.index_cast %330 : i32 to index
    %c0_101 = arith.constant 0 : index
    %375 = vector.load %arg6[%c0_100, %374, %c0_101] : memref<1x128x8xf32, #tpu.memory_space<vmem>>, vector<1x8x8xf32>
    %376 = vector.shape_cast %375 : vector<1x8x8xf32> to vector<8x8xf32>
    %377 = vector.shape_cast %373 : vector<8x8xf32> to vector<1x8x8xf32>
    tpu.vector_store %arg6[%c0_100, %374, %c0_101], %377 {strides = array<i32>} : memref<1x128x8xf32, #tpu.memory_space<vmem>>, vector<1x8x8xf32>,
    %c7_i32 = arith.constant 7 : i32
    %c0_i32_102 = arith.constant 0 : i32
    %378 = arith.cmpi eq, %arg0, %c0_i32_102 : i32
    %c15_i32_103 = arith.constant 15 : i32
    %379 = arith.subi %c15_i32_103, %c7_i32 : i32
    %380 = arith.select %378, %c7_i32, %379 : i32
    %c8_i32_104 = arith.constant 8 : i32
    %381 = arith.muli %380, %c8_i32_104 : i32
    %382 = tpu.assume_multiple %381, 8 : i32
    %383 = arith.index_cast %382 : i32 to index
    %c0_105 = arith.constant 0 : index
    %384 = vector.load %arg7[%383, %c0_105] : memref<128x32xf32, #tpu.memory_space<vmem>>, vector<8x32xf32>
    %cst_106 = arith.constant dense<0.000000e+00> : vector<8x32xf32>
    %385 = tpu.matmul %366, %12, %cst_106 {dimension_numbers = #tpu.dot_dimension_numbers<[1], [0], [0], [1], [0, 0, 1, 1], [], []>} : vector<8x8xf32>, vector<8x32xf32>, vector<8x32xf32> -> vector<8x32xf32>
    %386 = arith.addf %384, %385 : vector<8x32xf32>
    %387 = vector.extract_strided_slice %386 {offsets = [0, 0], sizes = [8, 8], strides = [1, 1]} : vector<8x32xf32> to vector<8x8xf32>
    %388 = arith.negf %387 : vector<8x8xf32>
    %389 = math.exp %388 : vector<8x8xf32>
    %cst_107 = arith.constant 1.000000e+00 : f32
    %390 = vector.broadcast %cst_107 : f32 to vector<8x8xf32>
    %391 = arith.addf %390, %389 : vector<8x8xf32>
    %392 = arith.divf %390, %391 : vector<8x8xf32>
    %393 = vector.extract_strided_slice %386 {offsets = [0, 8], sizes = [8, 8], strides = [1, 1]} : vector<8x32xf32> to vector<8x8xf32>
    %394 = arith.negf %393 : vector<8x8xf32>
    %395 = math.exp %394 : vector<8x8xf32>
    %cst_108 = arith.constant 1.000000e+00 : f32
    %396 = vector.broadcast %cst_108 : f32 to vector<8x8xf32>
    %397 = arith.addf %396, %395 : vector<8x8xf32>
    %398 = arith.divf %396, %397 : vector<8x8xf32>
    %399 = vector.extract_strided_slice %386 {offsets = [0, 16], sizes = [8, 8], strides = [1, 1]} : vector<8x32xf32> to vector<8x8xf32>
    %400 = math.tanh %399 : vector<8x8xf32>
    %401 = vector.extract_strided_slice %386 {offsets = [0, 24], sizes = [8, 8], strides = [1, 1]} : vector<8x32xf32> to vector<8x8xf32>
    %402 = arith.negf %401 : vector<8x8xf32>
    %403 = math.exp %402 : vector<8x8xf32>
    %cst_109 = arith.constant 1.000000e+00 : f32
    %404 = vector.broadcast %cst_109 : f32 to vector<8x8xf32>
    %405 = arith.addf %404, %403 : vector<8x8xf32>
    %406 = arith.divf %404, %405 : vector<8x8xf32>
    %407 = arith.mulf %398, %369 : vector<8x8xf32>
    %408 = arith.mulf %392, %400 : vector<8x8xf32>
    %409 = arith.addf %407, %408 : vector<8x8xf32>
    %410 = math.tanh %409 : vector<8x8xf32>
    %411 = arith.mulf %406, %410 : vector<8x8xf32>
    %412 = arith.index_cast %382 : i32 to index
    %c0_110 = arith.constant 0 : index
    %413 = vector.load %arg2[%412, %c0_110] : memref<128x1xf32, #tpu.memory_space<vmem>>, vector<8x1xf32>
    %cst_111 = arith.constant 0.000000e+00 : f32
    %414 = vector.broadcast %cst_111 : f32 to vector<8x1xf32>
    %415 = arith.cmpf one, %413, %414 : vector<8x1xf32>
    %416 = vector.shape_cast %415 : vector<8x1xi1> to vector<8x1xi1>
    %417 = vector.broadcast %416 : vector<8x1xi1> to vector<8x8xi1>
    %418 = arith.select %417, %411, %366 : vector<8x8xi1>, vector<8x8xf32>
    %419 = vector.shape_cast %415 : vector<8x1xi1> to vector<8x1xi1>
    %420 = vector.broadcast %419 : vector<8x1xi1> to vector<8x8xi1>
    %421 = arith.select %420, %409, %369 : vector<8x8xi1>, vector<8x8xf32>
    %cst_112 = arith.constant 0.000000e+00 : f32
    %422 = vector.shape_cast %415 : vector<8x1xi1> to vector<8x1xi1>
    %423 = vector.broadcast %422 : vector<8x1xi1> to vector<8x8xi1>
    %424 = vector.broadcast %cst_112 : f32 to vector<8x8xf32>
    %425 = arith.select %423, %418, %424 : vector<8x8xi1>, vector<8x8xf32>
    %c0_113 = arith.constant 0 : index
    %426 = arith.index_cast %382 : i32 to index
    %c0_114 = arith.constant 0 : index
    %427 = vector.load %arg6[%c0_113, %426, %c0_114] : memref<1x128x8xf32, #tpu.memory_space<vmem>>, vector<1x8x8xf32>
    %428 = vector.shape_cast %427 : vector<1x8x8xf32> to vector<8x8xf32>
    %429 = vector.shape_cast %425 : vector<8x8xf32> to vector<1x8x8xf32>
    tpu.vector_store %arg6[%c0_113, %426, %c0_114], %429 {strides = array<i32>} : memref<1x128x8xf32, #tpu.memory_space<vmem>>, vector<1x8x8xf32>,
    %c8_i32_115 = arith.constant 8 : i32
    %c0_i32_116 = arith.constant 0 : i32
    %430 = arith.cmpi eq, %arg0, %c0_i32_116 : i32
    %c15_i32_117 = arith.constant 15 : i32
    %431 = arith.subi %c15_i32_117, %c8_i32_115 : i32
    %432 = arith.select %430, %c8_i32_115, %431 : i32
    %c8_i32_118 = arith.constant 8 : i32
    %433 = arith.muli %432, %c8_i32_118 : i32
    %434 = tpu.assume_multiple %433, 8 : i32
    %435 = arith.index_cast %434 : i32 to index
    %c0_119 = arith.constant 0 : index
    %436 = vector.load %arg7[%435, %c0_119] : memref<128x32xf32, #tpu.memory_space<vmem>>, vector<8x32xf32>
    %cst_120 = arith.constant dense<0.000000e+00> : vector<8x32xf32>
    %437 = tpu.matmul %418, %12, %cst_120 {dimension_numbers = #tpu.dot_dimension_numbers<[1], [0], [0], [1], [0, 0, 1, 1], [], []>} : vector<8x8xf32>, vector<8x32xf32>, vector<8x32xf32> -> vector<8x32xf32>
    %438 = arith.addf %436, %437 : vector<8x32xf32>
    %439 = vector.extract_strided_slice %438 {offsets = [0, 0], sizes = [8, 8], strides = [1, 1]} : vector<8x32xf32> to vector<8x8xf32>
    %440 = arith.negf %439 : vector<8x8xf32>
    %441 = math.exp %440 : vector<8x8xf32>
    %cst_121 = arith.constant 1.000000e+00 : f32
    %442 = vector.broadcast %cst_121 : f32 to vector<8x8xf32>
    %443 = arith.addf %442, %441 : vector<8x8xf32>
    %444 = arith.divf %442, %443 : vector<8x8xf32>
    %445 = vector.extract_strided_slice %438 {offsets = [0, 8], sizes = [8, 8], strides = [1, 1]} : vector<8x32xf32> to vector<8x8xf32>
    %446 = arith.negf %445 : vector<8x8xf32>
    %447 = math.exp %446 : vector<8x8xf32>
    %cst_122 = arith.constant 1.000000e+00 : f32
    %448 = vector.broadcast %cst_122 : f32 to vector<8x8xf32>
    %449 = arith.addf %448, %447 : vector<8x8xf32>
    %450 = arith.divf %448, %449 : vector<8x8xf32>
    %451 = vector.extract_strided_slice %438 {offsets = [0, 16], sizes = [8, 8], strides = [1, 1]} : vector<8x32xf32> to vector<8x8xf32>
    %452 = math.tanh %451 : vector<8x8xf32>
    %453 = vector.extract_strided_slice %438 {offsets = [0, 24], sizes = [8, 8], strides = [1, 1]} : vector<8x32xf32> to vector<8x8xf32>
    %454 = arith.negf %453 : vector<8x8xf32>
    %455 = math.exp %454 : vector<8x8xf32>
    %cst_123 = arith.constant 1.000000e+00 : f32
    %456 = vector.broadcast %cst_123 : f32 to vector<8x8xf32>
    %457 = arith.addf %456, %455 : vector<8x8xf32>
    %458 = arith.divf %456, %457 : vector<8x8xf32>
    %459 = arith.mulf %450, %421 : vector<8x8xf32>
    %460 = arith.mulf %444, %452 : vector<8x8xf32>
    %461 = arith.addf %459, %460 : vector<8x8xf32>
    %462 = math.tanh %461 : vector<8x8xf32>
    %463 = arith.mulf %458, %462 : vector<8x8xf32>
    %464 = arith.index_cast %434 : i32 to index
    %c0_124 = arith.constant 0 : index
    %465 = vector.load %arg2[%464, %c0_124] : memref<128x1xf32, #tpu.memory_space<vmem>>, vector<8x1xf32>
    %cst_125 = arith.constant 0.000000e+00 : f32
    %466 = vector.broadcast %cst_125 : f32 to vector<8x1xf32>
    %467 = arith.cmpf one, %465, %466 : vector<8x1xf32>
    %468 = vector.shape_cast %467 : vector<8x1xi1> to vector<8x1xi1>
    %469 = vector.broadcast %468 : vector<8x1xi1> to vector<8x8xi1>
    %470 = arith.select %469, %463, %418 : vector<8x8xi1>, vector<8x8xf32>
    %471 = vector.shape_cast %467 : vector<8x1xi1> to vector<8x1xi1>
    %472 = vector.broadcast %471 : vector<8x1xi1> to vector<8x8xi1>
    %473 = arith.select %472, %461, %421 : vector<8x8xi1>, vector<8x8xf32>
    %cst_126 = arith.constant 0.000000e+00 : f32
    %474 = vector.shape_cast %467 : vector<8x1xi1> to vector<8x1xi1>
    %475 = vector.broadcast %474 : vector<8x1xi1> to vector<8x8xi1>
    %476 = vector.broadcast %cst_126 : f32 to vector<8x8xf32>
    %477 = arith.select %475, %470, %476 : vector<8x8xi1>, vector<8x8xf32>
    %c0_127 = arith.constant 0 : index
    %478 = arith.index_cast %434 : i32 to index
    %c0_128 = arith.constant 0 : index
    %479 = vector.load %arg6[%c0_127, %478, %c0_128] : memref<1x128x8xf32, #tpu.memory_space<vmem>>, vector<1x8x8xf32>
    %480 = vector.shape_cast %479 : vector<1x8x8xf32> to vector<8x8xf32>
    %481 = vector.shape_cast %477 : vector<8x8xf32> to vector<1x8x8xf32>
    tpu.vector_store %arg6[%c0_127, %478, %c0_128], %481 {strides = array<i32>} : memref<1x128x8xf32, #tpu.memory_space<vmem>>, vector<1x8x8xf32>,
    %c9_i32 = arith.constant 9 : i32
    %c0_i32_129 = arith.constant 0 : i32
    %482 = arith.cmpi eq, %arg0, %c0_i32_129 : i32
    %c15_i32_130 = arith.constant 15 : i32
    %483 = arith.subi %c15_i32_130, %c9_i32 : i32
    %484 = arith.select %482, %c9_i32, %483 : i32
    %c8_i32_131 = arith.constant 8 : i32
    %485 = arith.muli %484, %c8_i32_131 : i32
    %486 = tpu.assume_multiple %485, 8 : i32
    %487 = arith.index_cast %486 : i32 to index
    %c0_132 = arith.constant 0 : index
    %488 = vector.load %arg7[%487, %c0_132] : memref<128x32xf32, #tpu.memory_space<vmem>>, vector<8x32xf32>
    %cst_133 = arith.constant dense<0.000000e+00> : vector<8x32xf32>
    %489 = tpu.matmul %470, %12, %cst_133 {dimension_numbers = #tpu.dot_dimension_numbers<[1], [0], [0], [1], [0, 0, 1, 1], [], []>} : vector<8x8xf32>, vector<8x32xf32>, vector<8x32xf32> -> vector<8x32xf32>
    %490 = arith.addf %488, %489 : vector<8x32xf32>
    %491 = vector.extract_strided_slice %490 {offsets = [0, 0], sizes = [8, 8], strides = [1, 1]} : vector<8x32xf32> to vector<8x8xf32>
    %492 = arith.negf %491 : vector<8x8xf32>
    %493 = math.exp %492 : vector<8x8xf32>
    %cst_134 = arith.constant 1.000000e+00 : f32
    %494 = vector.broadcast %cst_134 : f32 to vector<8x8xf32>
    %495 = arith.addf %494, %493 : vector<8x8xf32>
    %496 = arith.divf %494, %495 : vector<8x8xf32>
    %497 = vector.extract_strided_slice %490 {offsets = [0, 8], sizes = [8, 8], strides = [1, 1]} : vector<8x32xf32> to vector<8x8xf32>
    %498 = arith.negf %497 : vector<8x8xf32>
    %499 = math.exp %498 : vector<8x8xf32>
    %cst_135 = arith.constant 1.000000e+00 : f32
    %500 = vector.broadcast %cst_135 : f32 to vector<8x8xf32>
    %501 = arith.addf %500, %499 : vector<8x8xf32>
    %502 = arith.divf %500, %501 : vector<8x8xf32>
    %503 = vector.extract_strided_slice %490 {offsets = [0, 16], sizes = [8, 8], strides = [1, 1]} : vector<8x32xf32> to vector<8x8xf32>
    %504 = math.tanh %503 : vector<8x8xf32>
    %505 = vector.extract_strided_slice %490 {offsets = [0, 24], sizes = [8, 8], strides = [1, 1]} : vector<8x32xf32> to vector<8x8xf32>
    %506 = arith.negf %505 : vector<8x8xf32>
    %507 = math.exp %506 : vector<8x8xf32>
    %cst_136 = arith.constant 1.000000e+00 : f32
    %508 = vector.broadcast %cst_136 : f32 to vector<8x8xf32>
    %509 = arith.addf %508, %507 : vector<8x8xf32>
    %510 = arith.divf %508, %509 : vector<8x8xf32>
    %511 = arith.mulf %502, %473 : vector<8x8xf32>
    %512 = arith.mulf %496, %504 : vector<8x8xf32>
    %513 = arith.addf %511, %512 : vector<8x8xf32>
    %514 = math.tanh %513 : vector<8x8xf32>
    %515 = arith.mulf %510, %514 : vector<8x8xf32>
    %516 = arith.index_cast %486 : i32 to index
    %c0_137 = arith.constant 0 : index
    %517 = vector.load %arg2[%516, %c0_137] : memref<128x1xf32, #tpu.memory_space<vmem>>, vector<8x1xf32>
    %cst_138 = arith.constant 0.000000e+00 : f32
    %518 = vector.broadcast %cst_138 : f32 to vector<8x1xf32>
    %519 = arith.cmpf one, %517, %518 : vector<8x1xf32>
    %520 = vector.shape_cast %519 : vector<8x1xi1> to vector<8x1xi1>
    %521 = vector.broadcast %520 : vector<8x1xi1> to vector<8x8xi1>
    %522 = arith.select %521, %515, %470 : vector<8x8xi1>, vector<8x8xf32>
    %523 = vector.shape_cast %519 : vector<8x1xi1> to vector<8x1xi1>
    %524 = vector.broadcast %523 : vector<8x1xi1> to vector<8x8xi1>
    %525 = arith.select %524, %513, %473 : vector<8x8xi1>, vector<8x8xf32>
    %cst_139 = arith.constant 0.000000e+00 : f32
    %526 = vector.shape_cast %519 : vector<8x1xi1> to vector<8x1xi1>
    %527 = vector.broadcast %526 : vector<8x1xi1> to vector<8x8xi1>
    %528 = vector.broadcast %cst_139 : f32 to vector<8x8xf32>
    %529 = arith.select %527, %522, %528 : vector<8x8xi1>, vector<8x8xf32>
    %c0_140 = arith.constant 0 : index
    %530 = arith.index_cast %486 : i32 to index
    %c0_141 = arith.constant 0 : index
    %531 = vector.load %arg6[%c0_140, %530, %c0_141] : memref<1x128x8xf32, #tpu.memory_space<vmem>>, vector<1x8x8xf32>
    %532 = vector.shape_cast %531 : vector<1x8x8xf32> to vector<8x8xf32>
    %533 = vector.shape_cast %529 : vector<8x8xf32> to vector<1x8x8xf32>
    tpu.vector_store %arg6[%c0_140, %530, %c0_141], %533 {strides = array<i32>} : memref<1x128x8xf32, #tpu.memory_space<vmem>>, vector<1x8x8xf32>,
    %c10_i32 = arith.constant 10 : i32
    %c0_i32_142 = arith.constant 0 : i32
    %534 = arith.cmpi eq, %arg0, %c0_i32_142 : i32
    %c15_i32_143 = arith.constant 15 : i32
    %535 = arith.subi %c15_i32_143, %c10_i32 : i32
    %536 = arith.select %534, %c10_i32, %535 : i32
    %c8_i32_144 = arith.constant 8 : i32
    %537 = arith.muli %536, %c8_i32_144 : i32
    %538 = tpu.assume_multiple %537, 8 : i32
    %539 = arith.index_cast %538 : i32 to index
    %c0_145 = arith.constant 0 : index
    %540 = vector.load %arg7[%539, %c0_145] : memref<128x32xf32, #tpu.memory_space<vmem>>, vector<8x32xf32>
    %cst_146 = arith.constant dense<0.000000e+00> : vector<8x32xf32>
    %541 = tpu.matmul %522, %12, %cst_146 {dimension_numbers = #tpu.dot_dimension_numbers<[1], [0], [0], [1], [0, 0, 1, 1], [], []>} : vector<8x8xf32>, vector<8x32xf32>, vector<8x32xf32> -> vector<8x32xf32>
    %542 = arith.addf %540, %541 : vector<8x32xf32>
    %543 = vector.extract_strided_slice %542 {offsets = [0, 0], sizes = [8, 8], strides = [1, 1]} : vector<8x32xf32> to vector<8x8xf32>
    %544 = arith.negf %543 : vector<8x8xf32>
    %545 = math.exp %544 : vector<8x8xf32>
    %cst_147 = arith.constant 1.000000e+00 : f32
    %546 = vector.broadcast %cst_147 : f32 to vector<8x8xf32>
    %547 = arith.addf %546, %545 : vector<8x8xf32>
    %548 = arith.divf %546, %547 : vector<8x8xf32>
    %549 = vector.extract_strided_slice %542 {offsets = [0, 8], sizes = [8, 8], strides = [1, 1]} : vector<8x32xf32> to vector<8x8xf32>
    %550 = arith.negf %549 : vector<8x8xf32>
    %551 = math.exp %550 : vector<8x8xf32>
    %cst_148 = arith.constant 1.000000e+00 : f32
    %552 = vector.broadcast %cst_148 : f32 to vector<8x8xf32>
    %553 = arith.addf %552, %551 : vector<8x8xf32>
    %554 = arith.divf %552, %553 : vector<8x8xf32>
    %555 = vector.extract_strided_slice %542 {offsets = [0, 16], sizes = [8, 8], strides = [1, 1]} : vector<8x32xf32> to vector<8x8xf32>
    %556 = math.tanh %555 : vector<8x8xf32>
    %557 = vector.extract_strided_slice %542 {offsets = [0, 24], sizes = [8, 8], strides = [1, 1]} : vector<8x32xf32> to vector<8x8xf32>
    %558 = arith.negf %557 : vector<8x8xf32>
    %559 = math.exp %558 : vector<8x8xf32>
    %cst_149 = arith.constant 1.000000e+00 : f32
    %560 = vector.broadcast %cst_149 : f32 to vector<8x8xf32>
    %561 = arith.addf %560, %559 : vector<8x8xf32>
    %562 = arith.divf %560, %561 : vector<8x8xf32>
    %563 = arith.mulf %554, %525 : vector<8x8xf32>
    %564 = arith.mulf %548, %556 : vector<8x8xf32>
    %565 = arith.addf %563, %564 : vector<8x8xf32>
    %566 = math.tanh %565 : vector<8x8xf32>
    %567 = arith.mulf %562, %566 : vector<8x8xf32>
    %568 = arith.index_cast %538 : i32 to index
    %c0_150 = arith.constant 0 : index
    %569 = vector.load %arg2[%568, %c0_150] : memref<128x1xf32, #tpu.memory_space<vmem>>, vector<8x1xf32>
    %cst_151 = arith.constant 0.000000e+00 : f32
    %570 = vector.broadcast %cst_151 : f32 to vector<8x1xf32>
    %571 = arith.cmpf one, %569, %570 : vector<8x1xf32>
    %572 = vector.shape_cast %571 : vector<8x1xi1> to vector<8x1xi1>
    %573 = vector.broadcast %572 : vector<8x1xi1> to vector<8x8xi1>
    %574 = arith.select %573, %567, %522 : vector<8x8xi1>, vector<8x8xf32>
    %575 = vector.shape_cast %571 : vector<8x1xi1> to vector<8x1xi1>
    %576 = vector.broadcast %575 : vector<8x1xi1> to vector<8x8xi1>
    %577 = arith.select %576, %565, %525 : vector<8x8xi1>, vector<8x8xf32>
    %cst_152 = arith.constant 0.000000e+00 : f32
    %578 = vector.shape_cast %571 : vector<8x1xi1> to vector<8x1xi1>
    %579 = vector.broadcast %578 : vector<8x1xi1> to vector<8x8xi1>
    %580 = vector.broadcast %cst_152 : f32 to vector<8x8xf32>
    %581 = arith.select %579, %574, %580 : vector<8x8xi1>, vector<8x8xf32>
    %c0_153 = arith.constant 0 : index
    %582 = arith.index_cast %538 : i32 to index
    %c0_154 = arith.constant 0 : index
    %583 = vector.load %arg6[%c0_153, %582, %c0_154] : memref<1x128x8xf32, #tpu.memory_space<vmem>>, vector<1x8x8xf32>
    %584 = vector.shape_cast %583 : vector<1x8x8xf32> to vector<8x8xf32>
    %585 = vector.shape_cast %581 : vector<8x8xf32> to vector<1x8x8xf32>
    tpu.vector_store %arg6[%c0_153, %582, %c0_154], %585 {strides = array<i32>} : memref<1x128x8xf32, #tpu.memory_space<vmem>>, vector<1x8x8xf32>,
    %c11_i32 = arith.constant 11 : i32
    %c0_i32_155 = arith.constant 0 : i32
    %586 = arith.cmpi eq, %arg0, %c0_i32_155 : i32
    %c15_i32_156 = arith.constant 15 : i32
    %587 = arith.subi %c15_i32_156, %c11_i32 : i32
    %588 = arith.select %586, %c11_i32, %587 : i32
    %c8_i32_157 = arith.constant 8 : i32
    %589 = arith.muli %588, %c8_i32_157 : i32
    %590 = tpu.assume_multiple %589, 8 : i32
    %591 = arith.index_cast %590 : i32 to index
    %c0_158 = arith.constant 0 : index
    %592 = vector.load %arg7[%591, %c0_158] : memref<128x32xf32, #tpu.memory_space<vmem>>, vector<8x32xf32>
    %cst_159 = arith.constant dense<0.000000e+00> : vector<8x32xf32>
    %593 = tpu.matmul %574, %12, %cst_159 {dimension_numbers = #tpu.dot_dimension_numbers<[1], [0], [0], [1], [0, 0, 1, 1], [], []>} : vector<8x8xf32>, vector<8x32xf32>, vector<8x32xf32> -> vector<8x32xf32>
    %594 = arith.addf %592, %593 : vector<8x32xf32>
    %595 = vector.extract_strided_slice %594 {offsets = [0, 0], sizes = [8, 8], strides = [1, 1]} : vector<8x32xf32> to vector<8x8xf32>
    %596 = arith.negf %595 : vector<8x8xf32>
    %597 = math.exp %596 : vector<8x8xf32>
    %cst_160 = arith.constant 1.000000e+00 : f32
    %598 = vector.broadcast %cst_160 : f32 to vector<8x8xf32>
    %599 = arith.addf %598, %597 : vector<8x8xf32>
    %600 = arith.divf %598, %599 : vector<8x8xf32>
    %601 = vector.extract_strided_slice %594 {offsets = [0, 8], sizes = [8, 8], strides = [1, 1]} : vector<8x32xf32> to vector<8x8xf32>
    %602 = arith.negf %601 : vector<8x8xf32>
    %603 = math.exp %602 : vector<8x8xf32>
    %cst_161 = arith.constant 1.000000e+00 : f32
    %604 = vector.broadcast %cst_161 : f32 to vector<8x8xf32>
    %605 = arith.addf %604, %603 : vector<8x8xf32>
    %606 = arith.divf %604, %605 : vector<8x8xf32>
    %607 = vector.extract_strided_slice %594 {offsets = [0, 16], sizes = [8, 8], strides = [1, 1]} : vector<8x32xf32> to vector<8x8xf32>
    %608 = math.tanh %607 : vector<8x8xf32>
    %609 = vector.extract_strided_slice %594 {offsets = [0, 24], sizes = [8, 8], strides = [1, 1]} : vector<8x32xf32> to vector<8x8xf32>
    %610 = arith.negf %609 : vector<8x8xf32>
    %611 = math.exp %610 : vector<8x8xf32>
    %cst_162 = arith.constant 1.000000e+00 : f32
    %612 = vector.broadcast %cst_162 : f32 to vector<8x8xf32>
    %613 = arith.addf %612, %611 : vector<8x8xf32>
    %614 = arith.divf %612, %613 : vector<8x8xf32>
    %615 = arith.mulf %606, %577 : vector<8x8xf32>
    %616 = arith.mulf %600, %608 : vector<8x8xf32>
    %617 = arith.addf %615, %616 : vector<8x8xf32>
    %618 = math.tanh %617 : vector<8x8xf32>
    %619 = arith.mulf %614, %618 : vector<8x8xf32>
    %620 = arith.index_cast %590 : i32 to index
    %c0_163 = arith.constant 0 : index
    %621 = vector.load %arg2[%620, %c0_163] : memref<128x1xf32, #tpu.memory_space<vmem>>, vector<8x1xf32>
    %cst_164 = arith.constant 0.000000e+00 : f32
    %622 = vector.broadcast %cst_164 : f32 to vector<8x1xf32>
    %623 = arith.cmpf one, %621, %622 : vector<8x1xf32>
    %624 = vector.shape_cast %623 : vector<8x1xi1> to vector<8x1xi1>
    %625 = vector.broadcast %624 : vector<8x1xi1> to vector<8x8xi1>
    %626 = arith.select %625, %619, %574 : vector<8x8xi1>, vector<8x8xf32>
    %627 = vector.shape_cast %623 : vector<8x1xi1> to vector<8x1xi1>
    %628 = vector.broadcast %627 : vector<8x1xi1> to vector<8x8xi1>
    %629 = arith.select %628, %617, %577 : vector<8x8xi1>, vector<8x8xf32>
    %cst_165 = arith.constant 0.000000e+00 : f32
    %630 = vector.shape_cast %623 : vector<8x1xi1> to vector<8x1xi1>
    %631 = vector.broadcast %630 : vector<8x1xi1> to vector<8x8xi1>
    %632 = vector.broadcast %cst_165 : f32 to vector<8x8xf32>
    %633 = arith.select %631, %626, %632 : vector<8x8xi1>, vector<8x8xf32>
    %c0_166 = arith.constant 0 : index
    %634 = arith.index_cast %590 : i32 to index
    %c0_167 = arith.constant 0 : index
    %635 = vector.load %arg6[%c0_166, %634, %c0_167] : memref<1x128x8xf32, #tpu.memory_space<vmem>>, vector<1x8x8xf32>
    %636 = vector.shape_cast %635 : vector<1x8x8xf32> to vector<8x8xf32>
    %637 = vector.shape_cast %633 : vector<8x8xf32> to vector<1x8x8xf32>
    tpu.vector_store %arg6[%c0_166, %634, %c0_167], %637 {strides = array<i32>} : memref<1x128x8xf32, #tpu.memory_space<vmem>>, vector<1x8x8xf32>,
    %c12_i32 = arith.constant 12 : i32
    %c0_i32_168 = arith.constant 0 : i32
    %638 = arith.cmpi eq, %arg0, %c0_i32_168 : i32
    %c15_i32_169 = arith.constant 15 : i32
    %639 = arith.subi %c15_i32_169, %c12_i32 : i32
    %640 = arith.select %638, %c12_i32, %639 : i32
    %c8_i32_170 = arith.constant 8 : i32
    %641 = arith.muli %640, %c8_i32_170 : i32
    %642 = tpu.assume_multiple %641, 8 : i32
    %643 = arith.index_cast %642 : i32 to index
    %c0_171 = arith.constant 0 : index
    %644 = vector.load %arg7[%643, %c0_171] : memref<128x32xf32, #tpu.memory_space<vmem>>, vector<8x32xf32>
    %cst_172 = arith.constant dense<0.000000e+00> : vector<8x32xf32>
    %645 = tpu.matmul %626, %12, %cst_172 {dimension_numbers = #tpu.dot_dimension_numbers<[1], [0], [0], [1], [0, 0, 1, 1], [], []>} : vector<8x8xf32>, vector<8x32xf32>, vector<8x32xf32> -> vector<8x32xf32>
    %646 = arith.addf %644, %645 : vector<8x32xf32>
    %647 = vector.extract_strided_slice %646 {offsets = [0, 0], sizes = [8, 8], strides = [1, 1]} : vector<8x32xf32> to vector<8x8xf32>
    %648 = arith.negf %647 : vector<8x8xf32>
    %649 = math.exp %648 : vector<8x8xf32>
    %cst_173 = arith.constant 1.000000e+00 : f32
    %650 = vector.broadcast %cst_173 : f32 to vector<8x8xf32>
    %651 = arith.addf %650, %649 : vector<8x8xf32>
    %652 = arith.divf %650, %651 : vector<8x8xf32>
    %653 = vector.extract_strided_slice %646 {offsets = [0, 8], sizes = [8, 8], strides = [1, 1]} : vector<8x32xf32> to vector<8x8xf32>
    %654 = arith.negf %653 : vector<8x8xf32>
    %655 = math.exp %654 : vector<8x8xf32>
    %cst_174 = arith.constant 1.000000e+00 : f32
    %656 = vector.broadcast %cst_174 : f32 to vector<8x8xf32>
    %657 = arith.addf %656, %655 : vector<8x8xf32>
    %658 = arith.divf %656, %657 : vector<8x8xf32>
    %659 = vector.extract_strided_slice %646 {offsets = [0, 16], sizes = [8, 8], strides = [1, 1]} : vector<8x32xf32> to vector<8x8xf32>
    %660 = math.tanh %659 : vector<8x8xf32>
    %661 = vector.extract_strided_slice %646 {offsets = [0, 24], sizes = [8, 8], strides = [1, 1]} : vector<8x32xf32> to vector<8x8xf32>
    %662 = arith.negf %661 : vector<8x8xf32>
    %663 = math.exp %662 : vector<8x8xf32>
    %cst_175 = arith.constant 1.000000e+00 : f32
    %664 = vector.broadcast %cst_175 : f32 to vector<8x8xf32>
    %665 = arith.addf %664, %663 : vector<8x8xf32>
    %666 = arith.divf %664, %665 : vector<8x8xf32>
    %667 = arith.mulf %658, %629 : vector<8x8xf32>
    %668 = arith.mulf %652, %660 : vector<8x8xf32>
    %669 = arith.addf %667, %668 : vector<8x8xf32>
    %670 = math.tanh %669 : vector<8x8xf32>
    %671 = arith.mulf %666, %670 : vector<8x8xf32>
    %672 = arith.index_cast %642 : i32 to index
    %c0_176 = arith.constant 0 : index
    %673 = vector.load %arg2[%672, %c0_176] : memref<128x1xf32, #tpu.memory_space<vmem>>, vector<8x1xf32>
    %cst_177 = arith.constant 0.000000e+00 : f32
    %674 = vector.broadcast %cst_177 : f32 to vector<8x1xf32>
    %675 = arith.cmpf one, %673, %674 : vector<8x1xf32>
    %676 = vector.shape_cast %675 : vector<8x1xi1> to vector<8x1xi1>
    %677 = vector.broadcast %676 : vector<8x1xi1> to vector<8x8xi1>
    %678 = arith.select %677, %671, %626 : vector<8x8xi1>, vector<8x8xf32>
    %679 = vector.shape_cast %675 : vector<8x1xi1> to vector<8x1xi1>
    %680 = vector.broadcast %679 : vector<8x1xi1> to vector<8x8xi1>
    %681 = arith.select %680, %669, %629 : vector<8x8xi1>, vector<8x8xf32>
    %cst_178 = arith.constant 0.000000e+00 : f32
    %682 = vector.shape_cast %675 : vector<8x1xi1> to vector<8x1xi1>
    %683 = vector.broadcast %682 : vector<8x1xi1> to vector<8x8xi1>
    %684 = vector.broadcast %cst_178 : f32 to vector<8x8xf32>
    %685 = arith.select %683, %678, %684 : vector<8x8xi1>, vector<8x8xf32>
    %c0_179 = arith.constant 0 : index
    %686 = arith.index_cast %642 : i32 to index
    %c0_180 = arith.constant 0 : index
    %687 = vector.load %arg6[%c0_179, %686, %c0_180] : memref<1x128x8xf32, #tpu.memory_space<vmem>>, vector<1x8x8xf32>
    %688 = vector.shape_cast %687 : vector<1x8x8xf32> to vector<8x8xf32>
    %689 = vector.shape_cast %685 : vector<8x8xf32> to vector<1x8x8xf32>
    tpu.vector_store %arg6[%c0_179, %686, %c0_180], %689 {strides = array<i32>} : memref<1x128x8xf32, #tpu.memory_space<vmem>>, vector<1x8x8xf32>,
    %c13_i32 = arith.constant 13 : i32
    %c0_i32_181 = arith.constant 0 : i32
    %690 = arith.cmpi eq, %arg0, %c0_i32_181 : i32
    %c15_i32_182 = arith.constant 15 : i32
    %691 = arith.subi %c15_i32_182, %c13_i32 : i32
    %692 = arith.select %690, %c13_i32, %691 : i32
    %c8_i32_183 = arith.constant 8 : i32
    %693 = arith.muli %692, %c8_i32_183 : i32
    %694 = tpu.assume_multiple %693, 8 : i32
    %695 = arith.index_cast %694 : i32 to index
    %c0_184 = arith.constant 0 : index
    %696 = vector.load %arg7[%695, %c0_184] : memref<128x32xf32, #tpu.memory_space<vmem>>, vector<8x32xf32>
    %cst_185 = arith.constant dense<0.000000e+00> : vector<8x32xf32>
    %697 = tpu.matmul %678, %12, %cst_185 {dimension_numbers = #tpu.dot_dimension_numbers<[1], [0], [0], [1], [0, 0, 1, 1], [], []>} : vector<8x8xf32>, vector<8x32xf32>, vector<8x32xf32> -> vector<8x32xf32>
    %698 = arith.addf %696, %697 : vector<8x32xf32>
    %699 = vector.extract_strided_slice %698 {offsets = [0, 0], sizes = [8, 8], strides = [1, 1]} : vector<8x32xf32> to vector<8x8xf32>
    %700 = arith.negf %699 : vector<8x8xf32>
    %701 = math.exp %700 : vector<8x8xf32>
    %cst_186 = arith.constant 1.000000e+00 : f32
    %702 = vector.broadcast %cst_186 : f32 to vector<8x8xf32>
    %703 = arith.addf %702, %701 : vector<8x8xf32>
    %704 = arith.divf %702, %703 : vector<8x8xf32>
    %705 = vector.extract_strided_slice %698 {offsets = [0, 8], sizes = [8, 8], strides = [1, 1]} : vector<8x32xf32> to vector<8x8xf32>
    %706 = arith.negf %705 : vector<8x8xf32>
    %707 = math.exp %706 : vector<8x8xf32>
    %cst_187 = arith.constant 1.000000e+00 : f32
    %708 = vector.broadcast %cst_187 : f32 to vector<8x8xf32>
    %709 = arith.addf %708, %707 : vector<8x8xf32>
    %710 = arith.divf %708, %709 : vector<8x8xf32>
    %711 = vector.extract_strided_slice %698 {offsets = [0, 16], sizes = [8, 8], strides = [1, 1]} : vector<8x32xf32> to vector<8x8xf32>
    %712 = math.tanh %711 : vector<8x8xf32>
    %713 = vector.extract_strided_slice %698 {offsets = [0, 24], sizes = [8, 8], strides = [1, 1]} : vector<8x32xf32> to vector<8x8xf32>
    %714 = arith.negf %713 : vector<8x8xf32>
    %715 = math.exp %714 : vector<8x8xf32>
    %cst_188 = arith.constant 1.000000e+00 : f32
    %716 = vector.broadcast %cst_188 : f32 to vector<8x8xf32>
    %717 = arith.addf %716, %715 : vector<8x8xf32>
    %718 = arith.divf %716, %717 : vector<8x8xf32>
    %719 = arith.mulf %710, %681 : vector<8x8xf32>
    %720 = arith.mulf %704, %712 : vector<8x8xf32>
    %721 = arith.addf %719, %720 : vector<8x8xf32>
    %722 = math.tanh %721 : vector<8x8xf32>
    %723 = arith.mulf %718, %722 : vector<8x8xf32>
    %724 = arith.index_cast %694 : i32 to index
    %c0_189 = arith.constant 0 : index
    %725 = vector.load %arg2[%724, %c0_189] : memref<128x1xf32, #tpu.memory_space<vmem>>, vector<8x1xf32>
    %cst_190 = arith.constant 0.000000e+00 : f32
    %726 = vector.broadcast %cst_190 : f32 to vector<8x1xf32>
    %727 = arith.cmpf one, %725, %726 : vector<8x1xf32>
    %728 = vector.shape_cast %727 : vector<8x1xi1> to vector<8x1xi1>
    %729 = vector.broadcast %728 : vector<8x1xi1> to vector<8x8xi1>
    %730 = arith.select %729, %723, %678 : vector<8x8xi1>, vector<8x8xf32>
    %731 = vector.shape_cast %727 : vector<8x1xi1> to vector<8x1xi1>
    %732 = vector.broadcast %731 : vector<8x1xi1> to vector<8x8xi1>
    %733 = arith.select %732, %721, %681 : vector<8x8xi1>, vector<8x8xf32>
    %cst_191 = arith.constant 0.000000e+00 : f32
    %734 = vector.shape_cast %727 : vector<8x1xi1> to vector<8x1xi1>
    %735 = vector.broadcast %734 : vector<8x1xi1> to vector<8x8xi1>
    %736 = vector.broadcast %cst_191 : f32 to vector<8x8xf32>
    %737 = arith.select %735, %730, %736 : vector<8x8xi1>, vector<8x8xf32>
    %c0_192 = arith.constant 0 : index
    %738 = arith.index_cast %694 : i32 to index
    %c0_193 = arith.constant 0 : index
    %739 = vector.load %arg6[%c0_192, %738, %c0_193] : memref<1x128x8xf32, #tpu.memory_space<vmem>>, vector<1x8x8xf32>
    %740 = vector.shape_cast %739 : vector<1x8x8xf32> to vector<8x8xf32>
    %741 = vector.shape_cast %737 : vector<8x8xf32> to vector<1x8x8xf32>
    tpu.vector_store %arg6[%c0_192, %738, %c0_193], %741 {strides = array<i32>} : memref<1x128x8xf32, #tpu.memory_space<vmem>>, vector<1x8x8xf32>,
    %c14_i32 = arith.constant 14 : i32
    %c0_i32_194 = arith.constant 0 : i32
    %742 = arith.cmpi eq, %arg0, %c0_i32_194 : i32
    %c15_i32_195 = arith.constant 15 : i32
    %743 = arith.subi %c15_i32_195, %c14_i32 : i32
    %744 = arith.select %742, %c14_i32, %743 : i32
    %c8_i32_196 = arith.constant 8 : i32
    %745 = arith.muli %744, %c8_i32_196 : i32
    %746 = tpu.assume_multiple %745, 8 : i32
    %747 = arith.index_cast %746 : i32 to index
    %c0_197 = arith.constant 0 : index
    %748 = vector.load %arg7[%747, %c0_197] : memref<128x32xf32, #tpu.memory_space<vmem>>, vector<8x32xf32>
    %cst_198 = arith.constant dense<0.000000e+00> : vector<8x32xf32>
    %749 = tpu.matmul %730, %12, %cst_198 {dimension_numbers = #tpu.dot_dimension_numbers<[1], [0], [0], [1], [0, 0, 1, 1], [], []>} : vector<8x8xf32>, vector<8x32xf32>, vector<8x32xf32> -> vector<8x32xf32>
    %750 = arith.addf %748, %749 : vector<8x32xf32>
    %751 = vector.extract_strided_slice %750 {offsets = [0, 0], sizes = [8, 8], strides = [1, 1]} : vector<8x32xf32> to vector<8x8xf32>
    %752 = arith.negf %751 : vector<8x8xf32>
    %753 = math.exp %752 : vector<8x8xf32>
    %cst_199 = arith.constant 1.000000e+00 : f32
    %754 = vector.broadcast %cst_199 : f32 to vector<8x8xf32>
    %755 = arith.addf %754, %753 : vector<8x8xf32>
    %756 = arith.divf %754, %755 : vector<8x8xf32>
    %757 = vector.extract_strided_slice %750 {offsets = [0, 8], sizes = [8, 8], strides = [1, 1]} : vector<8x32xf32> to vector<8x8xf32>
    %758 = arith.negf %757 : vector<8x8xf32>
    %759 = math.exp %758 : vector<8x8xf32>
    %cst_200 = arith.constant 1.000000e+00 : f32
    %760 = vector.broadcast %cst_200 : f32 to vector<8x8xf32>
    %761 = arith.addf %760, %759 : vector<8x8xf32>
    %762 = arith.divf %760, %761 : vector<8x8xf32>
    %763 = vector.extract_strided_slice %750 {offsets = [0, 16], sizes = [8, 8], strides = [1, 1]} : vector<8x32xf32> to vector<8x8xf32>
    %764 = math.tanh %763 : vector<8x8xf32>
    %765 = vector.extract_strided_slice %750 {offsets = [0, 24], sizes = [8, 8], strides = [1, 1]} : vector<8x32xf32> to vector<8x8xf32>
    %766 = arith.negf %765 : vector<8x8xf32>
    %767 = math.exp %766 : vector<8x8xf32>
    %cst_201 = arith.constant 1.000000e+00 : f32
    %768 = vector.broadcast %cst_201 : f32 to vector<8x8xf32>
    %769 = arith.addf %768, %767 : vector<8x8xf32>
    %770 = arith.divf %768, %769 : vector<8x8xf32>
    %771 = arith.mulf %762, %733 : vector<8x8xf32>
    %772 = arith.mulf %756, %764 : vector<8x8xf32>
    %773 = arith.addf %771, %772 : vector<8x8xf32>
    %774 = math.tanh %773 : vector<8x8xf32>
    %775 = arith.mulf %770, %774 : vector<8x8xf32>
    %776 = arith.index_cast %746 : i32 to index
    %c0_202 = arith.constant 0 : index
    %777 = vector.load %arg2[%776, %c0_202] : memref<128x1xf32, #tpu.memory_space<vmem>>, vector<8x1xf32>
    %cst_203 = arith.constant 0.000000e+00 : f32
    %778 = vector.broadcast %cst_203 : f32 to vector<8x1xf32>
    %779 = arith.cmpf one, %777, %778 : vector<8x1xf32>
    %780 = vector.shape_cast %779 : vector<8x1xi1> to vector<8x1xi1>
    %781 = vector.broadcast %780 : vector<8x1xi1> to vector<8x8xi1>
    %782 = arith.select %781, %775, %730 : vector<8x8xi1>, vector<8x8xf32>
    %783 = vector.shape_cast %779 : vector<8x1xi1> to vector<8x1xi1>
    %784 = vector.broadcast %783 : vector<8x1xi1> to vector<8x8xi1>
    %785 = arith.select %784, %773, %733 : vector<8x8xi1>, vector<8x8xf32>
    %cst_204 = arith.constant 0.000000e+00 : f32
    %786 = vector.shape_cast %779 : vector<8x1xi1> to vector<8x1xi1>
    %787 = vector.broadcast %786 : vector<8x1xi1> to vector<8x8xi1>
    %788 = vector.broadcast %cst_204 : f32 to vector<8x8xf32>
    %789 = arith.select %787, %782, %788 : vector<8x8xi1>, vector<8x8xf32>
    %c0_205 = arith.constant 0 : index
    %790 = arith.index_cast %746 : i32 to index
    %c0_206 = arith.constant 0 : index
    %791 = vector.load %arg6[%c0_205, %790, %c0_206] : memref<1x128x8xf32, #tpu.memory_space<vmem>>, vector<1x8x8xf32>
    %792 = vector.shape_cast %791 : vector<1x8x8xf32> to vector<8x8xf32>
    %793 = vector.shape_cast %789 : vector<8x8xf32> to vector<1x8x8xf32>
    tpu.vector_store %arg6[%c0_205, %790, %c0_206], %793 {strides = array<i32>} : memref<1x128x8xf32, #tpu.memory_space<vmem>>, vector<1x8x8xf32>,
    %c15_i32_207 = arith.constant 15 : i32
    %c0_i32_208 = arith.constant 0 : i32
    %794 = arith.cmpi eq, %arg0, %c0_i32_208 : i32
    %c15_i32_209 = arith.constant 15 : i32
    %795 = arith.subi %c15_i32_209, %c15_i32_207 : i32
    %796 = arith.select %794, %c15_i32_207, %795 : i32
    %c8_i32_210 = arith.constant 8 : i32
    %797 = arith.muli %796, %c8_i32_210 : i32
    %798 = tpu.assume_multiple %797, 8 : i32
    %799 = arith.index_cast %798 : i32 to index
    %c0_211 = arith.constant 0 : index
    %800 = vector.load %arg7[%799, %c0_211] : memref<128x32xf32, #tpu.memory_space<vmem>>, vector<8x32xf32>
    %cst_212 = arith.constant dense<0.000000e+00> : vector<8x32xf32>
    %801 = tpu.matmul %782, %12, %cst_212 {dimension_numbers = #tpu.dot_dimension_numbers<[1], [0], [0], [1], [0, 0, 1, 1], [], []>} : vector<8x8xf32>, vector<8x32xf32>, vector<8x32xf32> -> vector<8x32xf32>
    %802 = arith.addf %800, %801 : vector<8x32xf32>
    %803 = vector.extract_strided_slice %802 {offsets = [0, 0], sizes = [8, 8], strides = [1, 1]} : vector<8x32xf32> to vector<8x8xf32>
    %804 = arith.negf %803 : vector<8x8xf32>
    %805 = math.exp %804 : vector<8x8xf32>
    %cst_213 = arith.constant 1.000000e+00 : f32
    %806 = vector.broadcast %cst_213 : f32 to vector<8x8xf32>
    %807 = arith.addf %806, %805 : vector<8x8xf32>
    %808 = arith.divf %806, %807 : vector<8x8xf32>
    %809 = vector.extract_strided_slice %802 {offsets = [0, 8], sizes = [8, 8], strides = [1, 1]} : vector<8x32xf32> to vector<8x8xf32>
    %810 = arith.negf %809 : vector<8x8xf32>
    %811 = math.exp %810 : vector<8x8xf32>
    %cst_214 = arith.constant 1.000000e+00 : f32
    %812 = vector.broadcast %cst_214 : f32 to vector<8x8xf32>
    %813 = arith.addf %812, %811 : vector<8x8xf32>
    %814 = arith.divf %812, %813 : vector<8x8xf32>
    %815 = vector.extract_strided_slice %802 {offsets = [0, 16], sizes = [8, 8], strides = [1, 1]} : vector<8x32xf32> to vector<8x8xf32>
    %816 = math.tanh %815 : vector<8x8xf32>
    %817 = vector.extract_strided_slice %802 {offsets = [0, 24], sizes = [8, 8], strides = [1, 1]} : vector<8x32xf32> to vector<8x8xf32>
    %818 = arith.negf %817 : vector<8x8xf32>
    %819 = math.exp %818 : vector<8x8xf32>
    %cst_215 = arith.constant 1.000000e+00 : f32
    %820 = vector.broadcast %cst_215 : f32 to vector<8x8xf32>
    %821 = arith.addf %820, %819 : vector<8x8xf32>
    %822 = arith.divf %820, %821 : vector<8x8xf32>
    %823 = arith.mulf %814, %785 : vector<8x8xf32>
    %824 = arith.mulf %808, %816 : vector<8x8xf32>
    %825 = arith.addf %823, %824 : vector<8x8xf32>
    %826 = math.tanh %825 : vector<8x8xf32>
    %827 = arith.mulf %822, %826 : vector<8x8xf32>
    %828 = arith.index_cast %798 : i32 to index
    %c0_216 = arith.constant 0 : index
    %829 = vector.load %arg2[%828, %c0_216] : memref<128x1xf32, #tpu.memory_space<vmem>>, vector<8x1xf32>
    %cst_217 = arith.constant 0.000000e+00 : f32
    %830 = vector.broadcast %cst_217 : f32 to vector<8x1xf32>
    %831 = arith.cmpf one, %829, %830 : vector<8x1xf32>
    %832 = vector.shape_cast %831 : vector<8x1xi1> to vector<8x1xi1>
    %833 = vector.broadcast %832 : vector<8x1xi1> to vector<8x8xi1>
    %834 = arith.select %833, %827, %782 : vector<8x8xi1>, vector<8x8xf32>
    %835 = vector.shape_cast %831 : vector<8x1xi1> to vector<8x1xi1>
    %836 = vector.broadcast %835 : vector<8x1xi1> to vector<8x8xi1>
    %837 = arith.select %836, %825, %785 : vector<8x8xi1>, vector<8x8xf32>
    %cst_218 = arith.constant 0.000000e+00 : f32
    %838 = vector.shape_cast %831 : vector<8x1xi1> to vector<8x1xi1>
    %839 = vector.broadcast %838 : vector<8x1xi1> to vector<8x8xi1>
    %840 = vector.broadcast %cst_218 : f32 to vector<8x8xf32>
    %841 = arith.select %839, %834, %840 : vector<8x8xi1>, vector<8x8xf32>
    %c0_219 = arith.constant 0 : index
    %842 = arith.index_cast %798 : i32 to index
    %c0_220 = arith.constant 0 : index
    %843 = vector.load %arg6[%c0_219, %842, %c0_220] : memref<1x128x8xf32, #tpu.memory_space<vmem>>, vector<1x8x8xf32>
    %844 = vector.shape_cast %843 : vector<1x8x8xf32> to vector<8x8xf32>
    %845 = vector.shape_cast %841 : vector<8x8xf32> to vector<1x8x8xf32>
    tpu.vector_store %arg6[%c0_219, %842, %c0_220], %845 {strides = array<i32>} : memref<1x128x8xf32, #tpu.memory_space<vmem>>, vector<1x8x8xf32>,
    %c16_i32 = arith.constant 16 : i32
    return
  }
  func.func @transform_0(%arg0: i32) -> (i32, i32) {
    %c0_i32 = arith.constant 0 : i32
    %c0_i32_0 = arith.constant 0 : i32
    %c0_i32_1 = arith.constant 0 : i32
    return %c0_i32, %c0_i32_0 : i32, i32
  }
  func.func @transform_1(%arg0: i32) -> (i32, i32) {
    %c0_i32 = arith.constant 0 : i32
    %c0_i32_0 = arith.constant 0 : i32
    %c0_i32_1 = arith.constant 0 : i32
    return %c0_i32, %c0_i32_0 : i32, i32
  }
  func.func @transform_2(%arg0: i32) -> (i32, i32, i32) {
    %c0_i32 = arith.constant 0 : i32
    %c0_i32_0 = arith.constant 0 : i32
    %c0_i32_1 = arith.constant 0 : i32
    return %arg0, %c0_i32, %c0_i32_0 : i32, i32, i32
  }
  func.func @transform_3(%arg0: i32) -> (i32, i32, i32) {
    %c0_i32 = arith.constant 0 : i32
    %c0_i32_0 = arith.constant 0 : i32
    %c0_i32_1 = arith.constant 0 : i32
    return %arg0, %c0_i32, %c0_i32_0 : i32, i32, i32
  }
  func.func @transform_4(%arg0: i32) -> (i32, i32, i32) {
    %c0_i32 = arith.constant 0 : i32
    %c0_i32_0 = arith.constant 0 : i32
    %c0_i32_1 = arith.constant 0 : i32
    return %arg0, %c0_i32, %c0_i32_0 : i32, i32, i32
  }
  func.func @transform_5(%arg0: i32) -> (i32, i32, i32) {
    %c0_i32 = arith.constant 0 : i32
    %c0_i32_0 = arith.constant 0 : i32
    %c0_i32_1 = arith.constant 0 : i32
    return %arg0, %c0_i32, %c0_i32_0 : i32, i32, i32
  }
}

</mosaic_0001>

<llo_original>
// kernel: tpu_custom_call.1
$region0: #{tpu_custom_call.1}
  #allocation0 [shape = 'u32[]', space=smem, size = 0x4, offset = 0x4, fixed_abs, tag = 'smem constant byte address 0x4 - core index']
  #allocation1 [shape = 'u32[144,128]{1,0:T(1,128)}', space=vmem, size = 0x12000, scoped, tag = 'internal scratch']
  #allocation2 [shape = 'f32[128,32]{1,0:T(8,128)}', space=vmem, size = 0x10000, scoped, tag = 'scratch operand']
  %s0 = inlined_call_operand.vmem [shape: f32[128,24], index: 0, kind: input, shape index: {}]
  %s1 = inlined_call_operand.vmem [shape: f32[128,1], index: 1, kind: input, shape index: {}]
  %s2 = inlined_call_operand.vmem [shape: f32[2,24,32], index: 2, kind: input, shape index: {}]
  %s3 = inlined_call_operand.vmem [shape: f32[2,8,32], index: 3, kind: input, shape index: {}]
  %s4 = inlined_call_operand.vmem [shape: f32[2,1,32], index: 4, kind: input, shape index: {}]
  %s5 = inlined_call_operand.vmem [shape: f32[2,128,8], index: 5, kind: output, shape index: {}]
  %s6 = sld [smem:[#allocation0]]
  $region53: #{tpu_custom_call.1} parent=0
    _
  %s8 = ssub.s32 1, %s6
  %s9 = scalar_select 0, %s8, %s6
  loop: start=0, step=1, limit=4
  $region2: #{tpu_custom_call.1} parent=0 // loop_pre_header
    _
  $region3: #{tpu_custom_call.1} parent=0 // loop_header
    %s11 = sphi 0, %s15
    %p12 = scmp.ge.s32.totalorder %s11, 4
    %s19 = sphi 0, %s19
    %s21 = sphi 0, %s19
    %s22 = sphi 0, %s21
    %s36 = sphi 0, %s22
    %s40 = sphi 0, %s40
    %s42 = sphi 0, %s40
    %s43 = sphi 0, %s42
    %s57 = sphi 0, %s43
    %s63 = sphi 0, %s65
    %s66 = sphi 0, %s63
    %s67 = sphi 0, %s66
    %s83 = sphi 0, %s67
    %s89 = sphi 0, %s91
    %s92 = sphi 0, %s89
    %s93 = sphi 0, %s92
    %s109 = sphi 0, %s93
    %s115 = sphi 0, %s117
    %s118 = sphi 0, %s115
    %s119 = sphi 0, %s118
    %s135 = sphi 0, %s119
    %s141 = sphi 0, %s143
    %s144 = sphi 0, %s141
    %s145 = sphi 0, %s144
    %s161 = sphi 0, %s145
  $region4: #{tpu_custom_call.1} parent=0 // loop_header_branch
    %14 = sbr.rel (%p12) target = $region8
  $region5: #{tpu_custom_call.1} parent=0 // loop_body
    %s16 = ssub.s32 %s11, 1
    %s17 = ssub.s32 %s11, 2
    %s18 = sadd.s32 %s11, 1
    %s20 = sadd.s32 %s19, 1
    %p23 = scmp.eq.s32.totalorder %s11, 1
    %p24 = scmp.ne.s32.totalorder %s19, %s21
    %p25 = scmp.eq.s32.totalorder %s11, 0
    %p26 = por %p24, %p25
    %p27 = scmp.ne.s32.totalorder %s19, %s21
    %p28 = scmp.eq.s32.totalorder %s16, 1
    %p29 = por %p27, %p28
    %p30 = scmp.ne.s32.totalorder %s21, %s22
    %p31 = scmp.eq.s32.totalorder %s16, 0
    %p32 = por %p30, %p31
    %p33 = scmp.ne.s32.totalorder %s21, %s22
    %p34 = scmp.eq.s32.totalorder %s17, 1
    %p35 = por %p33, %p34
    %p37 = scmp.ne.s32.totalorder %s22, %s36
    %p38 = scmp.eq.s32.totalorder %s17, 0
    %p39 = por %p37, %p38
    %s41 = sadd.s32 %s40, 1
    %p44 = scmp.eq.s32.totalorder %s11, 1
    %p45 = scmp.ne.s32.totalorder %s40, %s42
    %p46 = scmp.eq.s32.totalorder %s11, 0
    %p47 = por %p45, %p46
    %p48 = scmp.ne.s32.totalorder %s40, %s42
    %p49 = scmp.eq.s32.totalorder %s16, 1
    %p50 = por %p48, %p49
    %p51 = scmp.ne.s32.totalorder %s42, %s43
    %p52 = scmp.eq.s32.totalorder %s16, 0
    %p53 = por %p51, %p52
    %p54 = scmp.ne.s32.totalorder %s42, %s43
    %p55 = scmp.eq.s32.totalorder %s17, 1
    %p56 = por %p54, %p55
    %p58 = scmp.ne.s32.totalorder %s43, %s57
    %p59 = scmp.eq.s32.totalorder %s17, 0
    %p60 = por %p58, %p59
    %s61 = ssub.s32 %s11, %s18
    %p62 = scmp.eq.s32.totalorder %s61, 0
    %s64 = sadd.s32 %s63, 1
    %s65 = scalar_select %p62, %s63, %s64
    %p68 = pneg %p62
    %p69 = scmp.eq.s32.totalorder %s11, 1
    %p70 = por %p68, %p69
    %p71 = scmp.ne.s32.totalorder %s63, %s66
    %p72 = scmp.eq.s32.totalorder %s11, 0
    %p73 = por %p71, %p72
    %p74 = scmp.ne.s32.totalorder %s63, %s66
    %p75 = scmp.eq.s32.totalorder %s16, 1
    %p76 = por %p74, %p75
    %p77 = scmp.ne.s32.totalorder %s66, %s67
    %p78 = scmp.eq.s32.totalorder %s16, 0
    %p79 = por %p77, %p78
    %p80 = scmp.ne.s32.totalorder %s66, %s67
    %p81 = scmp.eq.s32.totalorder %s17, 1
    %p82 = por %p80, %p81
    %p84 = scmp.ne.s32.totalorder %s67, %s83
    %p85 = scmp.eq.s32.totalorder %s17, 0
    %p86 = por %p84, %p85
    %s87 = ssub.s32 %s11, %s18
    %p88 = scmp.eq.s32.totalorder %s87, 0
    %s90 = sadd.s32 %s89, 1
    %s91 = scalar_select %p88, %s89, %s90
    %p94 = pneg %p88
    %p95 = scmp.eq.s32.totalorder %s11, 1
    %p96 = por %p94, %p95
    %p97 = scmp.ne.s32.totalorder %s89, %s92
    %p98 = scmp.eq.s32.totalorder %s11, 0
    %p99 = por %p97, %p98
    %p100 = scmp.ne.s32.totalorder %s89, %s92
    %p101 = scmp.eq.s32.totalorder %s16, 1
    %p102 = por %p100, %p101
    %p103 = scmp.ne.s32.totalorder %s92, %s93
    %p104 = scmp.eq.s32.totalorder %s16, 0
    %p105 = por %p103, %p104
    %p106 = scmp.ne.s32.totalorder %s92, %s93
    %p107 = scmp.eq.s32.totalorder %s17, 1
    %p108 = por %p106, %p107
    %p110 = scmp.ne.s32.totalorder %s93, %s109
    %p111 = scmp.eq.s32.totalorder %s17, 0
    %p112 = por %p110, %p111
    %s113 = ssub.s32 %s11, %s18
    %p114 = scmp.eq.s32.totalorder %s113, 0
    %s116 = sadd.s32 %s115, 1
    %s117 = scalar_select %p114, %s115, %s116
    %p120 = pneg %p114
    %p121 = scmp.eq.s32.totalorder %s11, 1
    %p122 = por %p120, %p121
    %p123 = scmp.ne.s32.totalorder %s115, %s118
    %p124 = scmp.eq.s32.totalorder %s11, 0
    %p125 = por %p123, %p124
    %p126 = scmp.ne.s32.totalorder %s115, %s118
    %p127 = scmp.eq.s32.totalorder %s16, 1
    %p128 = por %p126, %p127
    %p129 = scmp.ne.s32.totalorder %s118, %s119
    %p130 = scmp.eq.s32.totalorder %s16, 0
    %p131 = por %p129, %p130
    %p132 = scmp.ne.s32.totalorder %s118, %s119
    %p133 = scmp.eq.s32.totalorder %s17, 1
    %p134 = por %p132, %p133
    %p136 = scmp.ne.s32.totalorder %s119, %s135
    %p137 = scmp.eq.s32.totalorder %s17, 0
    %p138 = por %p136, %p137
    %s139 = ssub.s32 %s11, %s18
    %p140 = scmp.eq.s32.totalorder %s139, 0
    %s142 = sadd.s32 %s141, 1
    %s143 = scalar_select %p140, %s141, %s142
    %p146 = pneg %p140
    %p147 = scmp.eq.s32.totalorder %s11, 1
    %p148 = por %p146, %p147
    %p149 = scmp.ne.s32.totalorder %s141, %s144
    %p150 = scmp.eq.s32.totalorder %s11, 0
    %p151 = por %p149, %p150
    %p152 = scmp.ne.s32.totalorder %s141, %s144
    %p153 = scmp.eq.s32.totalorder %s16, 1
    %p154 = por %p152, %p153
    %p155 = scmp.ne.s32.totalorder %s144, %s145
    %p156 = scmp.eq.s32.totalorder %s16, 0
    %p157 = por %p155, %p156
    %p158 = scmp.ne.s32.totalorder %s144, %s145
    %p159 = scmp.eq.s32.totalorder %s17, 1
    %p160 = por %p158, %p159
    %p162 = scmp.ne.s32.totalorder %s145, %s161
    %p163 = scmp.eq.s32.totalorder %s17, 0
    %p164 = por %p162, %p163
    %p165 = scmp.le.s32.totalorder 1, %s11
    %p166 = scmp.lt.s32.totalorder %s11, 3
    %p167 = pnand %p165, %p166
    %p168 = pneg %p167
    // Predicated region
    $region9: #{tpu_custom_call.1} parent=5 // pred_check
      _
    $region10: #{tpu_custom_call.1} parent=5 // pred_check_branch
      %170 = sbr.rel (%p167) target = $region12
    $region11: #{tpu_custom_call.1} parent=5 // pred_region
      %s171 = ssub.s32 %s11, 1
      // Predicated region
      $region13: #{tpu_custom_call.1} parent=11 // pred_check
        %p172 = pneg %p32
      $region14: #{tpu_custom_call.1} parent=11 // pred_check_branch
        %174 = sbr.rel (%p172) target = $region16
      $region15: #{tpu_custom_call.1} parent=11 // pred_region
        _
      $region16: #{tpu_custom_call.1} parent=11 // pred_fallthru
        _
      // Predicated region
      $region17: #{tpu_custom_call.1} parent=11 // pred_check
        %p175 = pneg %p53
      $region18: #{tpu_custom_call.1} parent=11 // pred_check_branch
        %177 = sbr.rel (%p175) target = $region20
      $region19: #{tpu_custom_call.1} parent=11 // pred_region
        _
      $region20: #{tpu_custom_call.1} parent=11 // pred_fallthru
        _
    $region12: #{tpu_custom_call.1} parent=5 // pred_fallthru
      _
    %p178 = scmp.lt.s32.totalorder %s11, 2
    // Predicated region
    $region21: #{tpu_custom_call.1} parent=5 // pred_check
      %p179 = pneg %p178
    $region22: #{tpu_custom_call.1} parent=5 // pred_check_branch
      %181 = sbr.rel (%p179) target = $region24
    $region23: #{tpu_custom_call.1} parent=5 // pred_region
      // Predicated region
      $region25: #{tpu_custom_call.1} parent=23 // pred_check
        %p182 = pneg %p73
      $region26: #{tpu_custom_call.1} parent=23 // pred_check_branch
        %184 = sbr.rel (%p182) target = $region28
      $region27: #{tpu_custom_call.1} parent=23 // pred_region
        %p185 = scmp.lt.s32.totalorder %s11, 1
        %s186 = scalar_select %p185, %s11, 1
        %s187 = smul.addr %s186, 3
        %s188 = smul.addr %s187, 8
        %s189 = scalar_lea.vmem %s2, %s188
      $region28: #{tpu_custom_call.1} parent=23 // pred_fallthru
        _
      // Predicated region
      $region29: #{tpu_custom_call.1} parent=23 // pred_check
        %p190 = pneg %p99
      $region30: #{tpu_custom_call.1} parent=23 // pred_check_branch
        %192 = sbr.rel (%p190) target = $region32
      $region31: #{tpu_custom_call.1} parent=23 // pred_region
        %p193 = scmp.lt.s32.totalorder %s11, 1
        %s194 = scalar_select %p193, %s11, 1
        %s195 = smul.addr %s194, 8
        %s196 = scalar_lea.vmem %s3, %s195
      $region32: #{tpu_custom_call.1} parent=23 // pred_fallthru
        _
      // Predicated region
      $region33: #{tpu_custom_call.1} parent=23 // pred_check
        %p197 = pneg %p125
      $region34: #{tpu_custom_call.1} parent=23 // pred_check_branch
        %199 = sbr.rel (%p197) target = $region36
      $region35: #{tpu_custom_call.1} parent=23 // pred_region
        %p200 = scmp.lt.s32.totalorder %s11, 1
        %s201 = scalar_select %p200, %s11, 1
        %s202 = scalar_lea.vmem %s4, %s201
      $region36: #{tpu_custom_call.1} parent=23 // pred_fallthru
        _
    $region24: #{tpu_custom_call.1} parent=5 // pred_fallthru
      _
    %p203 = scmp.le.s32.totalorder 1, %s11
    %p204 = scmp.lt.s32.totalorder %s11, 3
    %p205 = pnand %p203, %p204
    %p206 = pneg %p205
    // Predicated region
    $region37: #{tpu_custom_call.1} parent=5 // pred_check
      _
    $region38: #{tpu_custom_call.1} parent=5 // pred_check_branch
      %208 = sbr.rel (%p205) target = $region40
    $region39: #{tpu_custom_call.1} parent=5 // pred_region
      %s209 = ssub.s32 %s11, 1
      %p210 = pneg %p32
      %p211 = pneg %p29
      %p212 = pneg %p53
      %p213 = pneg %p50
      %p214 = scmp.lt.s32.totalorder %s16, 1
      %s215 = scalar_select %p214, %s16, 1
      %s216 = smul.addr %s215, 3
      %s217 = smul.addr %s216, 8
      %s218 = scalar_lea.vmem %s2, %s217
      %p219 = pneg %p79
      %p220 = pneg %p76
      %p221 = scmp.lt.s32.totalorder %s16, 1
      %s222 = scalar_select %p221, %s16, 1
      %s223 = smul.addr %s222, 8
      %s224 = scalar_lea.vmem %s3, %s223
      %p225 = pneg %p105
      %p226 = pneg %p102
      %p227 = scmp.lt.s32.totalorder %s16, 1
      %s228 = scalar_select %p227, %s16, 1
      %s229 = scalar_lea.vmem %s4, %s228
      %p230 = pneg %p131
      %p231 = pneg %p128
      %p232 = pneg %p157
      %p233 = pneg %p154
      %p234 = scmp.lt.s32.totalorder %s16, 1
      %s235 = scalar_select %p234, %s16, 1
      %s236 = smul.addr %s235, 16
      %s237 = smul.addr %s236, 8
      %s238 = scalar_lea.vmem %s5, %s237
      %p239 = scmp.lt.s32.totalorder %s16, 1
      %s240 = scalar_select %p239, %s16, 1
      %s241 = smul.addr %s240, 3
      %s242 = smul.addr %s241, 8
      %s243 = scalar_lea.vmem %s2, %s242
      %p244 = scmp.lt.s32.totalorder %s16, 1
      %s245 = scalar_select %p244, %s16, 1
      %s246 = smul.addr %s245, 8
      %s247 = scalar_lea.vmem %s3, %s246
      %p248 = scmp.lt.s32.totalorder %s16, 1
      %s249 = scalar_select %p248, %s16, 1
      %s250 = scalar_lea.vmem %s4, %s249
      %p251 = scmp.lt.s32.totalorder %s16, 1
      %s252 = scalar_select %p251, %s16, 1
      %s253 = smul.addr %s252, 16
      %s254 = smul.addr %s253, 8
      %s255 = scalar_lea.vmem %s5, %s254
      %v257 = vld [vmem:[%s0] sm:$0xff]
      %v258 = vld [vmem:[%s0 + $0x8] sm:$0xff]
      %v259 = vld [vmem:[%s0 + $0x10] sm:$0xff]
      %v260 = vld [vmem:[%s0 + $0x18] sm:$0xff]
      %v261 = vld [vmem:[%s0 + $0x20] sm:$0xff]
      %v262 = vld [vmem:[%s0 + $0x28] sm:$0xff]
      %v263 = vld [vmem:[%s0 + $0x30] sm:$0xff]
      %v264 = vld [vmem:[%s0 + $0x38] sm:$0xff]
      %v265 = vld [vmem:[%s0 + $0x40] sm:$0xff]
      %v266 = vld [vmem:[%s0 + $0x48] sm:$0xff]
      %v267 = vld [vmem:[%s0 + $0x50] sm:$0xff]
      %v268 = vld [vmem:[%s0 + $0x58] sm:$0xff]
      %v269 = vld [vmem:[%s0 + $0x60] sm:$0xff]
      %v270 = vld [vmem:[%s0 + $0x68] sm:$0xff]
      %v271 = vld [vmem:[%s0 + $0x70] sm:$0xff]
      %v272 = vld [vmem:[%s0 + $0x78] sm:$0xff]
      %v273 = vpack.c.bf16 %v258, %v257
      %v274 = vpack.c.bf16 %v260, %v259
      %v275 = vpack.c.bf16 %v262, %v261
      %v276 = vpack.c.bf16 %v264, %v263
      %v277 = vpack.c.bf16 %v266, %v265
      %v278 = vpack.c.bf16 %v268, %v267
      %v279 = vpack.c.bf16 %v270, %v269
      %v280 = vpack.c.bf16 %v272, %v271
      %v281 = vld [vmem:[%s243] sm:$0xff]
      %v282 = vld [vmem:[%s243 + $0x8] sm:$0xff]
      %v283 = vld [vmem:[%s243 + $0x10] sm:$0xff]
      %v284 = vpack.c.bf16 %v282, %v281
      %v285 = vpack.c.bf16 %v283, %v283
      %v286 = vld [vmem:[%s250] sm:$0x1]
      %v288 = vlaneseq
      %v289 = vshrl.u32 %v288, 7
      %v290 = vsub.s32 0, %v289
      %v291 = vrot.slane %v286, %v290
      %vm293 = vcmask 195584
      %v295 = vsel %vm293, %v273, 0
      %v298 = vsel %vm293, %v274, 0
      %v301 = vsel %vm293, %v275, 0
      %v304 = vsel %vm293, %v276, 0
      %v307 = vsel %vm293, %v277, 0
      %v310 = vsel %vm293, %v278, 0
      %v313 = vsel %vm293, %v279, 0
      %v316 = vsel %vm293, %v280, 0
      %vm318 = vcmask 1043456
      %v320 = vsel %vm318, %v285, 0
      %322 = vmatprep.subr.bf16.mxu0 0
      %323 = vmatpush1.bf16.msra.mxu0 %v284
      %324 = vmatprep.subr.bf16.mxu0 0
      %325 = vmatpush1.bf16.msra.mxu0 %v320
      %326 = vmatprep.subr.bf16.mxu0 0
      %327 = vmatpush1.bf16.msra.mxu0 0
      %328 = vmatprep.subr.bf16.mxu0 0
      %329 = vmatpush1.bf16.msra.mxu0 0
      %330 = vmatprep.subr.bf16.mxu0 0
      %331 = vmatpush1.bf16.msra.mxu0 0
      %332 = vmatprep.subr.bf16.mxu0 0
      %333 = vmatpush1.bf16.msra.mxu0 0
      %334 = vmatprep.subr.bf16.mxu0 0
      %335 = vmatpush1.bf16.msra.mxu0 0
      %336 = vmatprep.subr.bf16.mxu0 0
      %337 = vmatpush1.bf16.msra.mxu0 0
      %338 = vmatprep.subr.bf16.mxu0 0
      %339 = vmatpush1.bf16.msra.mxu0 0
      %340 = vmatprep.subr.bf16.mxu0 0
      %341 = vmatpush1.bf16.msra.mxu0 0
      %342 = vmatprep.subr.bf16.mxu0 0
      %343 = vmatpush1.bf16.msra.mxu0 0
      %344 = vmatprep.subr.bf16.mxu0 0
      %345 = vmatpush1.bf16.msra.mxu0 0
      %346 = vmatprep.subr.bf16.mxu0 0
      %347 = vmatpush1.bf16.msra.mxu0 0
      %348 = vmatprep.subr.bf16.mxu0 0
      %349 = vmatpush1.bf16.msra.mxu0 0
      %350 = vmatprep.subr.bf16.mxu0 0
      %351 = vmatpush1.bf16.msra.mxu0 0
      %352 = vmatprep.subr.bf16.mxu0 0
      %353 = vmatpush1.bf16.msra.mxu0 0
      %354 = vmatprep.mubr.bf16.mxu0 0
      %355 = vmatmul.mubr.bf16.gmra.mrb[0].mxu0 %v295
      %v356 = vpop.f32.mrb[0].mxu0
      %v357 = vadd.f32 %v291, %v356
      %v358 = vpop.f32.mrb[0].mxu0
      %v359 = vpop.f32.mrb[0].mxu0
      %v360 = vadd.f32 %v291, %v359
      %v361 = vpop.f32.mrb[0].mxu0
      %362 = vmatprep.mubr.bf16.mxu0 0
      %363 = vmatmul.mubr.bf16.gmra.mrb[0].mxu0 %v298
      %v364 = vpop.f32.mrb[0].mxu0
      %v365 = vadd.f32 %v291, %v364
      %v366 = vpop.f32.mrb[0].mxu0
      %v367 = vpop.f32.mrb[0].mxu0
      %v368 = vadd.f32 %v291, %v367
      %v369 = vpop.f32.mrb[0].mxu0
      %370 = vmatprep.mubr.bf16.mxu0 0
      %371 = vmatmul.mubr.bf16.gmra.mrb[0].mxu0 %v301
      %v372 = vpop.f32.mrb[0].mxu0
      %v373 = vadd.f32 %v291, %v372
      %v374 = vpop.f32.mrb[0].mxu0
      %v375 = vpop.f32.mrb[0].mxu0
      %v376 = vadd.f32 %v291, %v375
      %v377 = vpop.f32.mrb[0].mxu0
      %378 = vmatprep.mubr.bf16.mxu0 0
      %379 = vmatmul.mubr.bf16.gmra.mrb[0].mxu0 %v304
      %v380 = vpop.f32.mrb[0].mxu0
      %v381 = vadd.f32 %v291, %v380
      %v382 = vpop.f32.mrb[0].mxu0
      %v383 = vpop.f32.mrb[0].mxu0
      %v384 = vadd.f32 %v291, %v383
      %v385 = vpop.f32.mrb[0].mxu0
      %386 = vmatprep.mubr.bf16.mxu0 0
      %387 = vmatmul.mubr.bf16.gmra.mrb[0].mxu0 %v307
      %v388 = vpop.f32.mrb[0].mxu0
      %v389 = vadd.f32 %v291, %v388
      %v390 = vpop.f32.mrb[0].mxu0
      %v391 = vpop.f32.mrb[0].mxu0
      %v392 = vadd.f32 %v291, %v391
      %v393 = vpop.f32.mrb[0].mxu0
      %394 = vmatprep.mubr.bf16.mxu0 0
      %395 = vmatmul.mubr.bf16.gmra.mrb[0].mxu0 %v310
      %v396 = vpop.f32.mrb[0].mxu0
      %v397 = vadd.f32 %v291, %v396
      %v398 = vpop.f32.mrb[0].mxu0
      %v399 = vpop.f32.mrb[0].mxu0
      %v400 = vadd.f32 %v291, %v399
      %v401 = vpop.f32.mrb[0].mxu0
      %402 = vmatprep.mubr.bf16.mxu0 0
      %403 = vmatmul.mubr.bf16.gmra.mrb[0].mxu0 %v313
      %v404 = vpop.f32.mrb[0].mxu0
      %v405 = vadd.f32 %v291, %v404
      %v406 = vpop.f32.mrb[0].mxu0
      %v407 = vpop.f32.mrb[0].mxu0
      %v408 = vadd.f32 %v291, %v407
      %v409 = vpop.f32.mrb[0].mxu0
      %410 = vmatprep.mubr.bf16.mxu0 0
      %411 = vmatmul.mubr.bf16.gmra.mrb[0].mxu0 %v316
      %v412 = vpop.f32.mrb[0].mxu0
      %v413 = vadd.f32 %v291, %v412
      %v414 = vpop.f32.mrb[0].mxu0
      %v415 = vpop.f32.mrb[0].mxu0
      %v416 = vadd.f32 %v291, %v415
      %v417 = vpop.f32.mrb[0].mxu0
      %418 = vdwg.mxu0
      %vm419 = vcmask 261120
      %420 = vst.msk [vmem:[#allocation2] sm:$0xff] %vm419, %v357
      %421 = vst.msk [vmem:[#allocation2 + $0x8] sm:$0xff] %vm419, %v360
      %422 = vst.msk [vmem:[#allocation2 + $0x10] sm:$0xff] %vm419, %v365
      %423 = vst.msk [vmem:[#allocation2 + $0x18] sm:$0xff] %vm419, %v368
      %424 = vst.msk [vmem:[#allocation2 + $0x20] sm:$0xff] %vm419, %v373
      %425 = vst.msk [vmem:[#allocation2 + $0x28] sm:$0xff] %vm419, %v376
      %426 = vst.msk [vmem:[#allocation2 + $0x30] sm:$0xff] %vm419, %v381
      %427 = vst.msk [vmem:[#allocation2 + $0x38] sm:$0xff] %vm419, %v384
      %428 = vst.msk [vmem:[#allocation2 + $0x40] sm:$0xff] %vm419, %v389
      %429 = vst.msk [vmem:[#allocation2 + $0x48] sm:$0xff] %vm419, %v392
      %430 = vst.msk [vmem:[#allocation2 + $0x50] sm:$0xff] %vm419, %v397
      %431 = vst.msk [vmem:[#allocation2 + $0x58] sm:$0xff] %vm419, %v400
      %432 = vst.msk [vmem:[#allocation2 + $0x60] sm:$0xff] %vm419, %v405
      %433 = vst.msk [vmem:[#allocation2 + $0x68] sm:$0xff] %vm419, %v408
      %434 = vst.msk [vmem:[#allocation2 + $0x70] sm:$0xff] %vm419, %v413
      %435 = vst.msk [vmem:[#allocation2 + $0x78] sm:$0xff] %vm419, %v416
      %v436 = vld [vmem:[%s247] sm:$0xff]
      %p437 = scmp.eq.s32.totalorder %s16, 0
      %s438 = scalar_select %p437, 0, 15
      %s439 = smul.u32 %s438, 8
      %s440 = scalar_lea.vmem [#allocation2], %s439
      %v441 = vld [vmem:[%s440] sm:$0xff]
      %vm442 = vcmask 64512
      %v444 = vsel %vm442, 0.0, 0
      %446 = vmatprep.subr.mxu0 0.0
      %447 = vmatpush1.msra.mxu0 %v436
      %448 = vmatprep.subr.mxu0 0.0
      %449 = vmatpush1.msra.mxu0 0.0
      %450 = vmatprep.subr.mxu0 0.0
      %451 = vmatpush1.msra.mxu0 0.0
      %452 = vmatprep.subr.mxu0 0.0
      %453 = vmatpush1.msra.mxu0 0.0
      %454 = vmatprep.subr.mxu0 0.0
      %455 = vmatpush1.msra.mxu0 0.0
      %456 = vmatprep.subr.mxu0 0.0
      %457 = vmatpush1.msra.mxu0 0.0
      %458 = vmatprep.subr.mxu0 0.0
      %459 = vmatpush1.msra.mxu0 0.0
      %460 = vmatprep.subr.mxu0 0.0
      %461 = vmatpush1.msra.mxu0 0.0
      %462 = vmatprep.subr.mxu0 0.0
      %463 = vmatpush1.msra.mxu0 0.0
      %464 = vmatprep.subr.mxu0 0.0
      %465 = vmatpush1.msra.mxu0 0.0
      %466 = vmatprep.subr.mxu0 0.0
      %467 = vmatpush1.msra.mxu0 0.0
      %468 = vmatprep.subr.mxu0 0.0
      %469 = vmatpush1.msra.mxu0 0.0
      %470 = vmatprep.subr.mxu0 0.0
      %471 = vmatpush1.msra.mxu0 0.0
      %472 = vmatprep.subr.mxu0 0.0
      %473 = vmatpush1.msra.mxu0 0.0
      %474 = vmatprep.subr.mxu0 0.0
      %475 = vmatpush1.msra.mxu0 0.0
      %476 = vmatprep.subr.mxu0 0.0
      %477 = vmatpush1.msra.mxu0 0.0
      %478 = vmatprep.subr.mxu0 0.0
      %479 = vmatpush1.msra.mxu0 0.0
      %480 = vmatprep.subr.mxu0 0.0
      %481 = vmatpush1.msra.mxu0 0.0
      %482 = vmatprep.subr.mxu0 0.0
      %483 = vmatpush1.msra.mxu0 0.0
      %484 = vmatprep.subr.mxu0 0.0
      %485 = vmatpush1.msra.mxu0 0.0
      %486 = vmatprep.subr.mxu0 0.0
      %487 = vmatpush1.msra.mxu0 0.0
      %488 = vmatprep.subr.mxu0 0.0
      %489 = vmatpush1.msra.mxu0 0.0
      %490 = vmatprep.subr.mxu0 0.0
      %491 = vmatpush1.msra.mxu0 0.0
      %492 = vmatprep.subr.mxu0 0.0
      %493 = vmatpush1.msra.mxu0 0.0
      %494 = vmatprep.subr.mxu0 0.0
      %495 = vmatpush1.msra.mxu0 0.0
      %496 = vmatprep.subr.mxu0 0.0
      %497 = vmatpush1.msra.mxu0 0.0
      %498 = vmatprep.subr.mxu0 0.0
      %499 = vmatpush1.msra.mxu0 0.0
      %500 = vmatprep.subr.mxu0 0.0
      %501 = vmatpush1.msra.mxu0 0.0
      %502 = vmatprep.subr.mxu0 0.0
      %503 = vmatpush1.msra.mxu0 0.0
      %504 = vmatprep.subr.mxu0 0.0
      %505 = vmatpush1.msra.mxu0 0.0
      %506 = vmatprep.subr.mxu0 0.0
      %507 = vmatpush1.msra.mxu0 0.0
      %508 = vmatprep.subr.mxu0 0.0
      %509 = vmatpush1.msra.mxu0 0.0
      %510 = vmatprep.mubr.f32.mxu0 0.0
      %511 = vmatmul.mubr.f32.gmra.mrb[0].mxu0 %v444
      %v512 = vpop.f32.mrb[0].mxu0
      %v513 = vadd.f32 0.0, %v512
      %v514 = vpop.f32.mrb[0].mxu0
      %515 = vdwg.mxu0
      %v516 = vadd.f32 %v441, %v513
      %v517 = vxor.u32 %v516, 2147483648
      %v518 = vmul.f32 %v517, 1.442695
      %v519 = vpow.pop %v518
      %v520 = vadd.f32 %v519, 1.0
      %v521 = vrcp.pop %v520
      %v522 = vmul.f32 1.0, %v521
      %v523 = vtanh.pop %v516
      %v524 = vmul.f32 %v522, 0.0
      %526 = vrot.lane.b32.xlu0 %v523, 112
      %v527 = vpop.permute.xlu0 %526
      %v529 = vmul.f32 %v522, %v527
      %531 = vrot.lane.b32.xlu0 %v529, 8
      %v532 = vpop.permute.xlu0 %531
      %v534 = vadd.f32 %v524, %v532
      %v535 = vtanh.pop %v534
      %537 = vrot.lane.b32.xlu0 %v535, 16
      %v538 = vpop.permute.xlu0 %537
      %v540 = vmul.f32 %v522, %v538
      %s541 = scalar_lea.vmem %s1, %s439
      %v542 = vld [vmem:[%s541] sm:$0xff]
      %vm543 = vcmp.ne.f32.partialorder %v542, 0.0
      %v544 = vsel %vm543, 1, 0
      %545 = vset.pattern.permute.xlu0 0
      %546 = vperm.xlu0 %545, %v544
      %v547 = vpop.permute.xlu0 %546
      %vm548 = vcmp.eq.s32.totalorder %v547, 1
      %v549 = vsel %vm548, %v540, 0.0
      %v550 = vsel %vm548, %v534, 0.0
      %552 = vrot.lane.b32.xlu0 %v549, 104
      %v553 = vpop.permute.xlu0 %552
      %s555 = scalar_lea.vmem %s255, %s439
      %556 = vst.msk [vmem:[%s555] sm:$0xff] %vm442, %v553
      %s557 = scalar_select %p437, 1, 14
      %s558 = smul.u32 %s557, 8
      %s559 = scalar_lea.vmem [#allocation2], %s558
      %v560 = vld [vmem:[%s559] sm:$0xff]
      %v561 = vsel %vm442, %v553, 0
      %563 = vmatprep.subr.mxu0 0.0
      %564 = vmatpush1.msra.mxu0 %v436
      %565 = vmatprep.subr.mxu0 0.0
      %566 = vmatpush1.msra.mxu0 0.0
      %567 = vmatprep.subr.mxu0 0.0
      %568 = vmatpush1.msra.mxu0 0.0
      %569 = vmatprep.subr.mxu0 0.0
      %570 = vmatpush1.msra.mxu0 0.0
      %571 = vmatprep.subr.mxu0 0.0
      %572 = vmatpush1.msra.mxu0 0.0
      %573 = vmatprep.subr.mxu0 0.0
      %574 = vmatpush1.msra.mxu0 0.0
      %575 = vmatprep.subr.mxu0 0.0
      %576 = vmatpush1.msra.mxu0 0.0
      %577 = vmatprep.subr.mxu0 0.0
      %578 = vmatpush1.msra.mxu0 0.0
      %579 = vmatprep.subr.mxu0 0.0
      %580 = vmatpush1.msra.mxu0 0.0
      %581 = vmatprep.subr.mxu0 0.0
      %582 = vmatpush1.msra.mxu0 0.0
      %583 = vmatprep.subr.mxu0 0.0
      %584 = vmatpush1.msra.mxu0 0.0
      %585 = vmatprep.subr.mxu0 0.0
      %586 = vmatpush1.msra.mxu0 0.0
      %587 = vmatprep.subr.mxu0 0.0
      %588 = vmatpush1.msra.mxu0 0.0
      %589 = vmatprep.subr.mxu0 0.0
      %590 = vmatpush1.msra.mxu0 0.0
      %591 = vmatprep.subr.mxu0 0.0
      %592 = vmatpush1.msra.mxu0 0.0
      %593 = vmatprep.subr.mxu0 0.0
      %594 = vmatpush1.msra.mxu0 0.0
      %595 = vmatprep.subr.mxu0 0.0
      %596 = vmatpush1.msra.mxu0 0.0
      %597 = vmatprep.subr.mxu0 0.0
      %598 = vmatpush1.msra.mxu0 0.0
      %599 = vmatprep.subr.mxu0 0.0
      %600 = vmatpush1.msra.mxu0 0.0
      %601 = vmatprep.subr.mxu0 0.0
      %602 = vmatpush1.msra.mxu0 0.0
      %603 = vmatprep.subr.mxu0 0.0
      %604 = vmatpush1.msra.mxu0 0.0
      %605 = vmatprep.subr.mxu0 0.0
      %606 = vmatpush1.msra.mxu0 0.0
      %607 = vmatprep.subr.mxu0 0.0
      %608 = vmatpush1.msra.mxu0 0.0
      %609 = vmatprep.subr.mxu0 0.0
      %610 = vmatpush1.msra.mxu0 0.0
      %611 = vmatprep.subr.mxu0 0.0
      %612 = vmatpush1.msra.mxu0 0.0
      %613 = vmatprep.subr.mxu0 0.0
      %614 = vmatpush1.msra.mxu0 0.0
      %615 = vmatprep.subr.mxu0 0.0
      %616 = vmatpush1.msra.mxu0 0.0
      %617 = vmatprep.subr.mxu0 0.0
      %618 = vmatpush1.msra.mxu0 0.0
      %619 = vmatprep.subr.mxu0 0.0
      %620 = vmatpush1.msra.mxu0 0.0
      %621 = vmatprep.subr.mxu0 0.0
      %622 = vmatpush1.msra.mxu0 0.0
      %623 = vmatprep.subr.mxu0 0.0
      %624 = vmatpush1.msra.mxu0 0.0
      %625 = vmatprep.subr.mxu0 0.0
      %626 = vmatpush1.msra.mxu0 0.0
      %627 = vmatprep.mubr.f32.mxu0 0.0
      %628 = vmatmul.mubr.f32.gmra.mrb[0].mxu0 %v561
      %v629 = vpop.f32.mrb[0].mxu0
      %v630 = vadd.f32 0.0, %v629
      %v631 = vpop.f32.mrb[0].mxu0
      %632 = vdwg.mxu0
      %v633 = vadd.f32 %v560, %v630
      %v634 = vxor.u32 %v633, 2147483648
      %v635 = vmul.f32 %v634, 1.442695
      %v636 = vpow.pop %v635
      %v637 = vadd.f32 %v636, 1.0
      %v638 = vrcp.pop %v637
      %v639 = vmul.f32 1.0, %v638
      %v640 = vtanh.pop %v633
      %v641 = vmul.f32 %v639, %v550
      %643 = vrot.lane.b32.xlu0 %v640, 112
      %v644 = vpop.permute.xlu0 %643
      %v646 = vmul.f32 %v639, %v644
      %648 = vrot.lane.b32.xlu0 %v646, 8
      %v649 = vpop.permute.xlu0 %648
      %v651 = vadd.f32 %v641, %v649
      %v652 = vtanh.pop %v651
      %654 = vrot.lane.b32.xlu0 %v652, 16
      %v655 = vpop.permute.xlu0 %654
      %v657 = vmul.f32 %v639, %v655
      %s658 = scalar_lea.vmem %s1, %s558
      %v659 = vld [vmem:[%s658] sm:$0xff]
      %vm660 = vcmp.ne.f32.partialorder %v659, 0.0
      %v661 = vsel %vm660, 1, 0
      %662 = vset.pattern.permute.xlu0 0
      %663 = vperm.xlu0 %662, %v661
      %v664 = vpop.permute.xlu0 %663
      %vm665 = vcmp.eq.s32.totalorder %v664, 1
      %v666 = vsel %vm665, %v657, %v549
      %v667 = vsel %vm665, %v651, %v550
      %v668 = vsel %vm665, %v657, 0.0
      %670 = vrot.lane.b32.xlu0 %v668, 104
      %v671 = vpop.permute.xlu0 %670
      %s673 = scalar_lea.vmem %s255, %s558
      %674 = vst.msk [vmem:[%s673] sm:$0xff] %vm442, %v671
      %s675 = scalar_select %p437, 2, 13
      %s676 = smul.u32 %s675, 8
      %s677 = scalar_lea.vmem [#allocation2], %s676
      %v678 = vld [vmem:[%s677] sm:$0xff]
      %680 = vrot.lane.b32.xlu0 %v666, 104
      %v681 = vpop.permute.xlu0 %680
      %v682 = vsel %vm442, %v681, 0
      %684 = vmatprep.subr.mxu0 0.0
      %685 = vmatpush1.msra.mxu0 %v436
      %686 = vmatprep.subr.mxu0 0.0
      %687 = vmatpush1.msra.mxu0 0.0
      %688 = vmatprep.subr.mxu0 0.0
      %689 = vmatpush1.msra.mxu0 0.0
      %690 = vmatprep.subr.mxu0 0.0
      %691 = vmatpush1.msra.mxu0 0.0
      %692 = vmatprep.subr.mxu0 0.0
      %693 = vmatpush1.msra.mxu0 0.0
      %694 = vmatprep.subr.mxu0 0.0
      %695 = vmatpush1.msra.mxu0 0.0
      %696 = vmatprep.subr.mxu0 0.0
      %697 = vmatpush1.msra.mxu0 0.0
      %698 = vmatprep.subr.mxu0 0.0
      %699 = vmatpush1.msra.mxu0 0.0
      %700 = vmatprep.subr.mxu0 0.0
      %701 = vmatpush1.msra.mxu0 0.0
      %702 = vmatprep.subr.mxu0 0.0
      %703 = vmatpush1.msra.mxu0 0.0
      %704 = vmatprep.subr.mxu0 0.0
      %705 = vmatpush1.msra.mxu0 0.0
      %706 = vmatprep.subr.mxu0 0.0
      %707 = vmatpush1.msra.mxu0 0.0
      %708 = vmatprep.subr.mxu0 0.0
      %709 = vmatpush1.msra.mxu0 0.0
      %710 = vmatprep.subr.mxu0 0.0
      %711 = vmatpush1.msra.mxu0 0.0
      %712 = vmatprep.subr.mxu0 0.0
      %713 = vmatpush1.msra.mxu0 0.0
      %714 = vmatprep.subr.mxu0 0.0
      %715 = vmatpush1.msra.mxu0 0.0
      %716 = vmatprep.subr.mxu0 0.0
      %717 = vmatpush1.msra.mxu0 0.0
      %718 = vmatprep.subr.mxu0 0.0
      %719 = vmatpush1.msra.mxu0 0.0
      %720 = vmatprep.subr.mxu0 0.0
      %721 = vmatpush1.msra.mxu0 0.0
      %722 = vmatprep.subr.mxu0 0.0
      %723 = vmatpush1.msra.mxu0 0.0
      %724 = vmatprep.subr.mxu0 0.0
      %725 = vmatpush1.msra.mxu0 0.0
      %726 = vmatprep.subr.mxu0 0.0
      %727 = vmatpush1.msra.mxu0 0.0
      %728 = vmatprep.subr.mxu0 0.0
      %729 = vmatpush1.msra.mxu0 0.0
      %730 = vmatprep.subr.mxu0 0.0
      %731 = vmatpush1.msra.mxu0 0.0
      %732 = vmatprep.subr.mxu0 0.0
      %733 = vmatpush1.msra.mxu0 0.0
      %734 = vmatprep.subr.mxu0 0.0
      %735 = vmatpush1.msra.mxu0 0.0
      %736 = vmatprep.subr.mxu0 0.0
      %737 = vmatpush1.msra.mxu0 0.0
      %738 = vmatprep.subr.mxu0 0.0
      %739 = vmatpush1.msra.mxu0 0.0
      %740 = vmatprep.subr.mxu0 0.0
      %741 = vmatpush1.msra.mxu0 0.0
      %742 = vmatprep.subr.mxu0 0.0
      %743 = vmatpush1.msra.mxu0 0.0
      %744 = vmatprep.subr.mxu0 0.0
      %745 = vmatpush1.msra.mxu0 0.0
      %746 = vmatprep.subr.mxu0 0.0
      %747 = vmatpush1.msra.mxu0 0.0
      %748 = vmatprep.mubr.f32.mxu0 0.0
      %749 = vmatmul.mubr.f32.gmra.mrb[0].mxu0 %v682
      %v750 = vpop.f32.mrb[0].mxu0
      %v751 = vadd.f32 0.0, %v750
      %v752 = vpop.f32.mrb[0].mxu0
      %753 = vdwg.mxu0
      %v754 = vadd.f32 %v678, %v751
      %v755 = vxor.u32 %v754, 2147483648
      %v756 = vmul.f32 %v755, 1.442695
      %v757 = vpow.pop %v756
      %v758 = vadd.f32 %v757, 1.0
      %v759 = vrcp.pop %v758
      %v760 = vmul.f32 1.0, %v759
      %v761 = vtanh.pop %v754
      %v762 = vmul.f32 %v760, %v667
      %764 = vrot.lane.b32.xlu0 %v761, 112
      %v765 = vpop.permute.xlu0 %764
      %v767 = vmul.f32 %v760, %v765
      %769 = vrot.lane.b32.xlu0 %v767, 8
      %v770 = vpop.permute.xlu0 %769
      %v772 = vadd.f32 %v762, %v770
      %v773 = vtanh.pop %v772
      %775 = vrot.lane.b32.xlu0 %v773, 16
      %v776 = vpop.permute.xlu0 %775
      %v778 = vmul.f32 %v760, %v776
      %s779 = scalar_lea.vmem %s1, %s676
      %v780 = vld [vmem:[%s779] sm:$0xff]
      %vm781 = vcmp.ne.f32.partialorder %v780, 0.0
      %v782 = vsel %vm781, 1, 0
      %783 = vset.pattern.permute.xlu0 0
      %784 = vperm.xlu0 %783, %v782
      %v785 = vpop.permute.xlu0 %784
      %vm786 = vcmp.eq.s32.totalorder %v785, 1
      %v787 = vsel %vm786, %v778, %v666
      %v788 = vsel %vm786, %v772, %v667
      %v789 = vsel %vm786, %v778, 0.0
      %791 = vrot.lane.b32.xlu0 %v789, 104
      %v792 = vpop.permute.xlu0 %791
      %s794 = scalar_lea.vmem %s255, %s676
      %795 = vst.msk [vmem:[%s794] sm:$0xff] %vm442, %v792
      %s796 = scalar_select %p437, 3, 12
      %s797 = smul.u32 %s796, 8
      %s798 = scalar_lea.vmem [#allocation2], %s797
      %v799 = vld [vmem:[%s798] sm:$0xff]
      %801 = vrot.lane.b32.xlu0 %v787, 104
      %v802 = vpop.permute.xlu0 %801
      %v803 = vsel %vm442, %v802, 0
      %805 = vmatprep.subr.mxu0 0.0
      %806 = vmatpush1.msra.mxu0 %v436
      %807 = vmatprep.subr.mxu0 0.0
      %808 = vmatpush1.msra.mxu0 0.0
      %809 = vmatprep.subr.mxu0 0.0
      %810 = vmatpush1.msra.mxu0 0.0
      %811 = vmatprep.subr.mxu0 0.0
      %812 = vmatpush1.msra.mxu0 0.0
      %813 = vmatprep.subr.mxu0 0.0
      %814 = vmatpush1.msra.mxu0 0.0
      %815 = vmatprep.subr.mxu0 0.0
      %816 = vmatpush1.msra.mxu0 0.0
      %817 = vmatprep.subr.mxu0 0.0
      %818 = vmatpush1.msra.mxu0 0.0
      %819 = vmatprep.subr.mxu0 0.0
      %820 = vmatpush1.msra.mxu0 0.0
      %821 = vmatprep.subr.mxu0 0.0
      %822 = vmatpush1.msra.mxu0 0.0
      %823 = vmatprep.subr.mxu0 0.0
      %824 = vmatpush1.msra.mxu0 0.0
      %825 = vmatprep.subr.mxu0 0.0
      %826 = vmatpush1.msra.mxu0 0.0
      %827 = vmatprep.subr.mxu0 0.0
      %828 = vmatpush1.msra.mxu0 0.0
      %829 = vmatprep.subr.mxu0 0.0
      %830 = vmatpush1.msra.mxu0 0.0
      %831 = vmatprep.subr.mxu0 0.0
      %832 = vmatpush1.msra.mxu0 0.0
      %833 = vmatprep.subr.mxu0 0.0
      %834 = vmatpush1.msra.mxu0 0.0
      %835 = vmatprep.subr.mxu0 0.0
      %836 = vmatpush1.msra.mxu0 0.0
      %837 = vmatprep.subr.mxu0 0.0
      %838 = vmatpush1.msra.mxu0 0.0
      %839 = vmatprep.subr.mxu0 0.0
      %840 = vmatpush1.msra.mxu0 0.0
      %841 = vmatprep.subr.mxu0 0.0
      %842 = vmatpush1.msra.mxu0 0.0
      %843 = vmatprep.subr.mxu0 0.0
      %844 = vmatpush1.msra.mxu0 0.0
      %845 = vmatprep.subr.mxu0 0.0
      %846 = vmatpush1.msra.mxu0 0.0
      %847 = vmatprep.subr.mxu0 0.0
      %848 = vmatpush1.msra.mxu0 0.0
      %849 = vmatprep.subr.mxu0 0.0
      %850 = vmatpush1.msra.mxu0 0.0
      %851 = vmatprep.subr.mxu0 0.0
      %852 = vmatpush1.msra.mxu0 0.0
      %853 = vmatprep.subr.mxu0 0.0
      %854 = vmatpush1.msra.mxu0 0.0
      %855 = vmatprep.subr.mxu0 0.0
      %856 = vmatpush1.msra.mxu0 0.0
      %857 = vmatprep.subr.mxu0 0.0
      %858 = vmatpush1.msra.mxu0 0.0
      %859 = vmatprep.subr.mxu0 0.0
      %860 = vmatpush1.msra.mxu0 0.0
      %861 = vmatprep.subr.mxu0 0.0
      %862 = vmatpush1.msra.mxu0 0.0
      %863 = vmatprep.subr.mxu0 0.0
      %864 = vmatpush1.msra.mxu0 0.0
      %865 = vmatprep.subr.mxu0 0.0
      %866 = vmatpush1.msra.mxu0 0.0
      %867 = vmatprep.subr.mxu0 0.0
      %868 = vmatpush1.msra.mxu0 0.0
      %869 = vmatprep.mubr.f32.mxu0 0.0
      %870 = vmatmul.mubr.f32.gmra.mrb[0].mxu0 %v803
      %v871 = vpop.f32.mrb[0].mxu0
      %v872 = vadd.f32 0.0, %v871
      %v873 = vpop.f32.mrb[0].mxu0
      %874 = vdwg.mxu0
      %v875 = vadd.f32 %v799, %v872
      %v876 = vxor.u32 %v875, 2147483648
      %v877 = vmul.f32 %v876, 1.442695
      %v878 = vpow.pop %v877
      %v879 = vadd.f32 %v878, 1.0
      %v880 = vrcp.pop %v879
      %v881 = vmul.f32 1.0, %v880
      %v882 = vtanh.pop %v875
      %v883 = vmul.f32 %v881, %v788
      %885 = vrot.lane.b32.xlu0 %v882, 112
      %v886 = vpop.permute.xlu0 %885
      %v888 = vmul.f32 %v881, %v886
      %890 = vrot.lane.b32.xlu0 %v888, 8
      %v891 = vpop.permute.xlu0 %890
      %v893 = vadd.f32 %v883, %v891
      %v894 = vtanh.pop %v893
      %896 = vrot.lane.b32.xlu0 %v894, 16
      %v897 = vpop.permute.xlu0 %896
      %v899 = vmul.f32 %v881, %v897
      %s900 = scalar_lea.vmem %s1, %s797
      %v901 = vld [vmem:[%s900] sm:$0xff]
      %vm902 = vcmp.ne.f32.partialorder %v901, 0.0
      %v903 = vsel %vm902, 1, 0
      %904 = vset.pattern.permute.xlu0 0
      %905 = vperm.xlu0 %904, %v903
      %v906 = vpop.permute.xlu0 %905
      %vm907 = vcmp.eq.s32.totalorder %v906, 1
      %v908 = vsel %vm907, %v899, %v787
      %v909 = vsel %vm907, %v893, %v788
      %v910 = vsel %vm907, %v899, 0.0
      %912 = vrot.lane.b32.xlu0 %v910, 104
      %v913 = vpop.permute.xlu0 %912
      %s915 = scalar_lea.vmem %s255, %s797
      %916 = vst.msk [vmem:[%s915] sm:$0xff] %vm442, %v913
      %s917 = scalar_select %p437, 4, 11
      %s918 = smul.u32 %s917, 8
      %s919 = scalar_lea.vmem [#allocation2], %s918
      %v920 = vld [vmem:[%s919] sm:$0xff]
      %922 = vrot.lane.b32.xlu0 %v908, 104
      %v923 = vpop.permute.xlu0 %922
      %v924 = vsel %vm442, %v923, 0
      %926 = vmatprep.subr.mxu0 0.0
      %927 = vmatpush1.msra.mxu0 %v436
      %928 = vmatprep.subr.mxu0 0.0
      %929 = vmatpush1.msra.mxu0 0.0
      %930 = vmatprep.subr.mxu0 0.0
      %931 = vmatpush1.msra.mxu0 0.0
      %932 = vmatprep.subr.mxu0 0.0
      %933 = vmatpush1.msra.mxu0 0.0
      %934 = vmatprep.subr.mxu0 0.0
      %935 = vmatpush1.msra.mxu0 0.0
      %936 = vmatprep.subr.mxu0 0.0
      %937 = vmatpush1.msra.mxu0 0.0
      %938 = vmatprep.subr.mxu0 0.0
      %939 = vmatpush1.msra.mxu0 0.0
      %940 = vmatprep.subr.mxu0 0.0
      %941 = vmatpush1.msra.mxu0 0.0
      %942 = vmatprep.subr.mxu0 0.0
      %943 = vmatpush1.msra.mxu0 0.0
      %944 = vmatprep.subr.mxu0 0.0
      %945 = vmatpush1.msra.mxu0 0.0
      %946 = vmatprep.subr.mxu0 0.0
      %947 = vmatpush1.msra.mxu0 0.0
      %948 = vmatprep.subr.mxu0 0.0
      %949 = vmatpush1.msra.mxu0 0.0
      %950 = vmatprep.subr.mxu0 0.0
      %951 = vmatpush1.msra.mxu0 0.0
      %952 = vmatprep.subr.mxu0 0.0
      %953 = vmatpush1.msra.mxu0 0.0
      %954 = vmatprep.subr.mxu0 0.0
      %955 = vmatpush1.msra.mxu0 0.0
      %956 = vmatprep.subr.mxu0 0.0
      %957 = vmatpush1.msra.mxu0 0.0
      %958 = vmatprep.subr.mxu0 0.0
      %959 = vmatpush1.msra.mxu0 0.0
      %960 = vmatprep.subr.mxu0 0.0
      %961 = vmatpush1.msra.mxu0 0.0
      %962 = vmatprep.subr.mxu0 0.0
      %963 = vmatpush1.msra.mxu0 0.0
      %964 = vmatprep.subr.mxu0 0.0
      %965 = vmatpush1.msra.mxu0 0.0
      %966 = vmatprep.subr.mxu0 0.0
      %967 = vmatpush1.msra.mxu0 0.0
      %968 = vmatprep.subr.mxu0 0.0
      %969 = vmatpush1.msra.mxu0 0.0
      %970 = vmatprep.subr.mxu0 0.0
      %971 = vmatpush1.msra.mxu0 0.0
      %972 = vmatprep.subr.mxu0 0.0
      %973 = vmatpush1.msra.mxu0 0.0
      %974 = vmatprep.subr.mxu0 0.0
      %975 = vmatpush1.msra.mxu0 0.0
      %976 = vmatprep.subr.mxu0 0.0
      %977 = vmatpush1.msra.mxu0 0.0
      %978 = vmatprep.subr.mxu0 0.0
      %979 = vmatpush1.msra.mxu0 0.0
      %980 = vmatprep.subr.mxu0 0.0
      %981 = vmatpush1.msra.mxu0 0.0
      %982 = vmatprep.subr.mxu0 0.0
      %983 = vmatpush1.msra.mxu0 0.0
      %984 = vmatprep.subr.mxu0 0.0
      %985 = vmatpush1.msra.mxu0 0.0
      %986 = vmatprep.subr.mxu0 0.0
      %987 = vmatpush1.msra.mxu0 0.0
      %988 = vmatprep.subr.mxu0 0.0
      %989 = vmatpush1.msra.mxu0 0.0
      %990 = vmatprep.mubr.f32.mxu0 0.0
      %991 = vmatmul.mubr.f32.gmra.mrb[0].mxu0 %v924
      %v992 = vpop.f32.mrb[0].mxu0
      %v993 = vadd.f32 0.0, %v992
      %v994 = vpop.f32.mrb[0].mxu0
      %995 = vdwg.mxu0
      %v996 = vadd.f32 %v920, %v993
      %v997 = vxor.u32 %v996, 2147483648
      %v998 = vmul.f32 %v997, 1.442695
      %v999 = vpow.pop %v998
      %v1000 = vadd.f32 %v999, 1.0
      %v1001 = vrcp.pop %v1000
      %v1002 = vmul.f32 1.0, %v1001
      %v1003 = vtanh.pop %v996
      %v1004 = vmul.f32 %v1002, %v909
      %1006 = vrot.lane.b32.xlu0 %v1003, 112
      %v1007 = vpop.permute.xlu0 %1006
      %v1009 = vmul.f32 %v1002, %v1007
      %1011 = vrot.lane.b32.xlu0 %v1009, 8
      %v1012 = vpop.permute.xlu0 %1011
      %v1014 = vadd.f32 %v1004, %v1012
      %v1015 = vtanh.pop %v1014
      %1017 = vrot.lane.b32.xlu0 %v1015, 16
      %v1018 = vpop.permute.xlu0 %1017
      %v1020 = vmul.f32 %v1002, %v1018
      %s1021 = scalar_lea.vmem %s1, %s918
      %v1022 = vld [vmem:[%s1021] sm:$0xff]
      %vm1023 = vcmp.ne.f32.partialorder %v1022, 0.0
      %v1024 = vsel %vm1023, 1, 0
      %1025 = vset.pattern.permute.xlu0 0
      %1026 = vperm.xlu0 %1025, %v1024
      %v1027 = vpop.permute.xlu0 %1026
      %vm1028 = vcmp.eq.s32.totalorder %v1027, 1
      %v1029 = vsel %vm1028, %v1020, %v908
      %v1030 = vsel %vm1028, %v1014, %v909
      %v1031 = vsel %vm1028, %v1020, 0.0
      %1033 = vrot.lane.b32.xlu0 %v1031, 104
      %v1034 = vpop.permute.xlu0 %1033
      %s1036 = scalar_lea.vmem %s255, %s918
      %1037 = vst.msk [vmem:[%s1036] sm:$0xff] %vm442, %v1034
      %s1038 = scalar_select %p437, 5, 10
      %s1039 = smul.u32 %s1038, 8
      %s1040 = scalar_lea.vmem [#allocation2], %s1039
      %v1041 = vld [vmem:[%s1040] sm:$0xff]
      %1043 = vrot.lane.b32.xlu0 %v1029, 104
      %v1044 = vpop.permute.xlu0 %1043
      %v1045 = vsel %vm442, %v1044, 0
      %1047 = vmatprep.subr.mxu0 0.0
      %1048 = vmatpush1.msra.mxu0 %v436
      %1049 = vmatprep.subr.mxu0 0.0
      %1050 = vmatpush1.msra.mxu0 0.0
      %1051 = vmatprep.subr.mxu0 0.0
      %1052 = vmatpush1.msra.mxu0 0.0
      %1053 = vmatprep.subr.mxu0 0.0
      %1054 = vmatpush1.msra.mxu0 0.0
      %1055 = vmatprep.subr.mxu0 0.0
      %1056 = vmatpush1.msra.mxu0 0.0
      %1057 = vmatprep.subr.mxu0 0.0
      %1058 = vmatpush1.msra.mxu0 0.0
      %1059 = vmatprep.subr.mxu0 0.0
      %1060 = vmatpush1.msra.mxu0 0.0
      %1061 = vmatprep.subr.mxu0 0.0
      %1062 = vmatpush1.msra.mxu0 0.0
      %1063 = vmatprep.subr.mxu0 0.0
      %1064 = vmatpush1.msra.mxu0 0.0
      %1065 = vmatprep.subr.mxu0 0.0
      %1066 = vmatpush1.msra.mxu0 0.0
      %1067 = vmatprep.subr.mxu0 0.0
      %1068 = vmatpush1.msra.mxu0 0.0
      %1069 = vmatprep.subr.mxu0 0.0
      %1070 = vmatpush1.msra.mxu0 0.0
      %1071 = vmatprep.subr.mxu0 0.0
      %1072 = vmatpush1.msra.mxu0 0.0
      %1073 = vmatprep.subr.mxu0 0.0
      %1074 = vmatpush1.msra.mxu0 0.0
      %1075 = vmatprep.subr.mxu0 0.0
      %1076 = vmatpush1.msra.mxu0 0.0
      %1077 = vmatprep.subr.mxu0 0.0
      %1078 = vmatpush1.msra.mxu0 0.0
      %1079 = vmatprep.subr.mxu0 0.0
      %1080 = vmatpush1.msra.mxu0 0.0
      %1081 = vmatprep.subr.mxu0 0.0
      %1082 = vmatpush1.msra.mxu0 0.0
      %1083 = vmatprep.subr.mxu0 0.0
      %1084 = vmatpush1.msra.mxu0 0.0
      %1085 = vmatprep.subr.mxu0 0.0
      %1086 = vmatpush1.msra.mxu0 0.0
      %1087 = vmatprep.subr.mxu0 0.0
      %1088 = vmatpush1.msra.mxu0 0.0
      %1089 = vmatprep.subr.mxu0 0.0
      %1090 = vmatpush1.msra.mxu0 0.0
      %1091 = vmatprep.subr.mxu0 0.0
      %1092 = vmatpush1.msra.mxu0 0.0
      %1093 = vmatprep.subr.mxu0 0.0
      %1094 = vmatpush1.msra.mxu0 0.0
      %1095 = vmatprep.subr.mxu0 0.0
      %1096 = vmatpush1.msra.mxu0 0.0
      %1097 = vmatprep.subr.mxu0 0.0
      %1098 = vmatpush1.msra.mxu0 0.0
      %1099 = vmatprep.subr.mxu0 0.0
      %1100 = vmatpush1.msra.mxu0 0.0
      %1101 = vmatprep.subr.mxu0 0.0
      %1102 = vmatpush1.msra.mxu0 0.0
      %1103 = vmatprep.subr.mxu0 0.0
      %1104 = vmatpush1.msra.mxu0 0.0
      %1105 = vmatprep.subr.mxu0 0.0
      %1106 = vmatpush1.msra.mxu0 0.0
      %1107 = vmatprep.subr.mxu0 0.0
      %1108 = vmatpush1.msra.mxu0 0.0
      %1109 = vmatprep.subr.mxu0 0.0
      %1110 = vmatpush1.msra.mxu0 0.0
      %1111 = vmatprep.mubr.f32.mxu0 0.0
      %1112 = vmatmul.mubr.f32.gmra.mrb[0].mxu0 %v1045
      %v1113 = vpop.f32.mrb[0].mxu0
      %v1114 = vadd.f32 0.0, %v1113
      %v1115 = vpop.f32.mrb[0].mxu0
      %1116 = vdwg.mxu0
      %v1117 = vadd.f32 %v1041, %v1114
      %v1118 = vxor.u32 %v1117, 2147483648
      %v1119 = vmul.f32 %v1118, 1.442695
      %v1120 = vpow.pop %v1119
      %v1121 = vadd.f32 %v1120, 1.0
      %v1122 = vrcp.pop %v1121
      %v1123 = vmul.f32 1.0, %v1122
      %v1124 = vtanh.pop %v1117
      %v1125 = vmul.f32 %v1123, %v1030
      %1127 = vrot.lane.b32.xlu0 %v1124, 112
      %v1128 = vpop.permute.xlu0 %1127
      %v1130 = vmul.f32 %v1123, %v1128
      %1132 = vrot.lane.b32.xlu0 %v1130, 8
      %v1133 = vpop.permute.xlu0 %1132
      %v1135 = vadd.f32 %v1125, %v1133
      %v1136 = vtanh.pop %v1135
      %1138 = vrot.lane.b32.xlu0 %v1136, 16
      %v1139 = vpop.permute.xlu0 %1138
      %v1141 = vmul.f32 %v1123, %v1139
      %s1142 = scalar_lea.vmem %s1, %s1039
      %v1143 = vld [vmem:[%s1142] sm:$0xff]
      %vm1144 = vcmp.ne.f32.partialorder %v1143, 0.0
      %v1145 = vsel %vm1144, 1, 0
      %1146 = vset.pattern.permute.xlu0 0
      %1147 = vperm.xlu0 %1146, %v1145
      %v1148 = vpop.permute.xlu0 %1147
      %vm1149 = vcmp.eq.s32.totalorder %v1148, 1
      %v1150 = vsel %vm1149, %v1141, %v1029
      %v1151 = vsel %vm1149, %v1135, %v1030
      %v1152 = vsel %vm1149, %v1141, 0.0
      %1154 = vrot.lane.b32.xlu0 %v1152, 104
      %v1155 = vpop.permute.xlu0 %1154
      %s1157 = scalar_lea.vmem %s255, %s1039
      %1158 = vst.msk [vmem:[%s1157] sm:$0xff] %vm442, %v1155
      %s1159 = scalar_select %p437, 6, 9
      %s1160 = smul.u32 %s1159, 8
      %s1161 = scalar_lea.vmem [#allocation2], %s1160
      %v1162 = vld [vmem:[%s1161] sm:$0xff]
      %1164 = vrot.lane.b32.xlu0 %v1150, 104
      %v1165 = vpop.permute.xlu0 %1164
      %v1166 = vsel %vm442, %v1165, 0
      %1168 = vmatprep.subr.mxu0 0.0
      %1169 = vmatpush1.msra.mxu0 %v436
      %1170 = vmatprep.subr.mxu0 0.0
      %1171 = vmatpush1.msra.mxu0 0.0
      %1172 = vmatprep.subr.mxu0 0.0
      %1173 = vmatpush1.msra.mxu0 0.0
      %1174 = vmatprep.subr.mxu0 0.0
      %1175 = vmatpush1.msra.mxu0 0.0
      %1176 = vmatprep.subr.mxu0 0.0
      %1177 = vmatpush1.msra.mxu0 0.0
      %1178 = vmatprep.subr.mxu0 0.0
      %1179 = vmatpush1.msra.mxu0 0.0
      %1180 = vmatprep.subr.mxu0 0.0
      %1181 = vmatpush1.msra.mxu0 0.0
      %1182 = vmatprep.subr.mxu0 0.0
      %1183 = vmatpush1.msra.mxu0 0.0
      %1184 = vmatprep.subr.mxu0 0.0
      %1185 = vmatpush1.msra.mxu0 0.0
      %1186 = vmatprep.subr.mxu0 0.0
      %1187 = vmatpush1.msra.mxu0 0.0
      %1188 = vmatprep.subr.mxu0 0.0
      %1189 = vmatpush1.msra.mxu0 0.0
      %1190 = vmatprep.subr.mxu0 0.0
      %1191 = vmatpush1.msra.mxu0 0.0
      %1192 = vmatprep.subr.mxu0 0.0
      %1193 = vmatpush1.msra.mxu0 0.0
      %1194 = vmatprep.subr.mxu0 0.0
      %1195 = vmatpush1.msra.mxu0 0.0
      %1196 = vmatprep.subr.mxu0 0.0
      %1197 = vmatpush1.msra.mxu0 0.0
      %1198 = vmatprep.subr.mxu0 0.0
      %1199 = vmatpush1.msra.mxu0 0.0
      %1200 = vmatprep.subr.mxu0 0.0
      %1201 = vmatpush1.msra.mxu0 0.0
      %1202 = vmatprep.subr.mxu0 0.0
      %1203 = vmatpush1.msra.mxu0 0.0
      %1204 = vmatprep.subr.mxu0 0.0
      %1205 = vmatpush1.msra.mxu0 0.0
      %1206 = vmatprep.subr.mxu0 0.0
      %1207 = vmatpush1.msra.mxu0 0.0
      %1208 = vmatprep.subr.mxu0 0.0
      %1209 = vmatpush1.msra.mxu0 0.0
      %1210 = vmatprep.subr.mxu0 0.0
      %1211 = vmatpush1.msra.mxu0 0.0
      %1212 = vmatprep.subr.mxu0 0.0
      %1213 = vmatpush1.msra.mxu0 0.0
      %1214 = vmatprep.subr.mxu0 0.0
      %1215 = vmatpush1.msra.mxu0 0.0
      %1216 = vmatprep.subr.mxu0 0.0
      %1217 = vmatpush1.msra.mxu0 0.0
      %1218 = vmatprep.subr.mxu0 0.0
      %1219 = vmatpush1.msra.mxu0 0.0
      %1220 = vmatprep.subr.mxu0 0.0
      %1221 = vmatpush1.msra.mxu0 0.0
      %1222 = vmatprep.subr.mxu0 0.0
      %1223 = vmatpush1.msra.mxu0 0.0
      %1224 = vmatprep.subr.mxu0 0.0
      %1225 = vmatpush1.msra.mxu0 0.0
      %1226 = vmatprep.subr.mxu0 0.0
      %1227 = vmatpush1.msra.mxu0 0.0
      %1228 = vmatprep.subr.mxu0 0.0
      %1229 = vmatpush1.msra.mxu0 0.0
      %1230 = vmatprep.subr.mxu0 0.0
      %1231 = vmatpush1.msra.mxu0 0.0
      %1232 = vmatprep.mubr.f32.mxu0 0.0
      %1233 = vmatmul.mubr.f32.gmra.mrb[0].mxu0 %v1166
      %v1234 = vpop.f32.mrb[0].mxu0
      %v1235 = vadd.f32 0.0, %v1234
      %v1236 = vpop.f32.mrb[0].mxu0
      %1237 = vdwg.mxu0
      %v1238 = vadd.f32 %v1162, %v1235
      %v1239 = vxor.u32 %v1238, 2147483648
      %v1240 = vmul.f32 %v1239, 1.442695
      %v1241 = vpow.pop %v1240
      %v1242 = vadd.f32 %v1241, 1.0
      %v1243 = vrcp.pop %v1242
      %v1244 = vmul.f32 1.0, %v1243
      %v1245 = vtanh.pop %v1238
      %v1246 = vmul.f32 %v1244, %v1151
      %1248 = vrot.lane.b32.xlu0 %v1245, 112
      %v1249 = vpop.permute.xlu0 %1248
      %v1251 = vmul.f32 %v1244, %v1249
      %1253 = vrot.lane.b32.xlu0 %v1251, 8
      %v1254 = vpop.permute.xlu0 %1253
      %v1256 = vadd.f32 %v1246, %v1254
      %v1257 = vtanh.pop %v1256
      %1259 = vrot.lane.b32.xlu0 %v1257, 16
      %v1260 = vpop.permute.xlu0 %1259
      %v1262 = vmul.f32 %v1244, %v1260
      %s1263 = scalar_lea.vmem %s1, %s1160
      %v1264 = vld [vmem:[%s1263] sm:$0xff]
      %vm1265 = vcmp.ne.f32.partialorder %v1264, 0.0
      %v1266 = vsel %vm1265, 1, 0
      %1267 = vset.pattern.permute.xlu0 0
      %1268 = vperm.xlu0 %1267, %v1266
      %v1269 = vpop.permute.xlu0 %1268
      %vm1270 = vcmp.eq.s32.totalorder %v1269, 1
      %v1271 = vsel %vm1270, %v1262, %v1150
      %v1272 = vsel %vm1270, %v1256, %v1151
      %v1273 = vsel %vm1270, %v1262, 0.0
      %1275 = vrot.lane.b32.xlu0 %v1273, 104
      %v1276 = vpop.permute.xlu0 %1275
      %s1278 = scalar_lea.vmem %s255, %s1160
      %1279 = vst.msk [vmem:[%s1278] sm:$0xff] %vm442, %v1276
      %s1280 = scalar_select %p437, 7, 8
      %s1281 = smul.u32 %s1280, 8
      %s1282 = scalar_lea.vmem [#allocation2], %s1281
      %v1283 = vld [vmem:[%s1282] sm:$0xff]
      %1285 = vrot.lane.b32.xlu0 %v1271, 104
      %v1286 = vpop.permute.xlu0 %1285
      %v1287 = vsel %vm442, %v1286, 0
      %1289 = vmatprep.subr.mxu0 0.0
      %1290 = vmatpush1.msra.mxu0 %v436
      %1291 = vmatprep.subr.mxu0 0.0
      %1292 = vmatpush1.msra.mxu0 0.0
      %1293 = vmatprep.subr.mxu0 0.0
      %1294 = vmatpush1.msra.mxu0 0.0
      %1295 = vmatprep.subr.mxu0 0.0
      %1296 = vmatpush1.msra.mxu0 0.0
      %1297 = vmatprep.subr.mxu0 0.0
      %1298 = vmatpush1.msra.mxu0 0.0
      %1299 = vmatprep.subr.mxu0 0.0
      %1300 = vmatpush1.msra.mxu0 0.0
      %1301 = vmatprep.subr.mxu0 0.0
      %1302 = vmatpush1.msra.mxu0 0.0
      %1303 = vmatprep.subr.mxu0 0.0
      %1304 = vmatpush1.msra.mxu0 0.0
      %1305 = vmatprep.subr.mxu0 0.0
      %1306 = vmatpush1.msra.mxu0 0.0
      %1307 = vmatprep.subr.mxu0 0.0
      %1308 = vmatpush1.msra.mxu0 0.0
      %1309 = vmatprep.subr.mxu0 0.0
      %1310 = vmatpush1.msra.mxu0 0.0
      %1311 = vmatprep.subr.mxu0 0.0
      %1312 = vmatpush1.msra.mxu0 0.0
      %1313 = vmatprep.subr.mxu0 0.0
      %1314 = vmatpush1.msra.mxu0 0.0
      %1315 = vmatprep.subr.mxu0 0.0
      %1316 = vmatpush1.msra.mxu0 0.0
      %1317 = vmatprep.subr.mxu0 0.0
      %1318 = vmatpush1.msra.mxu0 0.0
      %1319 = vmatprep.subr.mxu0 0.0
      %1320 = vmatpush1.msra.mxu0 0.0
      %1321 = vmatprep.subr.mxu0 0.0
      %1322 = vmatpush1.msra.mxu0 0.0
      %1323 = vmatprep.subr.mxu0 0.0
      %1324 = vmatpush1.msra.mxu0 0.0
      %1325 = vmatprep.subr.mxu0 0.0
      %1326 = vmatpush1.msra.mxu0 0.0
      %1327 = vmatprep.subr.mxu0 0.0
      %1328 = vmatpush1.msra.mxu0 0.0
      %1329 = vmatprep.subr.mxu0 0.0
      %1330 = vmatpush1.msra.mxu0 0.0
      %1331 = vmatprep.subr.mxu0 0.0
      %1332 = vmatpush1.msra.mxu0 0.0
      %1333 = vmatprep.subr.mxu0 0.0
      %1334 = vmatpush1.msra.mxu0 0.0
      %1335 = vmatprep.subr.mxu0 0.0
      %1336 = vmatpush1.msra.mxu0 0.0
      %1337 = vmatprep.subr.mxu0 0.0
      %1338 = vmatpush1.msra.mxu0 0.0
      %1339 = vmatprep.subr.mxu0 0.0
      %1340 = vmatpush1.msra.mxu0 0.0
      %1341 = vmatprep.subr.mxu0 0.0
      %1342 = vmatpush1.msra.mxu0 0.0
      %1343 = vmatprep.subr.mxu0 0.0
      %1344 = vmatpush1.msra.mxu0 0.0
      %1345 = vmatprep.subr.mxu0 0.0
      %1346 = vmatpush1.msra.mxu0 0.0
      %1347 = vmatprep.subr.mxu0 0.0
      %1348 = vmatpush1.msra.mxu0 0.0
      %1349 = vmatprep.subr.mxu0 0.0
      %1350 = vmatpush1.msra.mxu0 0.0
      %1351 = vmatprep.subr.mxu0 0.0
      %1352 = vmatpush1.msra.mxu0 0.0
      %1353 = vmatprep.mubr.f32.mxu0 0.0
      %1354 = vmatmul.mubr.f32.gmra.mrb[0].mxu0 %v1287
      %v1355 = vpop.f32.mrb[0].mxu0
      %v1356 = vadd.f32 0.0, %v1355
      %v1357 = vpop.f32.mrb[0].mxu0
      %1358 = vdwg.mxu0
      %v1359 = vadd.f32 %v1283, %v1356
      %v1360 = vxor.u32 %v1359, 2147483648
      %v1361 = vmul.f32 %v1360, 1.442695
      %v1362 = vpow.pop %v1361
      %v1363 = vadd.f32 %v1362, 1.0
      %v1364 = vrcp.pop %v1363
      %v1365 = vmul.f32 1.0, %v1364
      %v1366 = vtanh.pop %v1359
      %v1367 = vmul.f32 %v1365, %v1272
      %1369 = vrot.lane.b32.xlu0 %v1366, 112
      %v1370 = vpop.permute.xlu0 %1369
      %v1372 = vmul.f32 %v1365, %v1370
      %1374 = vrot.lane.b32.xlu0 %v1372, 8
      %v1375 = vpop.permute.xlu0 %1374
      %v1377 = vadd.f32 %v1367, %v1375
      %v1378 = vtanh.pop %v1377
      %1380 = vrot.lane.b32.xlu0 %v1378, 16
      %v1381 = vpop.permute.xlu0 %1380
      %v1383 = vmul.f32 %v1365, %v1381
      %s1384 = scalar_lea.vmem %s1, %s1281
      %v1385 = vld [vmem:[%s1384] sm:$0xff]
      %vm1386 = vcmp.ne.f32.partialorder %v1385, 0.0
      %v1387 = vsel %vm1386, 1, 0
      %1388 = vset.pattern.permute.xlu0 0
      %1389 = vperm.xlu0 %1388, %v1387
      %v1390 = vpop.permute.xlu0 %1389
      %vm1391 = vcmp.eq.s32.totalorder %v1390, 1
      %v1392 = vsel %vm1391, %v1383, %v1271
      %v1393 = vsel %vm1391, %v1377, %v1272
      %v1394 = vsel %vm1391, %v1383, 0.0
      %1396 = vrot.lane.b32.xlu0 %v1394, 104
      %v1397 = vpop.permute.xlu0 %1396
      %s1399 = scalar_lea.vmem %s255, %s1281
      %1400 = vst.msk [vmem:[%s1399] sm:$0xff] %vm442, %v1397
      %s1401 = scalar_select %p437, 8, 7
      %s1402 = smul.u32 %s1401, 8
      %s1403 = scalar_lea.vmem [#allocation2], %s1402
      %v1404 = vld [vmem:[%s1403] sm:$0xff]
      %1406 = vrot.lane.b32.xlu0 %v1392, 104
      %v1407 = vpop.permute.xlu0 %1406
      %v1408 = vsel %vm442, %v1407, 0
      %1410 = vmatprep.subr.mxu0 0.0
      %1411 = vmatpush1.msra.mxu0 %v436
      %1412 = vmatprep.subr.mxu0 0.0
      %1413 = vmatpush1.msra.mxu0 0.0
      %1414 = vmatprep.subr.mxu0 0.0
      %1415 = vmatpush1.msra.mxu0 0.0
      %1416 = vmatprep.subr.mxu0 0.0
      %1417 = vmatpush1.msra.mxu0 0.0
      %1418 = vmatprep.subr.mxu0 0.0
      %1419 = vmatpush1.msra.mxu0 0.0
      %1420 = vmatprep.subr.mxu0 0.0
      %1421 = vmatpush1.msra.mxu0 0.0
      %1422 = vmatprep.subr.mxu0 0.0
      %1423 = vmatpush1.msra.mxu0 0.0
      %1424 = vmatprep.subr.mxu0 0.0
      %1425 = vmatpush1.msra.mxu0 0.0
      %1426 = vmatprep.subr.mxu0 0.0
      %1427 = vmatpush1.msra.mxu0 0.0
      %1428 = vmatprep.subr.mxu0 0.0
      %1429 = vmatpush1.msra.mxu0 0.0
      %1430 = vmatprep.subr.mxu0 0.0
      %1431 = vmatpush1.msra.mxu0 0.0
      %1432 = vmatprep.subr.mxu0 0.0
      %1433 = vmatpush1.msra.mxu0 0.0
      %1434 = vmatprep.subr.mxu0 0.0
      %1435 = vmatpush1.msra.mxu0 0.0
      %1436 = vmatprep.subr.mxu0 0.0
      %1437 = vmatpush1.msra.mxu0 0.0
      %1438 = vmatprep.subr.mxu0 0.0
      %1439 = vmatpush1.msra.mxu0 0.0
      %1440 = vmatprep.subr.mxu0 0.0
      %1441 = vmatpush1.msra.mxu0 0.0
      %1442 = vmatprep.subr.mxu0 0.0
      %1443 = vmatpush1.msra.mxu0 0.0
      %1444 = vmatprep.subr.mxu0 0.0
      %1445 = vmatpush1.msra.mxu0 0.0
      %1446 = vmatprep.subr.mxu0 0.0
      %1447 = vmatpush1.msra.mxu0 0.0
      %1448 = vmatprep.subr.mxu0 0.0
      %1449 = vmatpush1.msra.mxu0 0.0
      %1450 = vmatprep.subr.mxu0 0.0
      %1451 = vmatpush1.msra.mxu0 0.0
      %1452 = vmatprep.subr.mxu0 0.0
      %1453 = vmatpush1.msra.mxu0 0.0
      %1454 = vmatprep.subr.mxu0 0.0
      %1455 = vmatpush1.msra.mxu0 0.0
      %1456 = vmatprep.subr.mxu0 0.0
      %1457 = vmatpush1.msra.mxu0 0.0
      %1458 = vmatprep.subr.mxu0 0.0
      %1459 = vmatpush1.msra.mxu0 0.0
      %1460 = vmatprep.subr.mxu0 0.0
      %1461 = vmatpush1.msra.mxu0 0.0
      %1462 = vmatprep.subr.mxu0 0.0
      %1463 = vmatpush1.msra.mxu0 0.0
      %1464 = vmatprep.subr.mxu0 0.0
      %1465 = vmatpush1.msra.mxu0 0.0
      %1466 = vmatprep.subr.mxu0 0.0
      %1467 = vmatpush1.msra.mxu0 0.0
      %1468 = vmatprep.subr.mxu0 0.0
      %1469 = vmatpush1.msra.mxu0 0.0
      %1470 = vmatprep.subr.mxu0 0.0
      %1471 = vmatpush1.msra.mxu0 0.0
      %1472 = vmatprep.subr.mxu0 0.0
      %1473 = vmatpush1.msra.mxu0 0.0
      %1474 = vmatprep.mubr.f32.mxu0 0.0
      %1475 = vmatmul.mubr.f32.gmra.mrb[0].mxu0 %v1408
      %v1476 = vpop.f32.mrb[0].mxu0
      %v1477 = vadd.f32 0.0, %v1476
      %v1478 = vpop.f32.mrb[0].mxu0
      %1479 = vdwg.mxu0
      %v1480 = vadd.f32 %v1404, %v1477
      %v1481 = vxor.u32 %v1480, 2147483648
      %v1482 = vmul.f32 %v1481, 1.442695
      %v1483 = vpow.pop %v1482
      %v1484 = vadd.f32 %v1483, 1.0
      %v1485 = vrcp.pop %v1484
      %v1486 = vmul.f32 1.0, %v1485
      %v1487 = vtanh.pop %v1480
      %v1488 = vmul.f32 %v1486, %v1393
      %1490 = vrot.lane.b32.xlu0 %v1487, 112
      %v1491 = vpop.permute.xlu0 %1490
      %v1493 = vmul.f32 %v1486, %v1491
      %1495 = vrot.lane.b32.xlu0 %v1493, 8
      %v1496 = vpop.permute.xlu0 %1495
      %v1498 = vadd.f32 %v1488, %v1496
      %v1499 = vtanh.pop %v1498
      %1501 = vrot.lane.b32.xlu0 %v1499, 16
      %v1502 = vpop.permute.xlu0 %1501
      %v1504 = vmul.f32 %v1486, %v1502
      %s1505 = scalar_lea.vmem %s1, %s1402
      %v1506 = vld [vmem:[%s1505] sm:$0xff]
      %vm1507 = vcmp.ne.f32.partialorder %v1506, 0.0
      %v1508 = vsel %vm1507, 1, 0
      %1509 = vset.pattern.permute.xlu0 0
      %1510 = vperm.xlu0 %1509, %v1508
      %v1511 = vpop.permute.xlu0 %1510
      %vm1512 = vcmp.eq.s32.totalorder %v1511, 1
      %v1513 = vsel %vm1512, %v1504, %v1392
      %v1514 = vsel %vm1512, %v1498, %v1393
      %v1515 = vsel %vm1512, %v1504, 0.0
      %1517 = vrot.lane.b32.xlu0 %v1515, 104
      %v1518 = vpop.permute.xlu0 %1517
      %s1520 = scalar_lea.vmem %s255, %s1402
      %1521 = vst.msk [vmem:[%s1520] sm:$0xff] %vm442, %v1518
      %s1522 = scalar_select %p437, 9, 6
      %s1523 = smul.u32 %s1522, 8
      %s1524 = scalar_lea.vmem [#allocation2], %s1523
      %v1525 = vld [vmem:[%s1524] sm:$0xff]
      %1527 = vrot.lane.b32.xlu0 %v1513, 104
      %v1528 = vpop.permute.xlu0 %1527
      %v1529 = vsel %vm442, %v1528, 0
      %1531 = vmatprep.subr.mxu0 0.0
      %1532 = vmatpush1.msra.mxu0 %v436
      %1533 = vmatprep.subr.mxu0 0.0
      %1534 = vmatpush1.msra.mxu0 0.0
      %1535 = vmatprep.subr.mxu0 0.0
      %1536 = vmatpush1.msra.mxu0 0.0
      %1537 = vmatprep.subr.mxu0 0.0
      %1538 = vmatpush1.msra.mxu0 0.0
      %1539 = vmatprep.subr.mxu0 0.0
      %1540 = vmatpush1.msra.mxu0 0.0
      %1541 = vmatprep.subr.mxu0 0.0
      %1542 = vmatpush1.msra.mxu0 0.0
      %1543 = vmatprep.subr.mxu0 0.0
      %1544 = vmatpush1.msra.mxu0 0.0
      %1545 = vmatprep.subr.mxu0 0.0
      %1546 = vmatpush1.msra.mxu0 0.0
      %1547 = vmatprep.subr.mxu0 0.0
      %1548 = vmatpush1.msra.mxu0 0.0
      %1549 = vmatprep.subr.mxu0 0.0
      %1550 = vmatpush1.msra.mxu0 0.0
      %1551 = vmatprep.subr.mxu0 0.0
      %1552 = vmatpush1.msra.mxu0 0.0
      %1553 = vmatprep.subr.mxu0 0.0
      %1554 = vmatpush1.msra.mxu0 0.0
      %1555 = vmatprep.subr.mxu0 0.0
      %1556 = vmatpush1.msra.mxu0 0.0
      %1557 = vmatprep.subr.mxu0 0.0
      %1558 = vmatpush1.msra.mxu0 0.0
      %1559 = vmatprep.subr.mxu0 0.0
      %1560 = vmatpush1.msra.mxu0 0.0
      %1561 = vmatprep.subr.mxu0 0.0
      %1562 = vmatpush1.msra.mxu0 0.0
      %1563 = vmatprep.subr.mxu0 0.0
      %1564 = vmatpush1.msra.mxu0 0.0
      %1565 = vmatprep.subr.mxu0 0.0
      %1566 = vmatpush1.msra.mxu0 0.0
      %1567 = vmatprep.subr.mxu0 0.0
      %1568 = vmatpush1.msra.mxu0 0.0
      %1569 = vmatprep.subr.mxu0 0.0
      %1570 = vmatpush1.msra.mxu0 0.0
      %1571 = vmatprep.subr.mxu0 0.0
      %1572 = vmatpush1.msra.mxu0 0.0
      %1573 = vmatprep.subr.mxu0 0.0
      %1574 = vmatpush1.msra.mxu0 0.0
      %1575 = vmatprep.subr.mxu0 0.0
      %1576 = vmatpush1.msra.mxu0 0.0
      %1577 = vmatprep.subr.mxu0 0.0
      %1578 = vmatpush1.msra.mxu0 0.0
      %1579 = vmatprep.subr.mxu0 0.0
      %1580 = vmatpush1.msra.mxu0 0.0
      %1581 = vmatprep.subr.mxu0 0.0
      %1582 = vmatpush1.msra.mxu0 0.0
      %1583 = vmatprep.subr.mxu0 0.0
      %1584 = vmatpush1.msra.mxu0 0.0
      %1585 = vmatprep.subr.mxu0 0.0
      %1586 = vmatpush1.msra.mxu0 0.0
      %1587 = vmatprep.subr.mxu0 0.0
      %1588 = vmatpush1.msra.mxu0 0.0
      %1589 = vmatprep.subr.mxu0 0.0
      %1590 = vmatpush1.msra.mxu0 0.0
      %1591 = vmatprep.subr.mxu0 0.0
      %1592 = vmatpush1.msra.mxu0 0.0
      %1593 = vmatprep.subr.mxu0 0.0
      %1594 = vmatpush1.msra.mxu0 0.0
      %1595 = vmatprep.mubr.f32.mxu0 0.0
      %1596 = vmatmul.mubr.f32.gmra.mrb[0].mxu0 %v1529
      %v1597 = vpop.f32.mrb[0].mxu0
      %v1598 = vadd.f32 0.0, %v1597
      %v1599 = vpop.f32.mrb[0].mxu0
      %1600 = vdwg.mxu0
      %v1601 = vadd.f32 %v1525, %v1598
      %v1602 = vxor.u32 %v1601, 2147483648
      %v1603 = vmul.f32 %v1602, 1.442695
      %v1604 = vpow.pop %v1603
      %v1605 = vadd.f32 %v1604, 1.0
      %v1606 = vrcp.pop %v1605
      %v1607 = vmul.f32 1.0, %v1606
      %v1608 = vtanh.pop %v1601
      %v1609 = vmul.f32 %v1607, %v1514
      %1611 = vrot.lane.b32.xlu0 %v1608, 112
      %v1612 = vpop.permute.xlu0 %1611
      %v1614 = vmul.f32 %v1607, %v1612
      %1616 = vrot.lane.b32.xlu0 %v1614, 8
      %v1617 = vpop.permute.xlu0 %1616
      %v1619 = vadd.f32 %v1609, %v1617
      %v1620 = vtanh.pop %v1619
      %1622 = vrot.lane.b32.xlu0 %v1620, 16
      %v1623 = vpop.permute.xlu0 %1622
      %v1625 = vmul.f32 %v1607, %v1623
      %s1626 = scalar_lea.vmem %s1, %s1523
      %v1627 = vld [vmem:[%s1626] sm:$0xff]
      %vm1628 = vcmp.ne.f32.partialorder %v1627, 0.0
      %v1629 = vsel %vm1628, 1, 0
      %1630 = vset.pattern.permute.xlu0 0
      %1631 = vperm.xlu0 %1630, %v1629
      %v1632 = vpop.permute.xlu0 %1631
      %vm1633 = vcmp.eq.s32.totalorder %v1632, 1
      %v1634 = vsel %vm1633, %v1625, %v1513
      %v1635 = vsel %vm1633, %v1619, %v1514
      %v1636 = vsel %vm1633, %v1625, 0.0
      %1638 = vrot.lane.b32.xlu0 %v1636, 104
      %v1639 = vpop.permute.xlu0 %1638
      %s1641 = scalar_lea.vmem %s255, %s1523
      %1642 = vst.msk [vmem:[%s1641] sm:$0xff] %vm442, %v1639
      %s1643 = scalar_select %p437, 10, 5
      %s1644 = smul.u32 %s1643, 8
      %s1645 = scalar_lea.vmem [#allocation2], %s1644
      %v1646 = vld [vmem:[%s1645] sm:$0xff]
      %1648 = vrot.lane.b32.xlu0 %v1634, 104
      %v1649 = vpop.permute.xlu0 %1648
      %v1650 = vsel %vm442, %v1649, 0
      %1652 = vmatprep.subr.mxu0 0.0
      %1653 = vmatpush1.msra.mxu0 %v436
      %1654 = vmatprep.subr.mxu0 0.0
      %1655 = vmatpush1.msra.mxu0 0.0
      %1656 = vmatprep.subr.mxu0 0.0
      %1657 = vmatpush1.msra.mxu0 0.0
      %1658 = vmatprep.subr.mxu0 0.0
      %1659 = vmatpush1.msra.mxu0 0.0
      %1660 = vmatprep.subr.mxu0 0.0
      %1661 = vmatpush1.msra.mxu0 0.0
      %1662 = vmatprep.subr.mxu0 0.0
      %1663 = vmatpush1.msra.mxu0 0.0
      %1664 = vmatprep.subr.mxu0 0.0
      %1665 = vmatpush1.msra.mxu0 0.0
      %1666 = vmatprep.subr.mxu0 0.0
      %1667 = vmatpush1.msra.mxu0 0.0
      %1668 = vmatprep.subr.mxu0 0.0
      %1669 = vmatpush1.msra.mxu0 0.0
      %1670 = vmatprep.subr.mxu0 0.0
      %1671 = vmatpush1.msra.mxu0 0.0
      %1672 = vmatprep.subr.mxu0 0.0
      %1673 = vmatpush1.msra.mxu0 0.0
      %1674 = vmatprep.subr.mxu0 0.0
      %1675 = vmatpush1.msra.mxu0 0.0
      %1676 = vmatprep.subr.mxu0 0.0
      %1677 = vmatpush1.msra.mxu0 0.0
      %1678 = vmatprep.subr.mxu0 0.0
      %1679 = vmatpush1.msra.mxu0 0.0
      %1680 = vmatprep.subr.mxu0 0.0
      %1681 = vmatpush1.msra.mxu0 0.0
      %1682 = vmatprep.subr.mxu0 0.0
      %1683 = vmatpush1.msra.mxu0 0.0
      %1684 = vmatprep.subr.mxu0 0.0
      %1685 = vmatpush1.msra.mxu0 0.0
      %1686 = vmatprep.subr.mxu0 0.0
      %1687 = vmatpush1.msra.mxu0 0.0
      %1688 = vmatprep.subr.mxu0 0.0
      %1689 = vmatpush1.msra.mxu0 0.0
      %1690 = vmatprep.subr.mxu0 0.0
      %1691 = vmatpush1.msra.mxu0 0.0
      %1692 = vmatprep.subr.mxu0 0.0
      %1693 = vmatpush1.msra.mxu0 0.0
      %1694 = vmatprep.subr.mxu0 0.0
      %1695 = vmatpush1.msra.mxu0 0.0
      %1696 = vmatprep.subr.mxu0 0.0
      %1697 = vmatpush1.msra.mxu0 0.0
      %1698 = vmatprep.subr.mxu0 0.0
      %1699 = vmatpush1.msra.mxu0 0.0
      %1700 = vmatprep.subr.mxu0 0.0
      %1701 = vmatpush1.msra.mxu0 0.0
      %1702 = vmatprep.subr.mxu0 0.0
      %1703 = vmatpush1.msra.mxu0 0.0
      %1704 = vmatprep.subr.mxu0 0.0
      %1705 = vmatpush1.msra.mxu0 0.0
      %1706 = vmatprep.subr.mxu0 0.0
      %1707 = vmatpush1.msra.mxu0 0.0
      %1708 = vmatprep.subr.mxu0 0.0
      %1709 = vmatpush1.msra.mxu0 0.0
      %1710 = vmatprep.subr.mxu0 0.0
      %1711 = vmatpush1.msra.mxu0 0.0
      %1712 = vmatprep.subr.mxu0 0.0
      %1713 = vmatpush1.msra.mxu0 0.0
      %1714 = vmatprep.subr.mxu0 0.0
      %1715 = vmatpush1.msra.mxu0 0.0
      %1716 = vmatprep.mubr.f32.mxu0 0.0
      %1717 = vmatmul.mubr.f32.gmra.mrb[0].mxu0 %v1650
      %v1718 = vpop.f32.mrb[0].mxu0
      %v1719 = vadd.f32 0.0, %v1718
      %v1720 = vpop.f32.mrb[0].mxu0
      %1721 = vdwg.mxu0
      %v1722 = vadd.f32 %v1646, %v1719
      %v1723 = vxor.u32 %v1722, 2147483648
      %v1724 = vmul.f32 %v1723, 1.442695
      %v1725 = vpow.pop %v1724
      %v1726 = vadd.f32 %v1725, 1.0
      %v1727 = vrcp.pop %v1726
      %v1728 = vmul.f32 1.0, %v1727
      %v1729 = vtanh.pop %v1722
      %v1730 = vmul.f32 %v1728, %v1635
      %1732 = vrot.lane.b32.xlu0 %v1729, 112
      %v1733 = vpop.permute.xlu0 %1732
      %v1735 = vmul.f32 %v1728, %v1733
      %1737 = vrot.lane.b32.xlu0 %v1735, 8
      %v1738 = vpop.permute.xlu0 %1737
      %v1740 = vadd.f32 %v1730, %v1738
      %v1741 = vtanh.pop %v1740
      %1743 = vrot.lane.b32.xlu0 %v1741, 16
      %v1744 = vpop.permute.xlu0 %1743
      %v1746 = vmul.f32 %v1728, %v1744
      %s1747 = scalar_lea.vmem %s1, %s1644
      %v1748 = vld [vmem:[%s1747] sm:$0xff]
      %vm1749 = vcmp.ne.f32.partialorder %v1748, 0.0
      %v1750 = vsel %vm1749, 1, 0
      %1751 = vset.pattern.permute.xlu0 0
      %1752 = vperm.xlu0 %1751, %v1750
      %v1753 = vpop.permute.xlu0 %1752
      %vm1754 = vcmp.eq.s32.totalorder %v1753, 1
      %v1755 = vsel %vm1754, %v1746, %v1634
      %v1756 = vsel %vm1754, %v1740, %v1635
      %v1757 = vsel %vm1754, %v1746, 0.0
      %1759 = vrot.lane.b32.xlu0 %v1757, 104
      %v1760 = vpop.permute.xlu0 %1759
      %s1762 = scalar_lea.vmem %s255, %s1644
      %1763 = vst.msk [vmem:[%s1762] sm:$0xff] %vm442, %v1760
      %s1764 = scalar_select %p437, 11, 4
      %s1765 = smul.u32 %s1764, 8
      %s1766 = scalar_lea.vmem [#allocation2], %s1765
      %v1767 = vld [vmem:[%s1766] sm:$0xff]
      %1769 = vrot.lane.b32.xlu0 %v1755, 104
      %v1770 = vpop.permute.xlu0 %1769
      %v1771 = vsel %vm442, %v1770, 0
      %1773 = vmatprep.subr.mxu0 0.0
      %1774 = vmatpush1.msra.mxu0 %v436
      %1775 = vmatprep.subr.mxu0 0.0
      %1776 = vmatpush1.msra.mxu0 0.0
      %1777 = vmatprep.subr.mxu0 0.0
      %1778 = vmatpush1.msra.mxu0 0.0
      %1779 = vmatprep.subr.mxu0 0.0
      %1780 = vmatpush1.msra.mxu0 0.0
      %1781 = vmatprep.subr.mxu0 0.0
      %1782 = vmatpush1.msra.mxu0 0.0
      %1783 = vmatprep.subr.mxu0 0.0
      %1784 = vmatpush1.msra.mxu0 0.0
      %1785 = vmatprep.subr.mxu0 0.0
      %1786 = vmatpush1.msra.mxu0 0.0
      %1787 = vmatprep.subr.mxu0 0.0
      %1788 = vmatpush1.msra.mxu0 0.0
      %1789 = vmatprep.subr.mxu0 0.0
      %1790 = vmatpush1.msra.mxu0 0.0
      %1791 = vmatprep.subr.mxu0 0.0
      %1792 = vmatpush1.msra.mxu0 0.0
      %1793 = vmatprep.subr.mxu0 0.0
      %1794 = vmatpush1.msra.mxu0 0.0
      %1795 = vmatprep.subr.mxu0 0.0
      %1796 = vmatpush1.msra.mxu0 0.0
      %1797 = vmatprep.subr.mxu0 0.0
      %1798 = vmatpush1.msra.mxu0 0.0
      %1799 = vmatprep.subr.mxu0 0.0
      %1800 = vmatpush1.msra.mxu0 0.0
      %1801 = vmatprep.subr.mxu0 0.0
      %1802 = vmatpush1.msra.mxu0 0.0
      %1803 = vmatprep.subr.mxu0 0.0
      %1804 = vmatpush1.msra.mxu0 0.0
      %1805 = vmatprep.subr.mxu0 0.0
      %1806 = vmatpush1.msra.mxu0 0.0
      %1807 = vmatprep.subr.mxu0 0.0
      %1808 = vmatpush1.msra.mxu0 0.0
      %1809 = vmatprep.subr.mxu0 0.0
      %1810 = vmatpush1.msra.mxu0 0.0
      %1811 = vmatprep.subr.mxu0 0.0
      %1812 = vmatpush1.msra.mxu0 0.0
      %1813 = vmatprep.subr.mxu0 0.0
      %1814 = vmatpush1.msra.mxu0 0.0
      %1815 = vmatprep.subr.mxu0 0.0
      %1816 = vmatpush1.msra.mxu0 0.0
      %1817 = vmatprep.subr.mxu0 0.0
      %1818 = vmatpush1.msra.mxu0 0.0
      %1819 = vmatprep.subr.mxu0 0.0
      %1820 = vmatpush1.msra.mxu0 0.0
      %1821 = vmatprep.subr.mxu0 0.0
      %1822 = vmatpush1.msra.mxu0 0.0
      %1823 = vmatprep.subr.mxu0 0.0
      %1824 = vmatpush1.msra.mxu0 0.0
      %1825 = vmatprep.subr.mxu0 0.0
      %1826 = vmatpush1.msra.mxu0 0.0
      %1827 = vmatprep.subr.mxu0 0.0
      %1828 = vmatpush1.msra.mxu0 0.0
      %1829 = vmatprep.subr.mxu0 0.0
      %1830 = vmatpush1.msra.mxu0 0.0
      %1831 = vmatprep.subr.mxu0 0.0
      %1832 = vmatpush1.msra.mxu0 0.0
      %1833 = vmatprep.subr.mxu0 0.0
      %1834 = vmatpush1.msra.mxu0 0.0
      %1835 = vmatprep.subr.mxu0 0.0
      %1836 = vmatpush1.msra.mxu0 0.0
      %1837 = vmatprep.mubr.f32.mxu0 0.0
      %1838 = vmatmul.mubr.f32.gmra.mrb[0].mxu0 %v1771
      %v1839 = vpop.f32.mrb[0].mxu0
      %v1840 = vadd.f32 0.0, %v1839
      %v1841 = vpop.f32.mrb[0].mxu0
      %1842 = vdwg.mxu0
      %v1843 = vadd.f32 %v1767, %v1840
      %v1844 = vxor.u32 %v1843, 2147483648
      %v1845 = vmul.f32 %v1844, 1.442695
      %v1846 = vpow.pop %v1845
      %v1847 = vadd.f32 %v1846, 1.0
      %v1848 = vrcp.pop %v1847
      %v1849 = vmul.f32 1.0, %v1848
      %v1850 = vtanh.pop %v1843
      %v1851 = vmul.f32 %v1849, %v1756
      %1853 = vrot.lane.b32.xlu0 %v1850, 112
      %v1854 = vpop.permute.xlu0 %1853
      %v1856 = vmul.f32 %v1849, %v1854
      %1858 = vrot.lane.b32.xlu0 %v1856, 8
      %v1859 = vpop.permute.xlu0 %1858
      %v1861 = vadd.f32 %v1851, %v1859
      %v1862 = vtanh.pop %v1861
      %1864 = vrot.lane.b32.xlu0 %v1862, 16
      %v1865 = vpop.permute.xlu0 %1864
      %v1867 = vmul.f32 %v1849, %v1865
      %s1868 = scalar_lea.vmem %s1, %s1765
      %v1869 = vld [vmem:[%s1868] sm:$0xff]
      %vm1870 = vcmp.ne.f32.partialorder %v1869, 0.0
      %v1871 = vsel %vm1870, 1, 0
      %1872 = vset.pattern.permute.xlu0 0
      %1873 = vperm.xlu0 %1872, %v1871
      %v1874 = vpop.permute.xlu0 %1873
      %vm1875 = vcmp.eq.s32.totalorder %v1874, 1
      %v1876 = vsel %vm1875, %v1867, %v1755
      %v1877 = vsel %vm1875, %v1861, %v1756
      %v1878 = vsel %vm1875, %v1867, 0.0
      %1880 = vrot.lane.b32.xlu0 %v1878, 104
      %v1881 = vpop.permute.xlu0 %1880
      %s1883 = scalar_lea.vmem %s255, %s1765
      %1884 = vst.msk [vmem:[%s1883] sm:$0xff] %vm442, %v1881
      %s1885 = scalar_select %p437, 12, 3
      %s1886 = smul.u32 %s1885, 8
      %s1887 = scalar_lea.vmem [#allocation2], %s1886
      %v1888 = vld [vmem:[%s1887] sm:$0xff]
      %1890 = vrot.lane.b32.xlu0 %v1876, 104
      %v1891 = vpop.permute.xlu0 %1890
      %v1892 = vsel %vm442, %v1891, 0
      %1894 = vmatprep.subr.mxu0 0.0
      %1895 = vmatpush1.msra.mxu0 %v436
      %1896 = vmatprep.subr.mxu0 0.0
      %1897 = vmatpush1.msra.mxu0 0.0
      %1898 = vmatprep.subr.mxu0 0.0
      %1899 = vmatpush1.msra.mxu0 0.0
      %1900 = vmatprep.subr.mxu0 0.0
      %1901 = vmatpush1.msra.mxu0 0.0
      %1902 = vmatprep.subr.mxu0 0.0
      %1903 = vmatpush1.msra.mxu0 0.0
      %1904 = vmatprep.subr.mxu0 0.0
      %1905 = vmatpush1.msra.mxu0 0.0
      %1906 = vmatprep.subr.mxu0 0.0
      %1907 = vmatpush1.msra.mxu0 0.0
      %1908 = vmatprep.subr.mxu0 0.0
      %1909 = vmatpush1.msra.mxu0 0.0
      %1910 = vmatprep.subr.mxu0 0.0
      %1911 = vmatpush1.msra.mxu0 0.0
      %1912 = vmatprep.subr.mxu0 0.0
      %1913 = vmatpush1.msra.mxu0 0.0
      %1914 = vmatprep.subr.mxu0 0.0
      %1915 = vmatpush1.msra.mxu0 0.0
      %1916 = vmatprep.subr.mxu0 0.0
      %1917 = vmatpush1.msra.mxu0 0.0
      %1918 = vmatprep.subr.mxu0 0.0
      %1919 = vmatpush1.msra.mxu0 0.0
      %1920 = vmatprep.subr.mxu0 0.0
      %1921 = vmatpush1.msra.mxu0 0.0
      %1922 = vmatprep.subr.mxu0 0.0
      %1923 = vmatpush1.msra.mxu0 0.0
      %1924 = vmatprep.subr.mxu0 0.0
      %1925 = vmatpush1.msra.mxu0 0.0
      %1926 = vmatprep.subr.mxu0 0.0
      %1927 = vmatpush1.msra.mxu0 0.0
      %1928 = vmatprep.subr.mxu0 0.0
      %1929 = vmatpush1.msra.mxu0 0.0
      %1930 = vmatprep.subr.mxu0 0.0
      %1931 = vmatpush1.msra.mxu0 0.0
      %1932 = vmatprep.subr.mxu0 0.0
      %1933 = vmatpush1.msra.mxu0 0.0
      %1934 = vmatprep.subr.mxu0 0.0
      %1935 = vmatpush1.msra.mxu0 0.0
      %1936 = vmatprep.subr.mxu0 0.0
      %1937 = vmatpush1.msra.mxu0 0.0
      %1938 = vmatprep.subr.mxu0 0.0
      %1939 = vmatpush1.msra.mxu0 0.0
      %1940 = vmatprep.subr.mxu0 0.0
      %1941 = vmatpush1.msra.mxu0 0.0
      %1942 = vmatprep.subr.mxu0 0.0
      %1943 = vmatpush1.msra.mxu0 0.0
      %1944 = vmatprep.subr.mxu0 0.0
      %1945 = vmatpush1.msra.mxu0 0.0
      %1946 = vmatprep.subr.mxu0 0.0
      %1947 = vmatpush1.msra.mxu0 0.0
      %1948 = vmatprep.subr.mxu0 0.0
      %1949 = vmatpush1.msra.mxu0 0.0
      %1950 = vmatprep.subr.mxu0 0.0
      %1951 = vmatpush1.msra.mxu0 0.0
      %1952 = vmatprep.subr.mxu0 0.0
      %1953 = vmatpush1.msra.mxu0 0.0
      %1954 = vmatprep.subr.mxu0 0.0
      %1955 = vmatpush1.msra.mxu0 0.0
      %1956 = vmatprep.subr.mxu0 0.0
      %1957 = vmatpush1.msra.mxu0 0.0
      %1958 = vmatprep.mubr.f32.mxu0 0.0
      %1959 = vmatmul.mubr.f32.gmra.mrb[0].mxu0 %v1892
      %v1960 = vpop.f32.mrb[0].mxu0
      %v1961 = vadd.f32 0.0, %v1960
      %v1962 = vpop.f32.mrb[0].mxu0
      %1963 = vdwg.mxu0
      %v1964 = vadd.f32 %v1888, %v1961
      %v1965 = vxor.u32 %v1964, 2147483648
      %v1966 = vmul.f32 %v1965, 1.442695
      %v1967 = vpow.pop %v1966
      %v1968 = vadd.f32 %v1967, 1.0
      %v1969 = vrcp.pop %v1968
      %v1970 = vmul.f32 1.0, %v1969
      %v1971 = vtanh.pop %v1964
      %v1972 = vmul.f32 %v1970, %v1877
      %1974 = vrot.lane.b32.xlu0 %v1971, 112
      %v1975 = vpop.permute.xlu0 %1974
      %v1977 = vmul.f32 %v1970, %v1975
      %1979 = vrot.lane.b32.xlu0 %v1977, 8
      %v1980 = vpop.permute.xlu0 %1979
      %v1982 = vadd.f32 %v1972, %v1980
      %v1983 = vtanh.pop %v1982
      %1985 = vrot.lane.b32.xlu0 %v1983, 16
      %v1986 = vpop.permute.xlu0 %1985
      %v1988 = vmul.f32 %v1970, %v1986
      %s1989 = scalar_lea.vmem %s1, %s1886
      %v1990 = vld [vmem:[%s1989] sm:$0xff]
      %vm1991 = vcmp.ne.f32.partialorder %v1990, 0.0
      %v1992 = vsel %vm1991, 1, 0
      %1993 = vset.pattern.permute.xlu0 0
      %1994 = vperm.xlu0 %1993, %v1992
      %v1995 = vpop.permute.xlu0 %1994
      %vm1996 = vcmp.eq.s32.totalorder %v1995, 1
      %v1997 = vsel %vm1996, %v1988, %v1876
      %v1998 = vsel %vm1996, %v1982, %v1877
      %v1999 = vsel %vm1996, %v1988, 0.0
      %2001 = vrot.lane.b32.xlu0 %v1999, 104
      %v2002 = vpop.permute.xlu0 %2001
      %s2004 = scalar_lea.vmem %s255, %s1886
      %2005 = vst.msk [vmem:[%s2004] sm:$0xff] %vm442, %v2002
      %s2006 = scalar_select %p437, 13, 2
      %s2007 = smul.u32 %s2006, 8
      %s2008 = scalar_lea.vmem [#allocation2], %s2007
      %v2009 = vld [vmem:[%s2008] sm:$0xff]
      %2011 = vrot.lane.b32.xlu0 %v1997, 104
      %v2012 = vpop.permute.xlu0 %2011
      %v2013 = vsel %vm442, %v2012, 0
      %2015 = vmatprep.subr.mxu0 0.0
      %2016 = vmatpush1.msra.mxu0 %v436
      %2017 = vmatprep.subr.mxu0 0.0
      %2018 = vmatpush1.msra.mxu0 0.0
      %2019 = vmatprep.subr.mxu0 0.0
      %2020 = vmatpush1.msra.mxu0 0.0
      %2021 = vmatprep.subr.mxu0 0.0
      %2022 = vmatpush1.msra.mxu0 0.0
      %2023 = vmatprep.subr.mxu0 0.0
      %2024 = vmatpush1.msra.mxu0 0.0
      %2025 = vmatprep.subr.mxu0 0.0
      %2026 = vmatpush1.msra.mxu0 0.0
      %2027 = vmatprep.subr.mxu0 0.0
      %2028 = vmatpush1.msra.mxu0 0.0
      %2029 = vmatprep.subr.mxu0 0.0
      %2030 = vmatpush1.msra.mxu0 0.0
      %2031 = vmatprep.subr.mxu0 0.0
      %2032 = vmatpush1.msra.mxu0 0.0
      %2033 = vmatprep.subr.mxu0 0.0
      %2034 = vmatpush1.msra.mxu0 0.0
      %2035 = vmatprep.subr.mxu0 0.0
      %2036 = vmatpush1.msra.mxu0 0.0
      %2037 = vmatprep.subr.mxu0 0.0
      %2038 = vmatpush1.msra.mxu0 0.0
      %2039 = vmatprep.subr.mxu0 0.0
      %2040 = vmatpush1.msra.mxu0 0.0
      %2041 = vmatprep.subr.mxu0 0.0
      %2042 = vmatpush1.msra.mxu0 0.0
      %2043 = vmatprep.subr.mxu0 0.0
      %2044 = vmatpush1.msra.mxu0 0.0
      %2045 = vmatprep.subr.mxu0 0.0
      %2046 = vmatpush1.msra.mxu0 0.0
      %2047 = vmatprep.subr.mxu0 0.0
      %2048 = vmatpush1.msra.mxu0 0.0
      %2049 = vmatprep.subr.mxu0 0.0
      %2050 = vmatpush1.msra.mxu0 0.0
      %2051 = vmatprep.subr.mxu0 0.0
      %2052 = vmatpush1.msra.mxu0 0.0
      %2053 = vmatprep.subr.mxu0 0.0
      %2054 = vmatpush1.msra.mxu0 0.0
      %2055 = vmatprep.subr.mxu0 0.0
      %2056 = vmatpush1.msra.mxu0 0.0
      %2057 = vmatprep.subr.mxu0 0.0
      %2058 = vmatpush1.msra.mxu0 0.0
      %2059 = vmatprep.subr.mxu0 0.0
      %2060 = vmatpush1.msra.mxu0 0.0
      %2061 = vmatprep.subr.mxu0 0.0
      %2062 = vmatpush1.msra.mxu0 0.0
      %2063 = vmatprep.subr.mxu0 0.0
      %2064 = vmatpush1.msra.mxu0 0.0
      %2065 = vmatprep.subr.mxu0 0.0
      %2066 = vmatpush1.msra.mxu0 0.0
      %2067 = vmatprep.subr.mxu0 0.0
      %2068 = vmatpush1.msra.mxu0 0.0
      %2069 = vmatprep.subr.mxu0 0.0
      %2070 = vmatpush1.msra.mxu0 0.0
      %2071 = vmatprep.subr.mxu0 0.0
      %2072 = vmatpush1.msra.mxu0 0.0
      %2073 = vmatprep.subr.mxu0 0.0
      %2074 = vmatpush1.msra.mxu0 0.0
      %2075 = vmatprep.subr.mxu0 0.0
      %2076 = vmatpush1.msra.mxu0 0.0
      %2077 = vmatprep.subr.mxu0 0.0
      %2078 = vmatpush1.msra.mxu0 0.0
      %2079 = vmatprep.mubr.f32.mxu0 0.0
      %2080 = vmatmul.mubr.f32.gmra.mrb[0].mxu0 %v2013
      %v2081 = vpop.f32.mrb[0].mxu0
      %v2082 = vadd.f32 0.0, %v2081
      %v2083 = vpop.f32.mrb[0].mxu0
      %2084 = vdwg.mxu0
      %v2085 = vadd.f32 %v2009, %v2082
      %v2086 = vxor.u32 %v2085, 2147483648
      %v2087 = vmul.f32 %v2086, 1.442695
      %v2088 = vpow.pop %v2087
      %v2089 = vadd.f32 %v2088, 1.0
      %v2090 = vrcp.pop %v2089
      %v2091 = vmul.f32 1.0, %v2090
      %v2092 = vtanh.pop %v2085
      %v2093 = vmul.f32 %v2091, %v1998
      %2095 = vrot.lane.b32.xlu0 %v2092, 112
      %v2096 = vpop.permute.xlu0 %2095
      %v2098 = vmul.f32 %v2091, %v2096
      %2100 = vrot.lane.b32.xlu0 %v2098, 8
      %v2101 = vpop.permute.xlu0 %2100
      %v2103 = vadd.f32 %v2093, %v2101
      %v2104 = vtanh.pop %v2103
      %2106 = vrot.lane.b32.xlu0 %v2104, 16
      %v2107 = vpop.permute.xlu0 %2106
      %v2109 = vmul.f32 %v2091, %v2107
      %s2110 = scalar_lea.vmem %s1, %s2007
      %v2111 = vld [vmem:[%s2110] sm:$0xff]
      %vm2112 = vcmp.ne.f32.partialorder %v2111, 0.0
      %v2113 = vsel %vm2112, 1, 0
      %2114 = vset.pattern.permute.xlu0 0
      %2115 = vperm.xlu0 %2114, %v2113
      %v2116 = vpop.permute.xlu0 %2115
      %vm2117 = vcmp.eq.s32.totalorder %v2116, 1
      %v2118 = vsel %vm2117, %v2109, %v1997
      %v2119 = vsel %vm2117, %v2103, %v1998
      %v2120 = vsel %vm2117, %v2109, 0.0
      %2122 = vrot.lane.b32.xlu0 %v2120, 104
      %v2123 = vpop.permute.xlu0 %2122
      %s2125 = scalar_lea.vmem %s255, %s2007
      %2126 = vst.msk [vmem:[%s2125] sm:$0xff] %vm442, %v2123
      %s2127 = scalar_select %p437, 14, 1
      %s2128 = smul.u32 %s2127, 8
      %s2129 = scalar_lea.vmem [#allocation2], %s2128
      %v2130 = vld [vmem:[%s2129] sm:$0xff]
      %2132 = vrot.lane.b32.xlu0 %v2118, 104
      %v2133 = vpop.permute.xlu0 %2132
      %v2134 = vsel %vm442, %v2133, 0
      %2136 = vmatprep.subr.mxu0 0.0
      %2137 = vmatpush1.msra.mxu0 %v436
      %2138 = vmatprep.subr.mxu0 0.0
      %2139 = vmatpush1.msra.mxu0 0.0
      %2140 = vmatprep.subr.mxu0 0.0
      %2141 = vmatpush1.msra.mxu0 0.0
      %2142 = vmatprep.subr.mxu0 0.0
      %2143 = vmatpush1.msra.mxu0 0.0
      %2144 = vmatprep.subr.mxu0 0.0
      %2145 = vmatpush1.msra.mxu0 0.0
      %2146 = vmatprep.subr.mxu0 0.0
      %2147 = vmatpush1.msra.mxu0 0.0
      %2148 = vmatprep.subr.mxu0 0.0
      %2149 = vmatpush1.msra.mxu0 0.0
      %2150 = vmatprep.subr.mxu0 0.0
      %2151 = vmatpush1.msra.mxu0 0.0
      %2152 = vmatprep.subr.mxu0 0.0
      %2153 = vmatpush1.msra.mxu0 0.0
      %2154 = vmatprep.subr.mxu0 0.0
      %2155 = vmatpush1.msra.mxu0 0.0
      %2156 = vmatprep.subr.mxu0 0.0
      %2157 = vmatpush1.msra.mxu0 0.0
      %2158 = vmatprep.subr.mxu0 0.0
      %2159 = vmatpush1.msra.mxu0 0.0
      %2160 = vmatprep.subr.mxu0 0.0
      %2161 = vmatpush1.msra.mxu0 0.0
      %2162 = vmatprep.subr.mxu0 0.0
      %2163 = vmatpush1.msra.mxu0 0.0
      %2164 = vmatprep.subr.mxu0 0.0
      %2165 = vmatpush1.msra.mxu0 0.0
      %2166 = vmatprep.subr.mxu0 0.0
      %2167 = vmatpush1.msra.mxu0 0.0
      %2168 = vmatprep.subr.mxu0 0.0
      %2169 = vmatpush1.msra.mxu0 0.0
      %2170 = vmatprep.subr.mxu0 0.0
      %2171 = vmatpush1.msra.mxu0 0.0
      %2172 = vmatprep.subr.mxu0 0.0
      %2173 = vmatpush1.msra.mxu0 0.0
      %2174 = vmatprep.subr.mxu0 0.0
      %2175 = vmatpush1.msra.mxu0 0.0
      %2176 = vmatprep.subr.mxu0 0.0
      %2177 = vmatpush1.msra.mxu0 0.0
      %2178 = vmatprep.subr.mxu0 0.0
      %2179 = vmatpush1.msra.mxu0 0.0
      %2180 = vmatprep.subr.mxu0 0.0
      %2181 = vmatpush1.msra.mxu0 0.0
      %2182 = vmatprep.subr.mxu0 0.0
      %2183 = vmatpush1.msra.mxu0 0.0
      %2184 = vmatprep.subr.mxu0 0.0
      %2185 = vmatpush1.msra.mxu0 0.0
      %2186 = vmatprep.subr.mxu0 0.0
      %2187 = vmatpush1.msra.mxu0 0.0
      %2188 = vmatprep.subr.mxu0 0.0
      %2189 = vmatpush1.msra.mxu0 0.0
      %2190 = vmatprep.subr.mxu0 0.0
      %2191 = vmatpush1.msra.mxu0 0.0
      %2192 = vmatprep.subr.mxu0 0.0
      %2193 = vmatpush1.msra.mxu0 0.0
      %2194 = vmatprep.subr.mxu0 0.0
      %2195 = vmatpush1.msra.mxu0 0.0
      %2196 = vmatprep.subr.mxu0 0.0
      %2197 = vmatpush1.msra.mxu0 0.0
      %2198 = vmatprep.subr.mxu0 0.0
      %2199 = vmatpush1.msra.mxu0 0.0
      %2200 = vmatprep.mubr.f32.mxu0 0.0
      %2201 = vmatmul.mubr.f32.gmra.mrb[0].mxu0 %v2134
      %v2202 = vpop.f32.mrb[0].mxu0
      %v2203 = vadd.f32 0.0, %v2202
      %v2204 = vpop.f32.mrb[0].mxu0
      %2205 = vdwg.mxu0
      %v2206 = vadd.f32 %v2130, %v2203
      %v2207 = vxor.u32 %v2206, 2147483648
      %v2208 = vmul.f32 %v2207, 1.442695
      %v2209 = vpow.pop %v2208
      %v2210 = vadd.f32 %v2209, 1.0
      %v2211 = vrcp.pop %v2210
      %v2212 = vmul.f32 1.0, %v2211
      %v2213 = vtanh.pop %v2206
      %v2214 = vmul.f32 %v2212, %v2119
      %2216 = vrot.lane.b32.xlu0 %v2213, 112
      %v2217 = vpop.permute.xlu0 %2216
      %v2219 = vmul.f32 %v2212, %v2217
      %2221 = vrot.lane.b32.xlu0 %v2219, 8
      %v2222 = vpop.permute.xlu0 %2221
      %v2224 = vadd.f32 %v2214, %v2222
      %v2225 = vtanh.pop %v2224
      %2227 = vrot.lane.b32.xlu0 %v2225, 16
      %v2228 = vpop.permute.xlu0 %2227
      %v2230 = vmul.f32 %v2212, %v2228
      %s2231 = scalar_lea.vmem %s1, %s2128
      %v2232 = vld [vmem:[%s2231] sm:$0xff]
      %vm2233 = vcmp.ne.f32.partialorder %v2232, 0.0
      %v2234 = vsel %vm2233, 1, 0
      %2235 = vset.pattern.permute.xlu0 0
      %2236 = vperm.xlu0 %2235, %v2234
      %v2237 = vpop.permute.xlu0 %2236
      %vm2238 = vcmp.eq.s32.totalorder %v2237, 1
      %v2239 = vsel %vm2238, %v2230, %v2118
      %v2240 = vsel %vm2238, %v2224, %v2119
      %v2241 = vsel %vm2238, %v2230, 0.0
      %2243 = vrot.lane.b32.xlu0 %v2241, 104
      %v2244 = vpop.permute.xlu0 %2243
      %s2246 = scalar_lea.vmem %s255, %s2128
      %2247 = vst.msk [vmem:[%s2246] sm:$0xff] %vm442, %v2244
      %s2248 = scalar_select %p437, 15, 0
      %s2249 = smul.u32 %s2248, 8
      %s2250 = scalar_lea.vmem [#allocation2], %s2249
      %v2251 = vld [vmem:[%s2250] sm:$0xff]
      %2253 = vrot.lane.b32.xlu0 %v2239, 104
      %v2254 = vpop.permute.xlu0 %2253
      %v2255 = vsel %vm442, %v2254, 0
      %2257 = vmatprep.subr.mxu0 0.0
      %2258 = vmatpush1.msra.mxu0 %v436
      %2259 = vmatprep.subr.mxu0 0.0
      %2260 = vmatpush1.msra.mxu0 0.0
      %2261 = vmatprep.subr.mxu0 0.0
      %2262 = vmatpush1.msra.mxu0 0.0
      %2263 = vmatprep.subr.mxu0 0.0
      %2264 = vmatpush1.msra.mxu0 0.0
      %2265 = vmatprep.subr.mxu0 0.0
      %2266 = vmatpush1.msra.mxu0 0.0
      %2267 = vmatprep.subr.mxu0 0.0
      %2268 = vmatpush1.msra.mxu0 0.0
      %2269 = vmatprep.subr.mxu0 0.0
      %2270 = vmatpush1.msra.mxu0 0.0
      %2271 = vmatprep.subr.mxu0 0.0
      %2272 = vmatpush1.msra.mxu0 0.0
      %2273 = vmatprep.subr.mxu0 0.0
      %2274 = vmatpush1.msra.mxu0 0.0
      %2275 = vmatprep.subr.mxu0 0.0
      %2276 = vmatpush1.msra.mxu0 0.0
      %2277 = vmatprep.subr.mxu0 0.0
      %2278 = vmatpush1.msra.mxu0 0.0
      %2279 = vmatprep.subr.mxu0 0.0
      %2280 = vmatpush1.msra.mxu0 0.0
      %2281 = vmatprep.subr.mxu0 0.0
      %2282 = vmatpush1.msra.mxu0 0.0
      %2283 = vmatprep.subr.mxu0 0.0
      %2284 = vmatpush1.msra.mxu0 0.0
      %2285 = vmatprep.subr.mxu0 0.0
      %2286 = vmatpush1.msra.mxu0 0.0
      %2287 = vmatprep.subr.mxu0 0.0
      %2288 = vmatpush1.msra.mxu0 0.0
      %2289 = vmatprep.subr.mxu0 0.0
      %2290 = vmatpush1.msra.mxu0 0.0
      %2291 = vmatprep.subr.mxu0 0.0
      %2292 = vmatpush1.msra.mxu0 0.0
      %2293 = vmatprep.subr.mxu0 0.0
      %2294 = vmatpush1.msra.mxu0 0.0
      %2295 = vmatprep.subr.mxu0 0.0
      %2296 = vmatpush1.msra.mxu0 0.0
      %2297 = vmatprep.subr.mxu0 0.0
      %2298 = vmatpush1.msra.mxu0 0.0
      %2299 = vmatprep.subr.mxu0 0.0
      %2300 = vmatpush1.msra.mxu0 0.0
      %2301 = vmatprep.subr.mxu0 0.0
      %2302 = vmatpush1.msra.mxu0 0.0
      %2303 = vmatprep.subr.mxu0 0.0
      %2304 = vmatpush1.msra.mxu0 0.0
      %2305 = vmatprep.subr.mxu0 0.0
      %2306 = vmatpush1.msra.mxu0 0.0
      %2307 = vmatprep.subr.mxu0 0.0
      %2308 = vmatpush1.msra.mxu0 0.0
      %2309 = vmatprep.subr.mxu0 0.0
      %2310 = vmatpush1.msra.mxu0 0.0
      %2311 = vmatprep.subr.mxu0 0.0
      %2312 = vmatpush1.msra.mxu0 0.0
      %2313 = vmatprep.subr.mxu0 0.0
      %2314 = vmatpush1.msra.mxu0 0.0
      %2315 = vmatprep.subr.mxu0 0.0
      %2316 = vmatpush1.msra.mxu0 0.0
      %2317 = vmatprep.subr.mxu0 0.0
      %2318 = vmatpush1.msra.mxu0 0.0
      %2319 = vmatprep.subr.mxu0 0.0
      %2320 = vmatpush1.msra.mxu0 0.0
      %2321 = vmatprep.mubr.f32.mxu0 0.0
      %2322 = vmatmul.mubr.f32.gmra.mrb[0].mxu0 %v2255
      %v2323 = vpop.f32.mrb[0].mxu0
      %v2324 = vadd.f32 0.0, %v2323
      %v2325 = vpop.f32.mrb[0].mxu0
      %2326 = vdwg.mxu0
      %v2327 = vadd.f32 %v2251, %v2324
      %v2328 = vxor.u32 %v2327, 2147483648
      %v2329 = vmul.f32 %v2328, 1.442695
      %v2330 = vpow.pop %v2329
      %v2331 = vadd.f32 %v2330, 1.0
      %v2332 = vrcp.pop %v2331
      %v2333 = vmul.f32 1.0, %v2332
      %v2334 = vtanh.pop %v2327
      %v2335 = vmul.f32 %v2333, %v2240
      %2337 = vrot.lane.b32.xlu0 %v2334, 112
      %v2338 = vpop.permute.xlu0 %2337
      %v2340 = vmul.f32 %v2333, %v2338
      %2342 = vrot.lane.b32.xlu0 %v2340, 8
      %v2343 = vpop.permute.xlu0 %2342
      %v2345 = vadd.f32 %v2335, %v2343
      %v2346 = vtanh.pop %v2345
      %2348 = vrot.lane.b32.xlu0 %v2346, 16
      %v2349 = vpop.permute.xlu0 %2348
      %v2351 = vmul.f32 %v2333, %v2349
      %s2352 = scalar_lea.vmem %s1, %s2249
      %v2353 = vld [vmem:[%s2352] sm:$0xff]
      %vm2354 = vcmp.ne.f32.partialorder %v2353, 0.0
      %v2355 = vsel %vm2354, 1, 0
      %2356 = vset.pattern.permute.xlu0 0
      %2357 = vperm.xlu0 %2356, %v2355
      %v2358 = vpop.permute.xlu0 %2357
      %vm2359 = vcmp.eq.s32.totalorder %v2358, 1
      %v2360 = vsel %vm2359, %v2351, 0.0
      %2362 = vrot.lane.b32.xlu0 %v2360, 104
      %v2363 = vpop.permute.xlu0 %2362
      %s2365 = scalar_lea.vmem %s255, %s2249
      %2366 = vst.msk [vmem:[%s2365] sm:$0xff] %vm442, %v2363
      %p2367 = scmp.lt.s32.totalorder %s16, 1
      %s2368 = scalar_select %p2367, %s16, 1
      %s2369 = smul.addr %s2368, 16
      %s2370 = smul.addr %s2369, 8
      %s2371 = scalar_lea.vmem %s5, %s2370
      // Predicated region
      $region41: #{tpu_custom_call.1} parent=39 // pred_check
        %p2372 = pneg %p154
      $region42: #{tpu_custom_call.1} parent=39 // pred_check_branch
        %2374 = sbr.rel (%p2372) target = $region44
      $region43: #{tpu_custom_call.1} parent=39 // pred_region
        _
      $region44: #{tpu_custom_call.1} parent=39 // pred_fallthru
        _
    $region40: #{tpu_custom_call.1} parent=5 // pred_fallthru
      _
    %p2375 = scmp.le.s32.totalorder 2, %s11
    // Predicated region
    $region45: #{tpu_custom_call.1} parent=5 // pred_check
      %p2376 = pneg %p2375
    $region46: #{tpu_custom_call.1} parent=5 // pred_check_branch
      %2378 = sbr.rel (%p2376) target = $region48
    $region47: #{tpu_custom_call.1} parent=5 // pred_region
      %s2379 = ssub.s32 %s11, 2
      // Predicated region
      $region49: #{tpu_custom_call.1} parent=47 // pred_check
        %p2380 = pneg %p160
      $region50: #{tpu_custom_call.1} parent=47 // pred_check_branch
        %2382 = sbr.rel (%p2380) target = $region52
      $region51: #{tpu_custom_call.1} parent=47 // pred_region
        %p2383 = scmp.lt.s32.totalorder %s17, 1
        %s2384 = scalar_select %p2383, %s17, 1
        %s2385 = smul.addr %s2384, 16
        %s2386 = smul.addr %s2385, 8
        %s2387 = scalar_lea.vmem %s5, %s2386
      $region52: #{tpu_custom_call.1} parent=47 // pred_fallthru
        _
    $region48: #{tpu_custom_call.1} parent=5 // pred_fallthru
      _
  $region6: #{tpu_custom_call.1} parent=0 // loop_footer
    %s15 = sadd.s32 1, %s11
  $region7: #{tpu_custom_call.1} parent=0 // loop_footer_branch
    %10 = sbr.rel target = $region3
  $region8: #{tpu_custom_call.1} parent=0 // loop_exit
    _

</llo_original>
